<compile_context>
chip_gen: v7x
topology: tpu7x:2x2x1
jax: 0.10.0
libtpu: 0.0.40
codegen_flags: <defaults>
</compile_context>

<pallas_src>
import functools

import jax
import jax.numpy as jnp
from jax import lax
from jax.experimental import pallas as pl
from jax.experimental.pallas import tpu as pltpu

# ----------------------------------------------------------------------------
# VGG19 layer table (same as NAMES['vgg19'] in the PyTorch module)
# ----------------------------------------------------------------------------
VGG19_NAMES = [
    'conv1_1', 'relu1_1', 'conv1_2', 'relu1_2', 'pool1',
    'conv2_1', 'relu2_1', 'conv2_2', 'relu2_2', 'pool2',
    'conv3_1', 'relu3_1', 'conv3_2', 'relu3_2', 'conv3_3', 'relu3_3',
    'conv3_4', 'relu3_4', 'pool3',
    'conv4_1', 'relu4_1', 'conv4_2', 'relu4_2', 'conv4_3', 'relu4_3',
    'conv4_4', 'relu4_4', 'pool4',
    'conv5_1', 'relu5_1', 'conv5_2', 'relu5_2', 'conv5_3', 'relu5_3',
    'conv5_4', 'relu5_4', 'pool5',
]

VGG19_CONV_OUT = {
    'conv1_1': 64, 'conv1_2': 64,
    'conv2_1': 128, 'conv2_2': 128,
    'conv3_1': 256, 'conv3_2': 256, 'conv3_3': 256, 'conv3_4': 256,
    'conv4_1': 512, 'conv4_2': 512, 'conv4_3': 512, 'conv4_4': 512,
    'conv5_1': 512, 'conv5_2': 512, 'conv5_3': 512, 'conv5_4': 512,
}

IMAGENET_MEAN = (0.485, 0.456, 0.406)
IMAGENET_STD = (0.229, 0.224, 0.225)

_PAD = 8  # sublane offset of the image columns inside the VMEM window


@functools.lru_cache(maxsize=None)
def _vmem_limit_bytes():
    """~75% of physical VMEM (96 MiB on v5e/v6e, 48 MiB on v7x)."""
    cap = 128 * 1024 * 1024
    try:  # config probe only; safe fallback, kernel errors are never swallowed
        info = pltpu.get_tpu_info()
        cap = int(getattr(info, "vmem_capacity_bytes", cap) or cap)
    except Exception:
        pass
    return (cap * 3) // 4


# ----------------------------------------------------------------------------
# Fused conv3x3 (+bias +ReLU +optional 2x2 maxpool) kernel
# ----------------------------------------------------------------------------
def _conv3x3_kernel(*refs, TH, RC, W, Cin, apply_relu, fuse_pool, normalize):
    if normalize:
        (x_cur_ref, x_top_ref, x_bot_ref, scale_ref, shift_ref,
         w_ref, b_ref, o_ref, *scratch) = refs
    else:
        x_cur_ref, x_top_ref, x_bot_ref, w_ref, b_ref, o_ref, *scratch = refs
        scale_ref = shift_ref = None
    win_ref = scratch[0]
    pool_ref = scratch[1] if fuse_pool else None

    f32 = jnp.float32
    wdt = win_ref.dtype                       # bf16 window storage
    t = pl.program_id(2)
    nrows = pl.num_programs(2)
    tcout = w_ref.shape[-1]

    def prep(v):
        if normalize:
            # fused input normalization (conv1_1 only, Cin=3) done in f32
            v = v.astype(f32) * scale_ref[...] + shift_ref[...]
        return v.astype(wdt)

    # ---- window fill: body rows + clamped halo rows, halo assembled in VMEM ----
    win_ref[pl.ds(1, TH), pl.ds(_PAD, W), :] = prep(x_cur_ref[...])
    win_ref[pl.ds(0, 1), pl.ds(_PAD, W), :] = prep(x_top_ref[...])
    win_ref[pl.ds(TH + 1, 1), pl.ds(_PAD, W), :] = prep(x_bot_ref[...])

    zero_row = jnp.zeros((1, W, Cin), wdt)

    @pl.when(t == 0)
    def _zero_top_halo():
        win_ref[pl.ds(0, 1), pl.ds(_PAD, W), :] = zero_row

    @pl.when(t == nrows - 1)
    def _zero_bot_halo():
        win_ref[pl.ds(TH + 1, 1), pl.ds(_PAD, W), :] = zero_row

    # left/right zero columns for the dx = 0 / 2 taps (body never writes them)
    zero_col = jnp.zeros((TH + 2, 1, Cin), wdt)
    win_ref[:, pl.ds(_PAD - 1, 1), :] = zero_col
    win_ref[:, pl.ds(_PAD + W, 1), :] = zero_col

    RCo = RC // 2 if fuse_pool else RC

    def chunk(r0, p0):
        # 9 accumulating MXU dots (K = Cin) straight off window views; one
        # accumulation chain per chunk keeps the f32 accumulator small.
        acc = None
        for dy in range(3):
            for dx in range(3):
                lhs = win_ref[pl.ds(r0 + dy, RC), pl.ds(_PAD - 1 + dx, W), :]
                lhs = lhs.reshape(RC * W, Cin)
                d = jnp.dot(lhs, w_ref[dy * 3 + dx], preferred_element_type=f32)
                acc = d if acc is None else acc + d
        y = acc + b_ref[...]                  # f32 bias
        if apply_relu:
            y = jnp.maximum(y, 0.0)
        if not fuse_pool:
            o_ref[pl.ds(r0, RC), :, :] = y.reshape(RC, W, tcout).astype(o_ref.dtype)
        else:
            # fused 2x2 max pool: row pairs on the value; column pairs through
            # a small per-chunk scratch with stride-2 sublane reads.
            y = jnp.max(y.reshape(RC // 2, 2, W, tcout), axis=1)
            pool_ref[...] = y
            o_ref[pl.ds(p0, RC // 2), :, :] = jnp.maximum(
                pool_ref[:, pl.ds(0, W // 2, 2), :],
                pool_ref[:, pl.ds(1, W // 2, 2), :]).astype(o_ref.dtype)

    n_chunks = TH // RC
    if n_chunks == 1:
        chunk(0, 0)
    else:
        @pl.loop(0, n_chunks)
        def _chunks(c):
            chunk(pl.multiple_of(c * RC, RC), pl.multiple_of(c * RCo, RCo))


def _pick_row_tile(H, W, Cin, TCout, fuse_pool, budget_bytes):
    """Largest divisor of H whose per-step activation footprint fits the budget."""
    best = None
    for th in range(1, H + 1):
        if H % th:
            continue
        if fuse_pool and th % 2:
            continue
        tho, wo = (th // 2, W // 2) if fuse_pool else (th, W)
        win = (th + 2) * (W + 2 * _PAD) * Cin * 2          # bf16 window scratch
        xin = 2 * (th + 2) * W * Cin * 4                    # dbl-buffered inputs
        out = 2 * tho * wo * TCout * 2                      # dbl-buffered output
        if win + xin + out <= budget_bytes:
            best = th
    if best is None:
        best = 2 if (fuse_pool and H % 2 == 0) else 1
    return best


def _pick_chunk_rows(TH, W, TCout, fuse_pool, acc_budget=128 * 1024):
    """Rows per in-kernel chunk so the f32 accumulator stays ~within vregs."""
    max_rc = max(1, acc_budget // (W * TCout * 4))
    rc = 1
    for c in range(1, TH + 1):
        if TH % c:
            continue
        if fuse_pool and c % 2:
            continue
        if c <= max_rc:
            rc = c
    if fuse_pool and rc % 2:
        rc = 2
    return rc


def conv3x3(x, w, b, *, apply_relu, fuse_pool, out_dtype,
            in_scale=None, in_shift=None):
    """3x3 conv (stride 1, pad 1) with fused bias/ReLU/(2x2 maxpool) epilogue.

    x: (N, H, W, Cin) NHWC.  w: (3, 3, Cin, Cout) HWIO f32.  b: (1, Cout) f32.
    """
    N, H, W, Cin = x.shape
    Cout = w.shape[-1]
    TCout = Cout if Cout <= 256 else 256
    nco = Cout // TCout

    vlim = _vmem_limit_bytes()
    wbytes = 2 * (9 * Cin * TCout * 2 + TCout * 4)   # dbl-buffered weight+bias
    act_budget = max(2 * 1024 * 1024, (vlim - wbytes) // 3)
    TH = _pick_row_tile(H, W, Cin, TCout, fuse_pool, act_budget)
    RC = _pick_chunk_rows(TH, W, TCout, fuse_pool)
    T = H // TH
    Ho, Wo = (H // 2, W // 2) if fuse_pool else (H, W)
    THo = TH // 2 if fuse_pool else TH

    wp = w.reshape(9, Cin, Cout).astype(out_dtype)   # (dy*3+dx, Cin, Cout)
    bb = b.reshape(1, Cout).astype(jnp.float32)
    normalize = in_scale is not None

    # Grid: Cout-tile outermost when it is split (weight blocks fetched once per
    # Cout tile); otherwise batch leads so the leading parallel axis has extent
    # >= 2 for megacore sharding.
    if nco > 1:
        grid = (nco, N, T)
        n_of = lambda a, b_: b_
        co_of = lambda a, b_: a
    else:
        grid = (N, nco, T)
        n_of = lambda a, b_: a
        co_of = lambda a, b_: b_

    in_specs = [
        pl.BlockSpec((None, TH, W, Cin),
                     lambda a, b_, t: (n_of(a, b_), t, 0, 0)),
        # one halo row above / below, clamped at the border; the kernel zeroes
        # the clamped halo rows so no HBM-side padding pass is needed.
        pl.BlockSpec((None, 1, W, Cin),
                     lambda a, b_, t: (n_of(a, b_), jnp.maximum(t * TH - 1, 0), 0, 0)),
        pl.BlockSpec((None, 1, W, Cin),
                     lambda a, b_, t: (n_of(a, b_), jnp.minimum(t * TH + TH, H - 1), 0, 0)),
    ]
    args = [x, x, x]
    if normalize:
        in_specs += [pl.BlockSpec((1, Cin), lambda a, b_, t: (0, 0)),
                     pl.BlockSpec((1, Cin), lambda a, b_, t: (0, 0))]
        args += [in_scale.astype(jnp.float32).reshape(1, Cin),
                 in_shift.astype(jnp.float32).reshape(1, Cin)]
    in_specs += [
        # weights/bias stay resident across batch and row-tile axes
        pl.BlockSpec((9, Cin, TCout), lambda a, b_, t: (0, 0, co_of(a, b_))),
        pl.BlockSpec((1, TCout), lambda a, b_, t: (0, co_of(a, b_))),
    ]
    args += [wp, bb]

    scratch = [pltpu.VMEM((TH + 2, W + 2 * _PAD, Cin), out_dtype)]
    if fuse_pool:
        scratch.append(pltpu.VMEM((RC // 2, W, TCout), jnp.float32))

    kernel = functools.partial(
        _conv3x3_kernel, TH=TH, RC=RC, W=W, Cin=Cin,
        apply_relu=apply_relu, fuse_pool=fuse_pool, normalize=normalize)

    return pl.pallas_call(
        kernel,
        out_shape=jax.ShapeDtypeStruct((N, Ho, Wo, Cout), out_dtype),
        grid=grid,
        in_specs=in_specs,
        out_specs=pl.BlockSpec((None, THo, Wo, TCout),
                               lambda a, b_, t: (n_of(a, b_), t, 0, co_of(a, b_))),
        scratch_shapes=scratch,
        compiler_params=pltpu.CompilerParams(
            dimension_semantics=("parallel", "parallel", "parallel"),
            vmem_limit_bytes=vlim),
    )(*args)


# ----------------------------------------------------------------------------
# Standalone ReLU / maxpool kernels (only used when an intermediate feature is
# explicitly requested and fusion would hide it)
# ----------------------------------------------------------------------------
def _rows_fitting(H, per_row_bytes, budget=4 * 1024 * 1024):
    best = 1
    for th in range(1, H + 1):
        if H % th == 0 and th * per_row_bytes <= budget:
            best = th
    return best


def _relu_kernel(x_ref, o_ref):
    o_ref[...] = jnp.maximum(x_ref[...], jnp.zeros((), x_ref.dtype))


def relu(x):
    N, H, W, C = x.shape
    th = _rows_fitting(H, 4 * W * C * x.dtype.itemsize)
    return pl.pallas_call(
        _relu_kernel,
        out_shape=jax.ShapeDtypeStruct(x.shape, x.dtype),
        grid=(N, H // th),
        in_specs=[pl.BlockSpec((None, th, W, C), lambda n, t: (n, t, 0, 0))],
        out_specs=pl.BlockSpec((None, th, W, C), lambda n, t: (n, t, 0, 0)),
        compiler_params=pltpu.CompilerParams(
            dimension_semantics=("parallel", "parallel"),
            vmem_limit_bytes=_vmem_limit_bytes()),
    )(x)


def _maxpool_kernel(x_ref, o_ref):
    x = x_ref[...]                 # (th, 2, Wo, 2, C)
    x = jnp.max(x, axis=1)         # (th, Wo, 2, C)
    o_ref[...] = jnp.max(x, axis=2)


def maxpool2x2(x):
    # Rarely used (pool is normally fused into the preceding conv's epilogue).
    # TODO(synk): only even H/W and pooling_stride=2 / remove_pooling=False.
    N, H, W, C = x.shape
    Ho, Wo = H // 2, W // 2
    xr = x.reshape(N, Ho, 2, Wo, 2, C)          # contiguous split, no copy
    th = _rows_fitting(Ho, (4 * W * C + 2 * Wo * C) * x.dtype.itemsize)
    return pl.pallas_call(
        _maxpool_kernel,
        out_shape=jax.ShapeDtypeStruct((N, Ho, Wo, C), x.dtype),
        grid=(N, Ho // th),
        in_specs=[pl.BlockSpec((None, th, 2, Wo, 2, C),
                               lambda n, t: (n, t, 0, 0, 0, 0))],
        out_specs=pl.BlockSpec((None, th, Wo, C), lambda n, t: (n, t, 0, 0)),
        compiler_params=pltpu.CompilerParams(
            dimension_semantics=("parallel", "parallel"),
            vmem_limit_bytes=_vmem_limit_bytes()),
    )(xr)


# ----------------------------------------------------------------------------
# Module-equivalent wrapper
# ----------------------------------------------------------------------------
def init_vgg19_params(key, layer_name_list):
    """Deterministic synthetic VGG19 conv parameters up to the last needed layer."""
    max_idx = max(VGG19_NAMES.index(v) for v in layer_name_list)
    params = {}
    cin = 3
    for name in VGG19_NAMES[:max_idx + 1]:
        if name.startswith('conv'):
            cout = VGG19_CONV_OUT[name]
            key, kw, kb = jax.random.split(key, 3)
            scale = 1.0 / jnp.sqrt(9.0 * cin)
            params[name] = {
                'w': jax.random.normal(kw, (3, 3, cin, cout), jnp.float32) * scale,
                'b': jax.random.normal(kb, (1, cout), jnp.float32) * 0.01,
            }
            cin = cout
    return params


def _input_affine(use_input_norm, range_norm):
    """Per-channel affine x -> scale*x + shift equivalent to the module's input prep."""
    scale = jnp.ones((3,), jnp.float32)
    shift = jnp.zeros((3,), jnp.float32)
    if range_norm:
        scale = scale * 0.5
        shift = shift + 0.5
    if use_input_norm:
        mean = jnp.asarray(IMAGENET_MEAN, jnp.float32)
        std = jnp.asarray(IMAGENET_STD, jnp.float32)
        scale = scale / std
        shift = (shift - mean) / std
    return scale.reshape(1, 3), shift.reshape(1, 3)


def vgg_feature_extractor(x_nchw, params, layer_name_list, use_input_norm=True,
                          range_norm=False, compute_dtype=jnp.bfloat16):
    """Forward pass equivalent to VGGFeatureExtractor.forward (vgg19, eval)."""
    names = VGG19_NAMES
    max_idx = max(names.index(v) for v in layer_name_list)
    x = jnp.transpose(x_nchw, (0, 2, 3, 1))        # NCHW -> NHWC (kernel layout)

    in_scale = in_shift = None
    if use_input_norm or range_norm:
        in_scale, in_shift = _input_affine(use_input_norm, range_norm)

    outputs = {}
    i = 0
    first_conv = True
    while i <= max_idx:
        name = names[i]
        if name.startswith('conv'):
            w, b = params[name]['w'], params[name]['b']
            scale = in_scale if first_conv else None
            shift = in_shift if first_conv else None
            first_conv = False
            do_relu = i + 1 <= max_idx
            relu_name = names[i + 1] if do_relu else None
            fuse_relu = do_relu and name not in layer_name_list
            fuse_pool = (fuse_relu and i + 2 <= max_idx
                         and names[i + 2].startswith('pool')
                         and relu_name not in layer_name_list
                         and x.shape[1] % 2 == 0 and x.shape[2] % 2 == 0)
            x = conv3x3(x, w, b, apply_relu=fuse_relu, fuse_pool=fuse_pool,
                        out_dtype=compute_dtype, in_scale=scale, in_shift=shift)
            if fuse_pool:
                if names[i + 2] in layer_name_list:
                    outputs[names[i + 2]] = x
                i += 3
            elif fuse_relu:
                if relu_name in layer_name_list:
                    outputs[relu_name] = x
                i += 2
            else:
                if name in layer_name_list:
                    outputs[name] = x
                if do_relu:
                    x = relu(x)
                    if relu_name in layer_name_list:
                        outputs[relu_name] = x
                    i += 2
                else:
                    i += 1
        elif name.startswith('pool'):
            x = maxpool2x2(x)
            if name in layer_name_list:
                outputs[name] = x
            i += 1
        else:  # a relu the conv branch did not consume (not hit with this table)
            x = relu(x)
            if name in layer_name_list:
                outputs[name] = x
            i += 1

    return {k: jnp.transpose(v.astype(jnp.float32), (0, 3, 1, 2))
            for k, v in outputs.items()}


# ----------------------------------------------------------------------------
# Pure-JAX f32 reference (NCHW) for correctness checking
# ----------------------------------------------------------------------------
def reference_forward(x, params, layer_name_list, use_input_norm=True,
                      range_norm=False):
    max_idx = max(VGG19_NAMES.index(v) for v in layer_name_list)
    if range_norm:
        x = (x + 1.0) / 2.0
    if use_input_norm:
        mean = jnp.asarray(IMAGENET_MEAN, jnp.float32).reshape(1, 3, 1, 1)
        std = jnp.asarray(IMAGENET_STD, jnp.float32).reshape(1, 3, 1, 1)
        x = (x - mean) / std
    out = {}
    for key in VGG19_NAMES[:max_idx + 1]:
        if key.startswith('conv'):
            w = params[key]['w']                       # (3,3,Cin,Cout) HWIO
            b = params[key]['b'].reshape(1, -1, 1, 1)
            x = lax.conv_general_dilated(
                x, w, window_strides=(1, 1), padding=((1, 1), (1, 1)),
                dimension_numbers=('NCHW', 'HWIO', 'NCHW')) + b
        elif key.startswith('relu'):
            x = jnp.maximum(x, 0.0)
        elif key.startswith('pool'):
            x = lax.reduce_window(x, -jnp.inf, lax.max,
                                  (1, 1, 2, 2), (1, 1, 2, 2), 'VALID')
        if key in layer_name_list:
            out[key] = x
    return out


# ----------------------------------------------------------------------------
if __name__ == "__main__":
    key = jax.random.PRNGKey(0)
    kx, kp = jax.random.split(key)

    # Small deterministic input: batch=2, channels=3 (RGB), spatial=16, in [0,1]
    x = jax.random.uniform(kx, (2, 3, 16, 16), jnp.float32)
    params = init_vgg19_params(kp, ['relu4_1'])

    # Exercise the fully fused conv+relu(+pool) path, the unfused path
    # (explicitly requested conv / pre-pool relu outputs), and deeper layers.
    configs = [
        ['relu1_1', 'relu2_1', 'relu4_1'],
        ['conv1_1', 'relu1_2', 'pool2', 'relu3_1'],
    ]

    def _tol(name):  # bf16 MXU math with f32 accumulation vs pure-f32 reference
        return 5e-2 if int(name[4]) <= 2 else 1e-1

    for layer_name_list in configs:
        feats = vgg_feature_extractor(x, params, layer_name_list,
                                      use_input_norm=True, range_norm=False)
        feats = jax.tree_util.tree_map(lambda a: a.block_until_ready(), feats)
        ref = reference_forward(x, params, layer_name_list)
        for k in layer_name_list:
            assert feats[k].shape == ref[k].shape, (k, feats[k].shape, ref[k].shape)
            tol = _tol(k)
            assert jnp.allclose(feats[k], ref[k], atol=tol, rtol=tol), k

    feats_a = vgg_feature_extractor(x, params, ['relu1_1', 'relu2_1'])
    feats_a = jax.tree_util.tree_map(lambda a: a.block_until_ready(), feats_a)
    assert feats_a['relu1_1'].shape == (2, 64, 16, 16)
    assert feats_a['relu2_1'].shape == (2, 128, 8, 8)

    print("KERNEL_OK")
</pallas_src>

<mosaic_0001>
module attributes {stable_mosaic.version = 11 : i64} {
  func.func @_conv3x3_kernel(%arg0: i32, %arg1: i32, %arg2: i32, %arg3: memref<1x16x16x3xf32, #tpu.memory_space<vmem>>, %arg4: memref<1x1x16x3xf32, #tpu.memory_space<vmem>>, %arg5: memref<1x1x16x3xf32, #tpu.memory_space<vmem>>, %arg6: memref<1x3xf32, #tpu.memory_space<vmem>>, %arg7: memref<1x3xf32, #tpu.memory_space<vmem>>, %arg8: memref<9x3x64xbf16, #tpu.memory_space<vmem>>, %arg9: memref<1x64xf32, #tpu.memory_space<vmem>>, %arg10: memref<1x16x16x64xbf16, #tpu.memory_space<vmem>>, %arg11: memref<18x32x3xbf16, #tpu.memory_space<vmem>>) attributes {dimension_semantics = [#tpu.dimension_semantics<parallel>, #tpu.dimension_semantics<parallel>, #tpu.dimension_semantics<parallel>], iteration_bounds = array<i64: 2, 1, 1>, scalar_prefetch = 0 : i64, scratch_operands = 1 : i64, tpu.core_type = #tpu.core_type<tc>, window_params = [{transform_indices = @transform_0, window_bounds = array<i64: 1, 16, 16, 3>}, {transform_indices = @transform_1, window_bounds = array<i64: 1, 1, 16, 3>}, {transform_indices = @transform_2, window_bounds = array<i64: 1, 1, 16, 3>}, {pipeline_mode = #tpu.pipeline_mode<synchronous>, transform_indices = @transform_3, window_bounds = array<i64: 1, 3>}, {pipeline_mode = #tpu.pipeline_mode<synchronous>, transform_indices = @transform_4, window_bounds = array<i64: 1, 3>}, {transform_indices = @transform_5, window_bounds = array<i64: 9, 3, 64>}, {transform_indices = @transform_6, window_bounds = array<i64: 1, 64>}, {transform_indices = @transform_7, window_bounds = array<i64: 1, 16, 16, 64>}]} {
    %c0 = arith.constant 0 : index
    %c0_0 = arith.constant 0 : index
    %c0_1 = arith.constant 0 : index
    %c0_2 = arith.constant 0 : index
    %0 = vector.load %arg3[%c0, %c0_0, %c0_1, %c0_2] : memref<1x16x16x3xf32, #tpu.memory_space<vmem>>, vector<1x16x16x3xf32>
    %1 = vector.shape_cast %0 : vector<1x16x16x3xf32> to vector<16x16x3xf32>
    %c0_3 = arith.constant 0 : index
    %c0_4 = arith.constant 0 : index
    %2 = vector.load %arg6[%c0_3, %c0_4] : memref<1x3xf32, #tpu.memory_space<vmem>>, vector<1x3xf32>
    %3 = vector.shape_cast %2 : vector<1x3xf32> to vector<1x1x3xf32>
    %4 = vector.broadcast %3 : vector<1x1x3xf32> to vector<16x16x3xf32>
    %5 = arith.mulf %1, %4 : vector<16x16x3xf32>
    %c0_5 = arith.constant 0 : index
    %c0_6 = arith.constant 0 : index
    %6 = vector.load %arg7[%c0_5, %c0_6] : memref<1x3xf32, #tpu.memory_space<vmem>>, vector<1x3xf32>
    %7 = vector.shape_cast %6 : vector<1x3xf32> to vector<1x1x3xf32>
    %8 = vector.broadcast %7 : vector<1x1x3xf32> to vector<16x16x3xf32>
    %9 = arith.addf %5, %8 : vector<16x16x3xf32>
    %10 = arith.truncf %9 : vector<16x16x3xf32> to vector<16x16x3xbf16>
    %c1 = arith.constant 1 : index
    %c8 = arith.constant 8 : index
    %c0_7 = arith.constant 0 : index
    %11 = vector.load %arg11[%c1, %c8, %c0_7] : memref<18x32x3xbf16, #tpu.memory_space<vmem>>, vector<16x16x3xbf16>
    tpu.vector_store %arg11[%c1, %c8, %c0_7], %10 {strides = array<i32>} : memref<18x32x3xbf16, #tpu.memory_space<vmem>>, vector<16x16x3xbf16>,
    %c0_8 = arith.constant 0 : index
    %c0_9 = arith.constant 0 : index
    %c0_10 = arith.constant 0 : index
    %c0_11 = arith.constant 0 : index
    %12 = vector.load %arg4[%c0_8, %c0_9, %c0_10, %c0_11] : memref<1x1x16x3xf32, #tpu.memory_space<vmem>>, vector<1x1x16x3xf32>
    %13 = vector.shape_cast %12 : vector<1x1x16x3xf32> to vector<1x16x3xf32>
    %c0_12 = arith.constant 0 : index
    %c0_13 = arith.constant 0 : index
    %14 = vector.load %arg6[%c0_12, %c0_13] : memref<1x3xf32, #tpu.memory_space<vmem>>, vector<1x3xf32>
    %15 = vector.shape_cast %14 : vector<1x3xf32> to vector<1x1x3xf32>
    %16 = vector.broadcast %15 : vector<1x1x3xf32> to vector<1x16x3xf32>
    %17 = arith.mulf %13, %16 : vector<1x16x3xf32>
    %c0_14 = arith.constant 0 : index
    %c0_15 = arith.constant 0 : index
    %18 = vector.load %arg7[%c0_14, %c0_15] : memref<1x3xf32, #tpu.memory_space<vmem>>, vector<1x3xf32>
    %19 = vector.shape_cast %18 : vector<1x3xf32> to vector<1x1x3xf32>
    %20 = vector.broadcast %19 : vector<1x1x3xf32> to vector<1x16x3xf32>
    %21 = arith.addf %17, %20 : vector<1x16x3xf32>
    %22 = arith.truncf %21 : vector<1x16x3xf32> to vector<1x16x3xbf16>
    %c0_16 = arith.constant 0 : index
    %c8_17 = arith.constant 8 : index
    %c0_18 = arith.constant 0 : index
    %23 = vector.load %arg11[%c0_16, %c8_17, %c0_18] : memref<18x32x3xbf16, #tpu.memory_space<vmem>>, vector<1x16x3xbf16>
    tpu.vector_store %arg11[%c0_16, %c8_17, %c0_18], %22 {strides = array<i32>} : memref<18x32x3xbf16, #tpu.memory_space<vmem>>, vector<1x16x3xbf16>,
    %c0_19 = arith.constant 0 : index
    %c0_20 = arith.constant 0 : index
    %c0_21 = arith.constant 0 : index
    %c0_22 = arith.constant 0 : index
    %24 = vector.load %arg5[%c0_19, %c0_20, %c0_21, %c0_22] : memref<1x1x16x3xf32, #tpu.memory_space<vmem>>, vector<1x1x16x3xf32>
    %25 = vector.shape_cast %24 : vector<1x1x16x3xf32> to vector<1x16x3xf32>
    %c0_23 = arith.constant 0 : index
    %c0_24 = arith.constant 0 : index
    %26 = vector.load %arg6[%c0_23, %c0_24] : memref<1x3xf32, #tpu.memory_space<vmem>>, vector<1x3xf32>
    %27 = vector.shape_cast %26 : vector<1x3xf32> to vector<1x1x3xf32>
    %28 = vector.broadcast %27 : vector<1x1x3xf32> to vector<1x16x3xf32>
    %29 = arith.mulf %25, %28 : vector<1x16x3xf32>
    %c0_25 = arith.constant 0 : index
    %c0_26 = arith.constant 0 : index
    %30 = vector.load %arg7[%c0_25, %c0_26] : memref<1x3xf32, #tpu.memory_space<vmem>>, vector<1x3xf32>
    %31 = vector.shape_cast %30 : vector<1x3xf32> to vector<1x1x3xf32>
    %32 = vector.broadcast %31 : vector<1x1x3xf32> to vector<1x16x3xf32>
    %33 = arith.addf %29, %32 : vector<1x16x3xf32>
    %34 = arith.truncf %33 : vector<1x16x3xf32> to vector<1x16x3xbf16>
    %c17 = arith.constant 17 : index
    %c8_27 = arith.constant 8 : index
    %c0_28 = arith.constant 0 : index
    %35 = vector.load %arg11[%c17, %c8_27, %c0_28] : memref<18x32x3xbf16, #tpu.memory_space<vmem>>, vector<1x16x3xbf16>
    tpu.vector_store %arg11[%c17, %c8_27, %c0_28], %34 {strides = array<i32>} : memref<18x32x3xbf16, #tpu.memory_space<vmem>>, vector<1x16x3xbf16>,
    %cst = arith.constant 0.000000e+00 : bf16
    %36 = vector.broadcast %cst : bf16 to vector<1x16x3xbf16>
    %c0_i32 = arith.constant 0 : i32
    %37 = arith.cmpi eq, %arg2, %c0_i32 : i32
    %38 = arith.extui %37 : i1 to i32
    %c0_i32_29 = arith.constant 0 : i32
    %39 = arith.cmpi ne, %38, %c0_i32_29 : i32
    scf.if %39 {
      %c0_101 = arith.constant 0 : index
      %c8_102 = arith.constant 8 : index
      %c0_103 = arith.constant 0 : index
      %109 = vector.load %arg11[%c0_101, %c8_102, %c0_103] : memref<18x32x3xbf16, #tpu.memory_space<vmem>>, vector<1x16x3xbf16>
      tpu.vector_store %arg11[%c0_101, %c8_102, %c0_103], %36 {strides = array<i32>} : memref<18x32x3xbf16, #tpu.memory_space<vmem>>, vector<1x16x3xbf16>,
    } else {
    }
    %c0_i32_30 = arith.constant 0 : i32
    %40 = arith.cmpi eq, %arg2, %c0_i32_30 : i32
    %41 = arith.extui %40 : i1 to i32
    %c0_i32_31 = arith.constant 0 : i32
    %42 = arith.cmpi ne, %41, %c0_i32_31 : i32
    scf.if %42 {
      %c17_101 = arith.constant 17 : index
      %c8_102 = arith.constant 8 : index
      %c0_103 = arith.constant 0 : index
      %109 = vector.load %arg11[%c17_101, %c8_102, %c0_103] : memref<18x32x3xbf16, #tpu.memory_space<vmem>>, vector<1x16x3xbf16>
      tpu.vector_store %arg11[%c17_101, %c8_102, %c0_103], %36 {strides = array<i32>} : memref<18x32x3xbf16, #tpu.memory_space<vmem>>, vector<1x16x3xbf16>,
    } else {
    }
    %cst_32 = arith.constant 0.000000e+00 : bf16
    %43 = vector.broadcast %cst_32 : bf16 to vector<18x1x3xbf16>
    %c0_33 = arith.constant 0 : index
    %c7 = arith.constant 7 : index
    %c0_34 = arith.constant 0 : index
    %44 = vector.load %arg11[%c0_33, %c7, %c0_34] : memref<18x32x3xbf16, #tpu.memory_space<vmem>>, vector<18x1x3xbf16>
    tpu.vector_store %arg11[%c0_33, %c7, %c0_34], %43 {strides = array<i32>} : memref<18x32x3xbf16, #tpu.memory_space<vmem>>, vector<18x1x3xbf16>,
    %c0_35 = arith.constant 0 : index
    %c24 = arith.constant 24 : index
    %c0_36 = arith.constant 0 : index
    %45 = vector.load %arg11[%c0_35, %c24, %c0_36] : memref<18x32x3xbf16, #tpu.memory_space<vmem>>, vector<18x1x3xbf16>
    tpu.vector_store %arg11[%c0_35, %c24, %c0_36], %43 {strides = array<i32>} : memref<18x32x3xbf16, #tpu.memory_space<vmem>>, vector<18x1x3xbf16>,
    %c0_37 = arith.constant 0 : index
    %c7_38 = arith.constant 7 : index
    %c0_39 = arith.constant 0 : index
    %46 = vector.load %arg11[%c0_37, %c7_38, %c0_39] : memref<18x32x3xbf16, #tpu.memory_space<vmem>>, vector<16x16x3xbf16>
    %47 = vector.shape_cast %46 : vector<16x16x3xbf16> to vector<256x3xbf16>
    %c0_40 = arith.constant 0 : index
    %c0_41 = arith.constant 0 : index
    %c0_42 = arith.constant 0 : index
    %48 = vector.load %arg8[%c0_40, %c0_41, %c0_42] : memref<9x3x64xbf16, #tpu.memory_space<vmem>>, vector<1x3x64xbf16>
    %49 = vector.shape_cast %48 : vector<1x3x64xbf16> to vector<3x64xbf16>
    %cst_43 = arith.constant dense<0.000000e+00> : vector<256x64xf32>
    %50 = tpu.matmul %47, %49, %cst_43 {dimension_numbers = #tpu.dot_dimension_numbers<[1], [0], [0], [1], [0, 0, 1, 1], [], []>} : vector<256x3xbf16>, vector<3x64xbf16>, vector<256x64xf32> -> vector<256x64xf32>
    %c0_44 = arith.constant 0 : index
    %c8_45 = arith.constant 8 : index
    %c0_46 = arith.constant 0 : index
    %51 = vector.load %arg11[%c0_44, %c8_45, %c0_46] : memref<18x32x3xbf16, #tpu.memory_space<vmem>>, vector<16x16x3xbf16>
    %52 = vector.shape_cast %51 : vector<16x16x3xbf16> to vector<256x3xbf16>
    %c1_47 = arith.constant 1 : index
    %c0_48 = arith.constant 0 : index
    %c0_49 = arith.constant 0 : index
    %53 = vector.load %arg8[%c1_47, %c0_48, %c0_49] : memref<9x3x64xbf16, #tpu.memory_space<vmem>>, vector<1x3x64xbf16>
    %54 = vector.shape_cast %53 : vector<1x3x64xbf16> to vector<3x64xbf16>
    %cst_50 = arith.constant dense<0.000000e+00> : vector<256x64xf32>
    %55 = tpu.matmul %52, %54, %cst_50 {dimension_numbers = #tpu.dot_dimension_numbers<[1], [0], [0], [1], [0, 0, 1, 1], [], []>} : vector<256x3xbf16>, vector<3x64xbf16>, vector<256x64xf32> -> vector<256x64xf32>
    %56 = arith.addf %50, %55 : vector<256x64xf32>
    %c0_51 = arith.constant 0 : index
    %c9 = arith.constant 9 : index
    %c0_52 = arith.constant 0 : index
    %57 = vector.load %arg11[%c0_51, %c9, %c0_52] : memref<18x32x3xbf16, #tpu.memory_space<vmem>>, vector<16x16x3xbf16>
    %58 = vector.shape_cast %57 : vector<16x16x3xbf16> to vector<256x3xbf16>
    %c2 = arith.constant 2 : index
    %c0_53 = arith.constant 0 : index
    %c0_54 = arith.constant 0 : index
    %59 = vector.load %arg8[%c2, %c0_53, %c0_54] : memref<9x3x64xbf16, #tpu.memory_space<vmem>>, vector<1x3x64xbf16>
    %60 = vector.shape_cast %59 : vector<1x3x64xbf16> to vector<3x64xbf16>
    %cst_55 = arith.constant dense<0.000000e+00> : vector<256x64xf32>
    %61 = tpu.matmul %58, %60, %cst_55 {dimension_numbers = #tpu.dot_dimension_numbers<[1], [0], [0], [1], [0, 0, 1, 1], [], []>} : vector<256x3xbf16>, vector<3x64xbf16>, vector<256x64xf32> -> vector<256x64xf32>
    %62 = arith.addf %56, %61 : vector<256x64xf32>
    %c1_56 = arith.constant 1 : index
    %c7_57 = arith.constant 7 : index
    %c0_58 = arith.constant 0 : index
    %63 = vector.load %arg11[%c1_56, %c7_57, %c0_58] : memref<18x32x3xbf16, #tpu.memory_space<vmem>>, vector<16x16x3xbf16>
    %64 = vector.shape_cast %63 : vector<16x16x3xbf16> to vector<256x3xbf16>
    %c3 = arith.constant 3 : index
    %c0_59 = arith.constant 0 : index
    %c0_60 = arith.constant 0 : index
    %65 = vector.load %arg8[%c3, %c0_59, %c0_60] : memref<9x3x64xbf16, #tpu.memory_space<vmem>>, vector<1x3x64xbf16>
    %66 = vector.shape_cast %65 : vector<1x3x64xbf16> to vector<3x64xbf16>
    %cst_61 = arith.constant dense<0.000000e+00> : vector<256x64xf32>
    %67 = tpu.matmul %64, %66, %cst_61 {dimension_numbers = #tpu.dot_dimension_numbers<[1], [0], [0], [1], [0, 0, 1, 1], [], []>} : vector<256x3xbf16>, vector<3x64xbf16>, vector<256x64xf32> -> vector<256x64xf32>
    %68 = arith.addf %62, %67 : vector<256x64xf32>
    %c1_62 = arith.constant 1 : index
    %c8_63 = arith.constant 8 : index
    %c0_64 = arith.constant 0 : index
    %69 = vector.load %arg11[%c1_62, %c8_63, %c0_64] : memref<18x32x3xbf16, #tpu.memory_space<vmem>>, vector<16x16x3xbf16>
    %70 = vector.shape_cast %69 : vector<16x16x3xbf16> to vector<256x3xbf16>
    %c4 = arith.constant 4 : index
    %c0_65 = arith.constant 0 : index
    %c0_66 = arith.constant 0 : index
    %71 = vector.load %arg8[%c4, %c0_65, %c0_66] : memref<9x3x64xbf16, #tpu.memory_space<vmem>>, vector<1x3x64xbf16>
    %72 = vector.shape_cast %71 : vector<1x3x64xbf16> to vector<3x64xbf16>
    %cst_67 = arith.constant dense<0.000000e+00> : vector<256x64xf32>
    %73 = tpu.matmul %70, %72, %cst_67 {dimension_numbers = #tpu.dot_dimension_numbers<[1], [0], [0], [1], [0, 0, 1, 1], [], []>} : vector<256x3xbf16>, vector<3x64xbf16>, vector<256x64xf32> -> vector<256x64xf32>
    %74 = arith.addf %68, %73 : vector<256x64xf32>
    %c1_68 = arith.constant 1 : index
    %c9_69 = arith.constant 9 : index
    %c0_70 = arith.constant 0 : index
    %75 = vector.load %arg11[%c1_68, %c9_69, %c0_70] : memref<18x32x3xbf16, #tpu.memory_space<vmem>>, vector<16x16x3xbf16>
    %76 = vector.shape_cast %75 : vector<16x16x3xbf16> to vector<256x3xbf16>
    %c5 = arith.constant 5 : index
    %c0_71 = arith.constant 0 : index
    %c0_72 = arith.constant 0 : index
    %77 = vector.load %arg8[%c5, %c0_71, %c0_72] : memref<9x3x64xbf16, #tpu.memory_space<vmem>>, vector<1x3x64xbf16>
    %78 = vector.shape_cast %77 : vector<1x3x64xbf16> to vector<3x64xbf16>
    %cst_73 = arith.constant dense<0.000000e+00> : vector<256x64xf32>
    %79 = tpu.matmul %76, %78, %cst_73 {dimension_numbers = #tpu.dot_dimension_numbers<[1], [0], [0], [1], [0, 0, 1, 1], [], []>} : vector<256x3xbf16>, vector<3x64xbf16>, vector<256x64xf32> -> vector<256x64xf32>
    %80 = arith.addf %74, %79 : vector<256x64xf32>
    %c2_74 = arith.constant 2 : index
    %c7_75 = arith.constant 7 : index
    %c0_76 = arith.constant 0 : index
    %81 = vector.load %arg11[%c2_74, %c7_75, %c0_76] : memref<18x32x3xbf16, #tpu.memory_space<vmem>>, vector<16x16x3xbf16>
    %82 = vector.shape_cast %81 : vector<16x16x3xbf16> to vector<256x3xbf16>
    %c6 = arith.constant 6 : index
    %c0_77 = arith.constant 0 : index
    %c0_78 = arith.constant 0 : index
    %83 = vector.load %arg8[%c6, %c0_77, %c0_78] : memref<9x3x64xbf16, #tpu.memory_space<vmem>>, vector<1x3x64xbf16>
    %84 = vector.shape_cast %83 : vector<1x3x64xbf16> to vector<3x64xbf16>
    %cst_79 = arith.constant dense<0.000000e+00> : vector<256x64xf32>
    %85 = tpu.matmul %82, %84, %cst_79 {dimension_numbers = #tpu.dot_dimension_numbers<[1], [0], [0], [1], [0, 0, 1, 1], [], []>} : vector<256x3xbf16>, vector<3x64xbf16>, vector<256x64xf32> -> vector<256x64xf32>
    %86 = arith.addf %80, %85 : vector<256x64xf32>
    %c2_80 = arith.constant 2 : index
    %c8_81 = arith.constant 8 : index
    %c0_82 = arith.constant 0 : index
    %87 = vector.load %arg11[%c2_80, %c8_81, %c0_82] : memref<18x32x3xbf16, #tpu.memory_space<vmem>>, vector<16x16x3xbf16>
    %88 = vector.shape_cast %87 : vector<16x16x3xbf16> to vector<256x3xbf16>
    %c7_83 = arith.constant 7 : index
    %c0_84 = arith.constant 0 : index
    %c0_85 = arith.constant 0 : index
    %89 = vector.load %arg8[%c7_83, %c0_84, %c0_85] : memref<9x3x64xbf16, #tpu.memory_space<vmem>>, vector<1x3x64xbf16>
    %90 = vector.shape_cast %89 : vector<1x3x64xbf16> to vector<3x64xbf16>
    %cst_86 = arith.constant dense<0.000000e+00> : vector<256x64xf32>
    %91 = tpu.matmul %88, %90, %cst_86 {dimension_numbers = #tpu.dot_dimension_numbers<[1], [0], [0], [1], [0, 0, 1, 1], [], []>} : vector<256x3xbf16>, vector<3x64xbf16>, vector<256x64xf32> -> vector<256x64xf32>
    %92 = arith.addf %86, %91 : vector<256x64xf32>
    %c2_87 = arith.constant 2 : index
    %c9_88 = arith.constant 9 : index
    %c0_89 = arith.constant 0 : index
    %93 = vector.load %arg11[%c2_87, %c9_88, %c0_89] : memref<18x32x3xbf16, #tpu.memory_space<vmem>>, vector<16x16x3xbf16>
    %94 = vector.shape_cast %93 : vector<16x16x3xbf16> to vector<256x3xbf16>
    %c8_90 = arith.constant 8 : index
    %c0_91 = arith.constant 0 : index
    %c0_92 = arith.constant 0 : index
    %95 = vector.load %arg8[%c8_90, %c0_91, %c0_92] : memref<9x3x64xbf16, #tpu.memory_space<vmem>>, vector<1x3x64xbf16>
    %96 = vector.shape_cast %95 : vector<1x3x64xbf16> to vector<3x64xbf16>
    %cst_93 = arith.constant dense<0.000000e+00> : vector<256x64xf32>
    %97 = tpu.matmul %94, %96, %cst_93 {dimension_numbers = #tpu.dot_dimension_numbers<[1], [0], [0], [1], [0, 0, 1, 1], [], []>} : vector<256x3xbf16>, vector<3x64xbf16>, vector<256x64xf32> -> vector<256x64xf32>
    %98 = arith.addf %92, %97 : vector<256x64xf32>
    %c0_94 = arith.constant 0 : index
    %c0_95 = arith.constant 0 : index
    %99 = vector.load %arg9[%c0_94, %c0_95] : memref<1x64xf32, #tpu.memory_space<vmem>>, vector<1x64xf32>
    %100 = vector.broadcast %99 : vector<1x64xf32> to vector<256x64xf32>
    %101 = arith.addf %98, %100 : vector<256x64xf32>
    %cst_96 = arith.constant 0.000000e+00 : f32
    %102 = vector.broadcast %cst_96 : f32 to vector<256x64xf32>
    %103 = arith.maximumf %101, %102 : vector<256x64xf32>
    %104 = vector.shape_cast %103 : vector<256x64xf32> to vector<16x16x64xf32>
    %105 = arith.truncf %104 : vector<16x16x64xf32> to vector<16x16x64xbf16>
    %c0_97 = arith.constant 0 : index
    %c0_98 = arith.constant 0 : index
    %c0_99 = arith.constant 0 : index
    %c0_100 = arith.constant 0 : index
    %106 = vector.load %arg10[%c0_97, %c0_98, %c0_99, %c0_100] : memref<1x16x16x64xbf16, #tpu.memory_space<vmem>>, vector<1x16x16x64xbf16>
    %107 = vector.shape_cast %106 : vector<1x16x16x64xbf16> to vector<16x16x64xbf16>
    %108 = vector.shape_cast %105 : vector<16x16x64xbf16> to vector<1x16x16x64xbf16>
    tpu.vector_store %arg10[%c0_97, %c0_98, %c0_99, %c0_100], %108 {strides = array<i32>} : memref<1x16x16x64xbf16, #tpu.memory_space<vmem>>, vector<1x16x16x64xbf16>,
    return
  }
  func.func @transform_0(%arg0: i32, %arg1: i32, %arg2: i32) -> (i32, i32, i32, i32) {
    %c0_i32 = arith.constant 0 : i32
    %c0_i32_0 = arith.constant 0 : i32
    %c0_i32_1 = arith.constant 0 : i32
    return %arg0, %arg2, %c0_i32, %c0_i32_0 : i32, i32, i32, i32
  }
  func.func @transform_1(%arg0: i32, %arg1: i32, %arg2: i32) -> (i32, i32, i32, i32) {
    %c16_i32 = arith.constant 16 : i32
    %0 = arith.muli %arg2, %c16_i32 : i32
    %c1_i32 = arith.constant 1 : i32
    %1 = arith.subi %0, %c1_i32 : i32
    %c0_i32 = arith.constant 0 : i32
    %2 = arith.maxsi %1, %c0_i32 : i32
    %c0_i32_0 = arith.constant 0 : i32
    %c0_i32_1 = arith.constant 0 : i32
    %c0_i32_2 = arith.constant 0 : i32
    return %arg0, %2, %c0_i32_0, %c0_i32_1 : i32, i32, i32, i32
  }
  func.func @transform_2(%arg0: i32, %arg1: i32, %arg2: i32) -> (i32, i32, i32, i32) {
    %c16_i32 = arith.constant 16 : i32
    %0 = arith.muli %arg2, %c16_i32 : i32
    %c16_i32_0 = arith.constant 16 : i32
    %1 = arith.addi %0, %c16_i32_0 : i32
    %c15_i32 = arith.constant 15 : i32
    %2 = arith.minsi %1, %c15_i32 : i32
    %c0_i32 = arith.constant 0 : i32
    %c0_i32_1 = arith.constant 0 : i32
    %c0_i32_2 = arith.constant 0 : i32
    return %arg0, %2, %c0_i32, %c0_i32_1 : i32, i32, i32, i32
  }
  func.func @transform_3(%arg0: i32, %arg1: i32, %arg2: i32) -> (i32, i32) {
    %c0_i32 = arith.constant 0 : i32
    %c0_i32_0 = arith.constant 0 : i32
    %c0_i32_1 = arith.constant 0 : i32
    return %c0_i32, %c0_i32_0 : i32, i32
  }
  func.func @transform_4(%arg0: i32, %arg1: i32, %arg2: i32) -> (i32, i32) {
    %c0_i32 = arith.constant 0 : i32
    %c0_i32_0 = arith.constant 0 : i32
    %c0_i32_1 = arith.constant 0 : i32
    return %c0_i32, %c0_i32_0 : i32, i32
  }
  func.func @transform_5(%arg0: i32, %arg1: i32, %arg2: i32) -> (i32, i32, i32) {
    %c0_i32 = arith.constant 0 : i32
    %c0_i32_0 = arith.constant 0 : i32
    %c0_i32_1 = arith.constant 0 : i32
    return %c0_i32, %c0_i32_0, %arg1 : i32, i32, i32
  }
  func.func @transform_6(%arg0: i32, %arg1: i32, %arg2: i32) -> (i32, i32) {
    %c0_i32 = arith.constant 0 : i32
    %c0_i32_0 = arith.constant 0 : i32
    return %c0_i32, %arg1 : i32, i32
  }
  func.func @transform_7(%arg0: i32, %arg1: i32, %arg2: i32) -> (i32, i32, i32, i32) {
    %c0_i32 = arith.constant 0 : i32
    %c0_i32_0 = arith.constant 0 : i32
    return %arg0, %arg2, %c0_i32, %arg1 : i32, i32, i32, i32
  }
}

</mosaic_0001>

<llo_original>
// kernel: tpu_custom_call.1
$region0: #{tpu_custom_call.1}
  #allocation0 [shape = 'u32[]', space=smem, size = 0x4, offset = 0x4, fixed_abs, tag = 'smem constant byte address 0x4 - core index']
  #allocation1 [shape = 'u32[144,128]{1,0:T(1,128)}', space=vmem, size = 0x12000, scoped, tag = 'internal scratch']
  #allocation2 [shape = 'bf16[18,32,3]{2,1,0:T(16,128)(2,1)}', space=vmem, size = 0x24000, scoped, tag = 'scratch operand']
  %s0 = inlined_call_operand.hbm [shape: f32[2,16,16,3], index: 0, kind: input, shape index: {}]
  %s1 = inlined_call_operand.hbm [shape: f32[2,16,16,3], index: 1, kind: input, shape index: {}]
  %s2 = inlined_call_operand.hbm [shape: f32[2,16,16,3], index: 2, kind: input, shape index: {}]
  %s3 = inlined_call_operand.hbm [shape: f32[1,3], index: 3, kind: input, shape index: {}]
  %s4 = inlined_call_operand.hbm [shape: f32[1,3], index: 4, kind: input, shape index: {}]
  %s5 = inlined_call_operand.hbm [shape: bf16[9,3,64], index: 5, kind: input, shape index: {}]
  %s6 = inlined_call_operand.hbm [shape: f32[1,64], index: 6, kind: input, shape index: {}]
  %s7 = inlined_call_operand.hbm [shape: bf16[2,16,16,64], index: 7, kind: output, shape index: {}]
  %s8 = sld [smem:[#allocation0]]
  $region93: #{tpu_custom_call.1} parent=0
    _
  %s10 = ssub.s32 1, %s8
  %s11 = scalar_select 0, %s10, %s8
  $region1: #{tpu_custom_call.1} parent=0
    #allocation3 [shape = 'u8[262144]{0}', space=vmem, size = 0x40000, scoped, tag = 'input window, operand 0']
    #allocation4 [shape = 's32[2]{0}', space=sflag, size = 0x8, scoped, tag = 'scoped memory for tpu_custom_call.1']
    #allocation5 [shape = 's32[2]{0}', space=sflag, size = 0x8, scoped, tag = 'scoped memory for tpu_custom_call.1']
    #allocation6 [shape = 'u8[16384]{0}', space=vmem, size = 0x4000, scoped, tag = 'input window, operand 1']
    #allocation7 [shape = 's32[2]{0}', space=sflag, size = 0x8, scoped, tag = 'scoped memory for tpu_custom_call.1']
    #allocation8 [shape = 'u8[16384]{0}', space=vmem, size = 0x4000, scoped, tag = 'input window, operand 2']
    #allocation9 [shape = 'u8[512]{0}', space=vmem, size = 0x400, scoped, tag = 'input window, operand 3, single buffered']
    #allocation10 [shape = 's32[1]{0}', space=sflag, size = 0x4, scoped, tag = 'scoped memory for tpu_custom_call.1']
    #allocation11 [shape = 'u8[512]{0}', space=vmem, size = 0x400, scoped, tag = 'input window, operand 4, single buffered']
    #allocation12 [shape = 'u8[9216]{0}', space=vmem, size = 0x2400, scoped, tag = 'input window, operand 5, single buffered']
    #allocation13 [shape = 's32[1]{0}', space=sflag, size = 0x4, scoped, tag = 'scoped memory for tpu_custom_call.1']
    #allocation14 [shape = 'u8[512]{0}', space=vmem, size = 0x400, scoped, tag = 'input window, operand 6, single buffered']
    #allocation15 [shape = 'u8[131072]{0}', space=vmem, size = 0x20000, scoped, tag = 'output window, operand 0']
    %12 = vsyncpa [#allocation4], 0
    %s13 = scalar_lea.sflag [#allocation4], 1
    %14 = vsyncpa %s13, 0
    %15 = vsyncpa [#allocation7], 0
    %s16 = scalar_lea.sflag [#allocation7], 1
    %17 = vsyncpa %s16, 0
    %18 = vsyncpa [#allocation10], 0
    %19 = vsyncpa [#allocation13], 0
    %20 = vsyncpa [#allocation5], 0
    %s21 = scalar_lea.sflag [#allocation5], 1
    %22 = vsyncpa %s21, 0
    loop: start=0, step=1, limit=4
    $region2: #{tpu_custom_call.1} parent=1 // loop_pre_header
      _
    $region3: #{tpu_custom_call.1} parent=1 // loop_header
      %s24 = sphi 0, %s28
      %p25 = scmp.ge.s32.totalorder %s24, 4
      %s31 = sphi 0, %s50
      %s32 = sphi 0, %s46
      %s33 = sphi 0, %s42
      %s34 = sphi 0, %s31
      %s35 = sphi 0, %s32
      %s36 = sphi 0, %s33
      %s37 = sphi 0, %s34
      %s38 = sphi 0, %s35
      %s39 = sphi 0, %s36
      %s55 = sphi 0, %s57
      %s58 = sphi 0, %s55
      %s59 = sphi 0, %s58
      %s75 = sphi 0, %s59
      %s91 = sphi 0, %s93
      %s94 = sphi 0, %s91
      %s95 = sphi 0, %s94
      %s111 = sphi 0, %s95
      %s127 = sphi 0, %s129
      %s130 = sphi 0, %s127
      %s131 = sphi 0, %s130
      %s147 = sphi 0, %s131
      %s151 = sphi 0, %s151
      %s153 = sphi 0, %s151
      %s154 = sphi 0, %s153
      %s168 = sphi 0, %s154
      %s172 = sphi 0, %s172
      %s174 = sphi 0, %s172
      %s175 = sphi 0, %s174
      %s189 = sphi 0, %s175
      %s195 = sphi 0, %s197
      %s198 = sphi 0, %s195
      %s199 = sphi 0, %s198
      %s215 = sphi 0, %s199
      %s221 = sphi 0, %s223
      %s224 = sphi 0, %s221
      %s225 = sphi 0, %s224
      %s241 = sphi 0, %s225
      %s251 = sphi 0, %s253
      %s254 = sphi 0, %s251
      %s255 = sphi 0, %s254
      %s271 = sphi 0, %s255
    $region4: #{tpu_custom_call.1} parent=1 // loop_header_branch
      %27 = sbr.rel (%p25) target = $region8
    $region5: #{tpu_custom_call.1} parent=1 // loop_body
      %s29 = ssub.s32 %s24, 1
      %s30 = ssub.s32 %s24, 2
      %s40 = sadd.s32 1, %s33
      %p41 = scmp.ge.s32.totalorder %s40, 1
      %s42 = scalar_select %p41, 0, %s40
      %s43 = sadd.s32 1, %s32
      %s44 = scalar_select %p41, %s43, %s32
      %p45 = scmp.ge.s32.totalorder %s44, 1
      %s46 = scalar_select %p45, 0, %s44
      %s47 = sadd.s32 1, %s31
      %s48 = scalar_select %p45, %s47, %s31
      %p49 = scmp.ge.s32.totalorder %s48, 2
      %s50 = scalar_select %p49, 0, %s48
      %s51 = ssub.s32 %s31, %s50
      %s52 = ssub.s32 %s33, %s42
      %s53 = sor.u32 %s51, %s52
      %p54 = scmp.eq.s32.totalorder %s53, 0
      %s56 = sadd.s32 %s55, 1
      %s57 = scalar_select %p54, %s55, %s56
      %p60 = pneg %p54
      %p61 = scmp.eq.s32.totalorder %s24, 1
      %p62 = por %p60, %p61
      %p63 = scmp.ne.s32.totalorder %s55, %s58
      %p64 = scmp.eq.s32.totalorder %s24, 0
      %p65 = por %p63, %p64
      %p66 = scmp.ne.s32.totalorder %s55, %s58
      %p67 = scmp.eq.s32.totalorder %s29, 1
      %p68 = por %p66, %p67
      %p69 = scmp.ne.s32.totalorder %s58, %s59
      %p70 = scmp.eq.s32.totalorder %s29, 0
      %p71 = por %p69, %p70
      %p72 = scmp.ne.s32.totalorder %s58, %s59
      %p73 = scmp.eq.s32.totalorder %s30, 1
      %p74 = por %p72, %p73
      %p76 = scmp.ne.s32.totalorder %s59, %s75
      %p77 = scmp.eq.s32.totalorder %s30, 0
      %p78 = por %p76, %p77
      %s79 = smul.u32 %s33, 16
      %s80 = ssub.s32 %s79, 1
      %p81 = scmp.gt.s32.totalorder %s80, 0
      %s82 = scalar_select %p81, %s80, 0
      %s83 = smul.u32 %s42, 16
      %s84 = ssub.s32 %s83, 1
      %p85 = scmp.gt.s32.totalorder %s84, 0
      %s86 = scalar_select %p85, %s84, 0
      %s87 = ssub.s32 %s31, %s50
      %s88 = ssub.s32 %s82, %s86
      %s89 = sor.u32 %s87, %s88
      %p90 = scmp.eq.s32.totalorder %s89, 0
      %s92 = sadd.s32 %s91, 1
      %s93 = scalar_select %p90, %s91, %s92
      %p96 = pneg %p90
      %p97 = scmp.eq.s32.totalorder %s24, 1
      %p98 = por %p96, %p97
      %p99 = scmp.ne.s32.totalorder %s91, %s94
      %p100 = scmp.eq.s32.totalorder %s24, 0
      %p101 = por %p99, %p100
      %p102 = scmp.ne.s32.totalorder %s91, %s94
      %p103 = scmp.eq.s32.totalorder %s29, 1
      %p104 = por %p102, %p103
      %p105 = scmp.ne.s32.totalorder %s94, %s95
      %p106 = scmp.eq.s32.totalorder %s29, 0
      %p107 = por %p105, %p106
      %p108 = scmp.ne.s32.totalorder %s94, %s95
      %p109 = scmp.eq.s32.totalorder %s30, 1
      %p110 = por %p108, %p109
      %p112 = scmp.ne.s32.totalorder %s95, %s111
      %p113 = scmp.eq.s32.totalorder %s30, 0
      %p114 = por %p112, %p113
      %s115 = smul.u32 %s33, 16
      %s116 = sadd.s32 %s115, 16
      %p117 = scmp.lt.s32.totalorder %s116, 15
      %s118 = scalar_select %p117, %s116, 15
      %s119 = smul.u32 %s42, 16
      %s120 = sadd.s32 %s119, 16
      %p121 = scmp.lt.s32.totalorder %s120, 15
      %s122 = scalar_select %p121, %s120, 15
      %s123 = ssub.s32 %s31, %s50
      %s124 = ssub.s32 %s118, %s122
      %s125 = sor.u32 %s123, %s124
      %p126 = scmp.eq.s32.totalorder %s125, 0
      %s128 = sadd.s32 %s127, 1
      %s129 = scalar_select %p126, %s127, %s128
      %p132 = pneg %p126
      %p133 = scmp.eq.s32.totalorder %s24, 1
      %p134 = por %p132, %p133
      %p135 = scmp.ne.s32.totalorder %s127, %s130
      %p136 = scmp.eq.s32.totalorder %s24, 0
      %p137 = por %p135, %p136
      %p138 = scmp.ne.s32.totalorder %s127, %s130
      %p139 = scmp.eq.s32.totalorder %s29, 1
      %p140 = por %p138, %p139
      %p141 = scmp.ne.s32.totalorder %s130, %s131
      %p142 = scmp.eq.s32.totalorder %s29, 0
      %p143 = por %p141, %p142
      %p144 = scmp.ne.s32.totalorder %s130, %s131
      %p145 = scmp.eq.s32.totalorder %s30, 1
      %p146 = por %p144, %p145
      %p148 = scmp.ne.s32.totalorder %s131, %s147
      %p149 = scmp.eq.s32.totalorder %s30, 0
      %p150 = por %p148, %p149
      %s152 = sadd.s32 %s151, 1
      %p155 = scmp.eq.s32.totalorder %s24, 1
      %p156 = scmp.ne.s32.totalorder %s151, %s153
      %p157 = scmp.eq.s32.totalorder %s24, 0
      %p158 = por %p156, %p157
      %p159 = scmp.ne.s32.totalorder %s151, %s153
      %p160 = scmp.eq.s32.totalorder %s29, 1
      %p161 = por %p159, %p160
      %p162 = scmp.ne.s32.totalorder %s153, %s154
      %p163 = scmp.eq.s32.totalorder %s29, 0
      %p164 = por %p162, %p163
      %p165 = scmp.ne.s32.totalorder %s153, %s154
      %p166 = scmp.eq.s32.totalorder %s30, 1
      %p167 = por %p165, %p166
      %p169 = scmp.ne.s32.totalorder %s154, %s168
      %p170 = scmp.eq.s32.totalorder %s30, 0
      %p171 = por %p169, %p170
      %s173 = sadd.s32 %s172, 1
      %p176 = scmp.eq.s32.totalorder %s24, 1
      %p177 = scmp.ne.s32.totalorder %s172, %s174
      %p178 = scmp.eq.s32.totalorder %s24, 0
      %p179 = por %p177, %p178
      %p180 = scmp.ne.s32.totalorder %s172, %s174
      %p181 = scmp.eq.s32.totalorder %s29, 1
      %p182 = por %p180, %p181
      %p183 = scmp.ne.s32.totalorder %s174, %s175
      %p184 = scmp.eq.s32.totalorder %s29, 0
      %p185 = por %p183, %p184
      %p186 = scmp.ne.s32.totalorder %s174, %s175
      %p187 = scmp.eq.s32.totalorder %s30, 1
      %p188 = por %p186, %p187
      %p190 = scmp.ne.s32.totalorder %s175, %s189
      %p191 = scmp.eq.s32.totalorder %s30, 0
      %p192 = por %p190, %p191
      %s193 = ssub.s32 %s32, %s46
      %p194 = scmp.eq.s32.totalorder %s193, 0
      %s196 = sadd.s32 %s195, 1
      %s197 = scalar_select %p194, %s195, %s196
      %p200 = pneg %p194
      %p201 = scmp.eq.s32.totalorder %s24, 1
      %p202 = por %p200, %p201
      %p203 = scmp.ne.s32.totalorder %s195, %s198
      %p204 = scmp.eq.s32.totalorder %s24, 0
      %p205 = por %p203, %p204
      %p206 = scmp.ne.s32.totalorder %s195, %s198
      %p207 = scmp.eq.s32.totalorder %s29, 1
      %p208 = por %p206, %p207
      %p209 = scmp.ne.s32.totalorder %s198, %s199
      %p210 = scmp.eq.s32.totalorder %s29, 0
      %p211 = por %p209, %p210
      %p212 = scmp.ne.s32.totalorder %s198, %s199
      %p213 = scmp.eq.s32.totalorder %s30, 1
      %p214 = por %p212, %p213
      %p216 = scmp.ne.s32.totalorder %s199, %s215
      %p217 = scmp.eq.s32.totalorder %s30, 0
      %p218 = por %p216, %p217
      %s219 = ssub.s32 %s32, %s46
      %p220 = scmp.eq.s32.totalorder %s219, 0
      %s222 = sadd.s32 %s221, 1
      %s223 = scalar_select %p220, %s221, %s222
      %p226 = pneg %p220
      %p227 = scmp.eq.s32.totalorder %s24, 1
      %p228 = por %p226, %p227
      %p229 = scmp.ne.s32.totalorder %s221, %s224
      %p230 = scmp.eq.s32.totalorder %s24, 0
      %p231 = por %p229, %p230
      %p232 = scmp.ne.s32.totalorder %s221, %s224
      %p233 = scmp.eq.s32.totalorder %s29, 1
      %p234 = por %p232, %p233
      %p235 = scmp.ne.s32.totalorder %s224, %s225
      %p236 = scmp.eq.s32.totalorder %s29, 0
      %p237 = por %p235, %p236
      %p238 = scmp.ne.s32.totalorder %s224, %s225
      %p239 = scmp.eq.s32.totalorder %s30, 1
      %p240 = por %p238, %p239
      %p242 = scmp.ne.s32.totalorder %s225, %s241
      %p243 = scmp.eq.s32.totalorder %s30, 0
      %p244 = por %p242, %p243
      %s245 = ssub.s32 %s31, %s50
      %s246 = ssub.s32 %s33, %s42
      %s247 = sor.u32 %s245, %s246
      %s248 = ssub.s32 %s32, %s46
      %s249 = sor.u32 %s247, %s248
      %p250 = scmp.eq.s32.totalorder %s249, 0
      %s252 = sadd.s32 %s251, 1
      %s253 = scalar_select %p250, %s251, %s252
      %p256 = pneg %p250
      %p257 = scmp.eq.s32.totalorder %s24, 1
      %p258 = por %p256, %p257
      %p259 = scmp.ne.s32.totalorder %s251, %s254
      %p260 = scmp.eq.s32.totalorder %s24, 0
      %p261 = por %p259, %p260
      %p262 = scmp.ne.s32.totalorder %s251, %s254
      %p263 = scmp.eq.s32.totalorder %s29, 1
      %p264 = por %p262, %p263
      %p265 = scmp.ne.s32.totalorder %s254, %s255
      %p266 = scmp.eq.s32.totalorder %s29, 0
      %p267 = por %p265, %p266
      %p268 = scmp.ne.s32.totalorder %s254, %s255
      %p269 = scmp.eq.s32.totalorder %s30, 1
      %p270 = por %p268, %p269
      %p272 = scmp.ne.s32.totalorder %s255, %s271
      %p273 = scmp.eq.s32.totalorder %s30, 0
      %p274 = por %p272, %p273
      %p275 = scmp.le.s32.totalorder 1, %s24
      %p276 = scmp.lt.s32.totalorder %s24, 3
      %p277 = pnand %p275, %p276
      %p278 = pneg %p277
      // Predicated region
      $region9: #{tpu_custom_call.1} parent=5 // pred_check
        _
      $region10: #{tpu_custom_call.1} parent=5 // pred_check_branch
        %280 = sbr.rel (%p277) target = $region12
      $region11: #{tpu_custom_call.1} parent=5 // pred_region
        %s281 = ssub.s32 %s24, 1
        // Predicated region
        $region13: #{tpu_custom_call.1} parent=11 // pred_check
          %p282 = pneg %p164
        $region14: #{tpu_custom_call.1} parent=11 // pred_check_branch
          %284 = sbr.rel (%p282) target = $region16
        $region15: #{tpu_custom_call.1} parent=11 // pred_region
          %s286 = ssub.s32 16, 16
          %287 = vsyncadd [#allocation10], %s286
          %s289 = sshll.u32 [#allocation9], 4
          %s290 = int_to_ptr.vmem [resolvable:$true] %s289
          %292 = dma.hbm_to_vmem [thread:$0]  %s3, 16, %s290, [#allocation10]
        $region16: #{tpu_custom_call.1} parent=11 // pred_fallthru
          _
        // Predicated region
        $region17: #{tpu_custom_call.1} parent=11 // pred_check
          %p293 = pneg %p185
        $region18: #{tpu_custom_call.1} parent=11 // pred_check_branch
          %295 = sbr.rel (%p293) target = $region20
        $region19: #{tpu_custom_call.1} parent=11 // pred_region
          %s297 = ssub.s32 16, 16
          %298 = vsyncadd [#allocation10], %s297
          %s300 = sshll.u32 [#allocation11], 4
          %s301 = int_to_ptr.vmem [resolvable:$true] %s300
          %303 = dma.hbm_to_vmem [thread:$0]  %s4, 16, %s301, [#allocation10]
        $region20: #{tpu_custom_call.1} parent=11 // pred_fallthru
          _
        // Predicated region
        $region21: #{tpu_custom_call.1} parent=11 // pred_check
          %p304 = pneg %p211
        $region22: #{tpu_custom_call.1} parent=11 // pred_check_branch
          %306 = sbr.rel (%p304) target = $region24
        $region23: #{tpu_custom_call.1} parent=11 // pred_region
          %s308 = ssub.s32 288, 288
          %309 = vsyncadd [#allocation13], %s308
          %s310 = smul.addr %s35, 32
          %s311 = scalar_lea.hbm %s5, %s310
          %s312 = sshll.u32 [#allocation12], 4
          %s313 = int_to_ptr.vmem [resolvable:$true] %s312
          %318 = dma.hbm_to_vmem [thread:$0]  %s311, 288, %s313, [#allocation13], 32, 32, 2
        $region24: #{tpu_custom_call.1} parent=11 // pred_fallthru
          _
        // Predicated region
        $region25: #{tpu_custom_call.1} parent=11 // pred_check
          %p319 = pneg %p237
        $region26: #{tpu_custom_call.1} parent=11 // pred_check_branch
          %321 = sbr.rel (%p319) target = $region28
        $region27: #{tpu_custom_call.1} parent=11 // pred_region
          %s323 = ssub.s32 16, 16
          %324 = vsyncadd [#allocation13], %s323
          %s325 = smul.addr %s35, 16
          %s326 = scalar_lea.hbm %s6, %s325
          %s328 = sshll.u32 [#allocation14], 4
          %s329 = int_to_ptr.vmem [resolvable:$true] %s328
          %331 = dma.hbm_to_vmem [thread:$0]  %s326, 16, %s329, [#allocation13]
        $region28: #{tpu_custom_call.1} parent=11 // pred_fallthru
          _
      $region12: #{tpu_custom_call.1} parent=5 // pred_fallthru
        _
      %p332 = scmp.lt.s32.totalorder %s24, 2
      // Predicated region
      $region29: #{tpu_custom_call.1} parent=5 // pred_check
        %p333 = pneg %p332
      $region30: #{tpu_custom_call.1} parent=5 // pred_check_branch
        %335 = sbr.rel (%p333) target = $region32
      $region31: #{tpu_custom_call.1} parent=5 // pred_region
        // Predicated region
        $region33: #{tpu_custom_call.1} parent=31 // pred_check
          %p336 = pneg %p65
        $region34: #{tpu_custom_call.1} parent=31 // pred_check_branch
          %338 = sbr.rel (%p336) target = $region36
        $region35: #{tpu_custom_call.1} parent=31 // pred_region
          %s339 = sand.u32 %s55, 1
          %s340 = scalar_lea.sflag [#allocation4], %s339
          %s341 = sand.u32 %s55, 1
          %s342 = smul.addr %s341, 256
          %s343 = scalar_lea.vmem [#allocation3], %s342
          %s344 = smul.u32 16, %s33
          %s346 = ssub.s32 4096, 4096
          %347 = vsyncadd %s340, %s346
          %s348 = smul.addr %s344, 2
          %s349 = smul.addr %s31, 32
          %s350 = sadd.s32 %s348, %s349
          %s351 = smul.addr %s350, 128
          %s352 = scalar_lea.hbm %s0, %s351
          %s353 = sshll.u32 %s343, 4
          %s354 = int_to_ptr.vmem [resolvable:$true] %s353
          %359 = dma.hbm_to_vmem [thread:$0]  %s352, 4096, %s354, %s340, 128, 128, 8
        $region36: #{tpu_custom_call.1} parent=31 // pred_fallthru
          _
        // Predicated region
        $region37: #{tpu_custom_call.1} parent=31 // pred_check
          %p360 = pneg %p101
        $region38: #{tpu_custom_call.1} parent=31 // pred_check_branch
          %362 = sbr.rel (%p360) target = $region40
        $region39: #{tpu_custom_call.1} parent=31 // pred_region
          %s363 = sand.u32 %s24, 1
          %s364 = scalar_lea.sflag [#allocation7], %s363
          %s365 = sand.u32 %s91, 1
          %s366 = smul.addr %s365, 16
          %s367 = scalar_lea.vmem [#allocation6], %s366
          %s368 = smul.u32 %s33, 16
          %s369 = ssub.s32 %s368, 1
          %p370 = scmp.gt.s32.totalorder %s369, 0
          %s371 = scalar_select %p370, %s369, 0
          %s373 = ssub.s32 256, 256
          %374 = vsyncadd %s364, %s373
          %s375 = smul.addr %s371, 2
          %s376 = smul.addr %s31, 32
          %s377 = sadd.s32 %s375, %s376
          %s378 = smul.addr %s377, 128
          %s379 = scalar_lea.hbm %s1, %s378
          %s380 = sshll.u32 %s367, 4
          %s381 = int_to_ptr.vmem [resolvable:$true] %s380
          %386 = dma.hbm_to_vmem [thread:$0]  %s379, 256, %s381, %s364, 128, 128, 8
        $region40: #{tpu_custom_call.1} parent=31 // pred_fallthru
          _
        // Predicated region
        $region41: #{tpu_custom_call.1} parent=31 // pred_check
          %p387 = pneg %p137
        $region42: #{tpu_custom_call.1} parent=31 // pred_check_branch
          %389 = sbr.rel (%p387) target = $region44
        $region43: #{tpu_custom_call.1} parent=31 // pred_region
          %s390 = sand.u32 %s24, 1
          %s391 = scalar_lea.sflag [#allocation7], %s390
          %s392 = sand.u32 %s127, 1
          %s393 = smul.addr %s392, 16
          %s394 = scalar_lea.vmem [#allocation8], %s393
          %s395 = smul.u32 %s33, 16
          %s396 = sadd.s32 %s395, 16
          %p397 = scmp.lt.s32.totalorder %s396, 15
          %s398 = scalar_select %p397, %s396, 15
          %s400 = ssub.s32 256, 256
          %401 = vsyncadd %s391, %s400
          %s402 = smul.addr %s398, 2
          %s403 = smul.addr %s31, 32
          %s404 = sadd.s32 %s402, %s403
          %s405 = smul.addr %s404, 128
          %s406 = scalar_lea.hbm %s2, %s405
          %s407 = sshll.u32 %s394, 4
          %s408 = int_to_ptr.vmem [resolvable:$true] %s407
          %413 = dma.hbm_to_vmem [thread:$0]  %s406, 256, %s408, %s391, 128, 128, 8
        $region44: #{tpu_custom_call.1} parent=31 // pred_fallthru
          _
      $region32: #{tpu_custom_call.1} parent=5 // pred_fallthru
        _
      %p414 = scmp.le.s32.totalorder 1, %s24
      %p415 = scmp.lt.s32.totalorder %s24, 3
      %p416 = pnand %p414, %p415
      %p417 = pneg %p416
      // Predicated region
      $region45: #{tpu_custom_call.1} parent=5 // pred_check
        _
      $region46: #{tpu_custom_call.1} parent=5 // pred_check_branch
        %419 = sbr.rel (%p416) target = $region48
      $region47: #{tpu_custom_call.1} parent=5 // pred_region
        %s420 = ssub.s32 %s24, 1
        %s421 = sand.u32 %s58, 1
        %s422 = scalar_lea.sflag [#allocation4], %s421
        %s423 = sand.u32 %s58, 1
        %s424 = smul.addr %s423, 256
        %s425 = scalar_lea.vmem [#allocation3], %s424
        // Predicated region
        $region49: #{tpu_custom_call.1} parent=47 // pred_check
          %p426 = pneg %p71
        $region50: #{tpu_custom_call.1} parent=47 // pred_check_branch
          %428 = sbr.rel (%p426) target = $region52
        $region51: #{tpu_custom_call.1} parent=47 // pred_region
          %429 = dma.done %s422, 4096
        $region52: #{tpu_custom_call.1} parent=47 // pred_fallthru
          _
        %s430 = sand.u32 %s29, 1
        %s431 = scalar_lea.sflag [#allocation7], %s430
        %s432 = sand.u32 %s94, 1
        %s433 = smul.addr %s432, 16
        %s434 = scalar_lea.vmem [#allocation6], %s433
        // Predicated region
        $region53: #{tpu_custom_call.1} parent=47 // pred_check
          %p435 = pneg %p107
        $region54: #{tpu_custom_call.1} parent=47 // pred_check_branch
          %437 = sbr.rel (%p435) target = $region56
        $region55: #{tpu_custom_call.1} parent=47 // pred_region
          %438 = dma.done %s431, 256
        $region56: #{tpu_custom_call.1} parent=47 // pred_fallthru
          _
        %s439 = sand.u32 %s29, 1
        %s440 = scalar_lea.sflag [#allocation7], %s439
        %s441 = sand.u32 %s130, 1
        %s442 = smul.addr %s441, 16
        %s443 = scalar_lea.vmem [#allocation8], %s442
        // Predicated region
        $region57: #{tpu_custom_call.1} parent=47 // pred_check
          %p444 = pneg %p143
        $region58: #{tpu_custom_call.1} parent=47 // pred_check_branch
          %446 = sbr.rel (%p444) target = $region60
        $region59: #{tpu_custom_call.1} parent=47 // pred_region
          %447 = dma.done %s440, 256
        $region60: #{tpu_custom_call.1} parent=47 // pred_fallthru
          _
        // Predicated region
        $region61: #{tpu_custom_call.1} parent=47 // pred_check
          %p448 = pneg %p164
        $region62: #{tpu_custom_call.1} parent=47 // pred_check_branch
          %450 = sbr.rel (%p448) target = $region64
        $region63: #{tpu_custom_call.1} parent=47 // pred_region
          %451 = dma.done [#allocation10], 16
        $region64: #{tpu_custom_call.1} parent=47 // pred_fallthru
          _
        // Predicated region
        $region65: #{tpu_custom_call.1} parent=47 // pred_check
          %p452 = pneg %p185
        $region66: #{tpu_custom_call.1} parent=47 // pred_check_branch
          %454 = sbr.rel (%p452) target = $region68
        $region67: #{tpu_custom_call.1} parent=47 // pred_region
          %455 = dma.done [#allocation10], 16
        $region68: #{tpu_custom_call.1} parent=47 // pred_fallthru
          _
        // Predicated region
        $region69: #{tpu_custom_call.1} parent=47 // pred_check
          %p456 = pneg %p211
        $region70: #{tpu_custom_call.1} parent=47 // pred_check_branch
          %458 = sbr.rel (%p456) target = $region72
        $region71: #{tpu_custom_call.1} parent=47 // pred_region
          %459 = dma.done [#allocation13], 288
        $region72: #{tpu_custom_call.1} parent=47 // pred_fallthru
          _
        // Predicated region
        $region73: #{tpu_custom_call.1} parent=47 // pred_check
          %p460 = pneg %p237
        $region74: #{tpu_custom_call.1} parent=47 // pred_check_branch
          %462 = sbr.rel (%p460) target = $region76
        $region75: #{tpu_custom_call.1} parent=47 // pred_region
          %463 = dma.done [#allocation13], 16
        $region76: #{tpu_custom_call.1} parent=47 // pred_fallthru
          _
        %s464 = sand.u32 %s58, 1
        %s465 = scalar_lea.sflag [#allocation4], %s464
        %s466 = sand.u32 %s58, 1
        %s467 = smul.addr %s466, 256
        %s468 = scalar_lea.vmem [#allocation3], %s467
        %p469 = pneg %p71
        %p470 = pneg %p68
        %s471 = sand.u32 %s29, 1
        %s472 = scalar_lea.sflag [#allocation7], %s471
        %s473 = sand.u32 %s94, 1
        %s474 = smul.addr %s473, 16
        %s475 = scalar_lea.vmem [#allocation6], %s474
        %p476 = pneg %p107
        %p477 = pneg %p104
        %s478 = sand.u32 %s29, 1
        %s479 = scalar_lea.sflag [#allocation7], %s478
        %s480 = sand.u32 %s130, 1
        %s481 = smul.addr %s480, 16
        %s482 = scalar_lea.vmem [#allocation8], %s481
        %p483 = pneg %p143
        %p484 = pneg %p140
        %p485 = pneg %p164
        %p486 = pneg %p161
        %p487 = pneg %p185
        %p488 = pneg %p182
        %p489 = pneg %p211
        %p490 = pneg %p208
        %p491 = pneg %p237
        %p492 = pneg %p234
        %p493 = pneg %p267
        %p494 = pneg %p264
        %s495 = sand.u32 %s254, 1
        %s496 = scalar_lea.sflag [#allocation5], %s495
        %s497 = sand.u32 %s254, 1
        %s498 = smul.addr %s497, 128
        %s499 = scalar_lea.vmem [#allocation15], %s498
        %s500 = smul.u32 16, %s36
        %s501 = smul.u32 %s36, 16
        %s502 = ssub.s32 %s501, 1
        %p503 = scmp.gt.s32.totalorder %s502, 0
        %s504 = scalar_select %p503, %s502, 0
        %s505 = smul.u32 %s36, 16
        %s506 = sadd.s32 %s505, 16
        %p507 = scmp.lt.s32.totalorder %s506, 15
        %s508 = scalar_select %p507, %s506, 15
        %s509 = smul.u32 16, %s36
        %v511 = vld [vmem:[%s425] sm:$0xff]
        %v512 = vld [vmem:[%s425 + $0x8] sm:$0xff]
        %v513 = vld [vmem:[%s425 + $0x10] sm:$0xff]
        %v514 = vld [vmem:[%s425 + $0x18] sm:$0xff]
        %v515 = vld [vmem:[%s425 + $0x20] sm:$0xff]
        %v516 = vld [vmem:[%s425 + $0x28] sm:$0xff]
        %v517 = vld [vmem:[%s425 + $0x30] sm:$0xff]
        %v518 = vld [vmem:[%s425 + $0x38] sm:$0xff]
        %v519 = vld [vmem:[%s425 + $0x40] sm:$0xff]
        %v520 = vld [vmem:[%s425 + $0x48] sm:$0xff]
        %v521 = vld [vmem:[%s425 + $0x50] sm:$0xff]
        %v522 = vld [vmem:[%s425 + $0x58] sm:$0xff]
        %v523 = vld [vmem:[%s425 + $0x60] sm:$0xff]
        %v524 = vld [vmem:[%s425 + $0x68] sm:$0xff]
        %v525 = vld [vmem:[%s425 + $0x70] sm:$0xff]
        %v526 = vld [vmem:[%s425 + $0x78] sm:$0xff]
        %v527 = vld [vmem:[%s425 + $0x80] sm:$0xff]
        %v528 = vld [vmem:[%s425 + $0x88] sm:$0xff]
        %v529 = vld [vmem:[%s425 + $0x90] sm:$0xff]
        %v530 = vld [vmem:[%s425 + $0x98] sm:$0xff]
        %v531 = vld [vmem:[%s425 + $0xa0] sm:$0xff]
        %v532 = vld [vmem:[%s425 + $0xa8] sm:$0xff]
        %v533 = vld [vmem:[%s425 + $0xb0] sm:$0xff]
        %v534 = vld [vmem:[%s425 + $0xb8] sm:$0xff]
        %v535 = vld [vmem:[%s425 + $0xc0] sm:$0xff]
        %v536 = vld [vmem:[%s425 + $0xc8] sm:$0xff]
        %v537 = vld [vmem:[%s425 + $0xd0] sm:$0xff]
        %v538 = vld [vmem:[%s425 + $0xd8] sm:$0xff]
        %v539 = vld [vmem:[%s425 + $0xe0] sm:$0xff]
        %v540 = vld [vmem:[%s425 + $0xe8] sm:$0xff]
        %v541 = vld [vmem:[%s425 + $0xf0] sm:$0xff]
        %v542 = vld [vmem:[%s425 + $0xf8] sm:$0xff]
        %v543 = vld [vmem:[#allocation9] sm:$0x1]
        %v545 = vlaneseq
        %v546 = vshrl.u32 %v545, 7
        %v547 = vsub.s32 0, %v546
        %v548 = vrot.slane %v543, %v547
        %v550 = vmul.f32 %v511, %v548
        %v551 = vmul.f32 %v512, %v548
        %v552 = vmul.f32 %v513, %v548
        %v553 = vmul.f32 %v514, %v548
        %v554 = vmul.f32 %v515, %v548
        %v555 = vmul.f32 %v516, %v548
        %v556 = vmul.f32 %v517, %v548
        %v557 = vmul.f32 %v518, %v548
        %v558 = vmul.f32 %v519, %v548
        %v559 = vmul.f32 %v520, %v548
        %v560 = vmul.f32 %v521, %v548
        %v561 = vmul.f32 %v522, %v548
        %v562 = vmul.f32 %v523, %v548
        %v563 = vmul.f32 %v524, %v548
        %v564 = vmul.f32 %v525, %v548
        %v565 = vmul.f32 %v526, %v548
        %v566 = vmul.f32 %v527, %v548
        %v567 = vmul.f32 %v528, %v548
        %v568 = vmul.f32 %v529, %v548
        %v569 = vmul.f32 %v530, %v548
        %v570 = vmul.f32 %v531, %v548
        %v571 = vmul.f32 %v532, %v548
        %v572 = vmul.f32 %v533, %v548
        %v573 = vmul.f32 %v534, %v548
        %v574 = vmul.f32 %v535, %v548
        %v575 = vmul.f32 %v536, %v548
        %v576 = vmul.f32 %v537, %v548
        %v577 = vmul.f32 %v538, %v548
        %v578 = vmul.f32 %v539, %v548
        %v579 = vmul.f32 %v540, %v548
        %v580 = vmul.f32 %v541, %v548
        %v581 = vmul.f32 %v542, %v548
        %v582 = vld [vmem:[#allocation11] sm:$0x1]
        %v584 = vlaneseq
        %v585 = vshrl.u32 %v584, 7
        %v586 = vsub.s32 0, %v585
        %v587 = vrot.slane %v582, %v586
        %v589 = vadd.f32 %v550, %v587
        %v590 = vadd.f32 %v551, %v587
        %v591 = vadd.f32 %v552, %v587
        %v592 = vadd.f32 %v553, %v587
        %v593 = vadd.f32 %v554, %v587
        %v594 = vadd.f32 %v555, %v587
        %v595 = vadd.f32 %v556, %v587
        %v596 = vadd.f32 %v557, %v587
        %v597 = vadd.f32 %v558, %v587
        %v598 = vadd.f32 %v559, %v587
        %v599 = vadd.f32 %v560, %v587
        %v600 = vadd.f32 %v561, %v587
        %v601 = vadd.f32 %v562, %v587
        %v602 = vadd.f32 %v563, %v587
        %v603 = vadd.f32 %v564, %v587
        %v604 = vadd.f32 %v565, %v587
        %v605 = vadd.f32 %v566, %v587
        %v606 = vadd.f32 %v567, %v587
        %v607 = vadd.f32 %v568, %v587
        %v608 = vadd.f32 %v569, %v587
        %v609 = vadd.f32 %v570, %v587
        %v610 = vadd.f32 %v571, %v587
        %v611 = vadd.f32 %v572, %v587
        %v612 = vadd.f32 %v573, %v587
        %v613 = vadd.f32 %v574, %v587
        %v614 = vadd.f32 %v575, %v587
        %v615 = vadd.f32 %v576, %v587
        %v616 = vadd.f32 %v577, %v587
        %v617 = vadd.f32 %v578, %v587
        %v618 = vadd.f32 %v579, %v587
        %v619 = vadd.f32 %v580, %v587
        %v620 = vadd.f32 %v581, %v587
        %v621 = vpack.c.bf16 %v590, %v589
        %v622 = vpack.c.bf16 %v592, %v591
        %v623 = vpack.c.bf16 %v594, %v593
        %v624 = vpack.c.bf16 %v596, %v595
        %v625 = vpack.c.bf16 %v598, %v597
        %v626 = vpack.c.bf16 %v600, %v599
        %v627 = vpack.c.bf16 %v602, %v601
        %v628 = vpack.c.bf16 %v604, %v603
        %v629 = vpack.c.bf16 %v606, %v605
        %v630 = vpack.c.bf16 %v608, %v607
        %v631 = vpack.c.bf16 %v610, %v609
        %v632 = vpack.c.bf16 %v612, %v611
        %v633 = vpack.c.bf16 %v614, %v613
        %v634 = vpack.c.bf16 %v616, %v615
        %v635 = vpack.c.bf16 %v618, %v617
        %v636 = vpack.c.bf16 %v620, %v619
        %v653 = vrot.slane %v621, 4
        %v654 = vrot.slane %v622, 4
        %v655 = vrot.slane %v623, 4
        %v656 = vrot.slane %v624, 4
        %v657 = vrot.slane %v625, 4
        %v658 = vrot.slane %v626, 4
        %v659 = vrot.slane %v627, 4
        %v660 = vrot.slane %v628, 4
        %v661 = vrot.slane %v629, 4
        %v662 = vrot.slane %v630, 4
        %v663 = vrot.slane %v631, 4
        %v664 = vrot.slane %v632, 4
        %v665 = vrot.slane %v633, 4
        %v666 = vrot.slane %v634, 4
        %v667 = vrot.slane %v635, 4
        %v668 = vrot.slane %v636, 4
        %s685 = scalar_lea.vmem [#allocation2], 16
        %vm686 = vcmask 23556
        %687 = vst.msk [vmem:[%s685] sm:$0xf0] %vm686, %v653
        %vm688 = vcmask 19456
        %689 = vst.msk [vmem:[%s685 + $0x8] sm:$0xf] %vm688, %v653
        %690 = vst.msk [vmem:[%s685 + $0x10] sm:$0xf0] %vm686, %v654
        %691 = vst.msk [vmem:[%s685 + $0x18] sm:$0xf] %vm688, %v654
        %692 = vst.msk [vmem:[%s685 + $0x20] sm:$0xf0] %vm686, %v655
        %693 = vst.msk [vmem:[%s685 + $0x28] sm:$0xf] %vm688, %v655
        %694 = vst.msk [vmem:[%s685 + $0x30] sm:$0xf0] %vm686, %v656
        %695 = vst.msk [vmem:[%s685 + $0x38] sm:$0xf] %vm688, %v656
        %696 = vst.msk [vmem:[%s685 + $0x40] sm:$0xf0] %vm686, %v657
        %697 = vst.msk [vmem:[%s685 + $0x48] sm:$0xf] %vm688, %v657
        %698 = vst.msk [vmem:[%s685 + $0x50] sm:$0xf0] %vm686, %v658
        %699 = vst.msk [vmem:[%s685 + $0x58] sm:$0xf] %vm688, %v658
        %700 = vst.msk [vmem:[%s685 + $0x60] sm:$0xf0] %vm686, %v659
        %701 = vst.msk [vmem:[%s685 + $0x68] sm:$0xf] %vm688, %v659
        %702 = vst.msk [vmem:[%s685 + $0x70] sm:$0xf0] %vm686, %v660
        %703 = vst.msk [vmem:[%s685 + $0x78] sm:$0xf] %vm688, %v660
        %704 = vst.msk [vmem:[%s685 + $0x80] sm:$0xf0] %vm686, %v661
        %705 = vst.msk [vmem:[%s685 + $0x88] sm:$0xf] %vm688, %v661
        %706 = vst.msk [vmem:[%s685 + $0x90] sm:$0xf0] %vm686, %v662
        %707 = vst.msk [vmem:[%s685 + $0x98] sm:$0xf] %vm688, %v662
        %708 = vst.msk [vmem:[%s685 + $0xa0] sm:$0xf0] %vm686, %v663
        %709 = vst.msk [vmem:[%s685 + $0xa8] sm:$0xf] %vm688, %v663
        %710 = vst.msk [vmem:[%s685 + $0xb0] sm:$0xf0] %vm686, %v664
        %711 = vst.msk [vmem:[%s685 + $0xb8] sm:$0xf] %vm688, %v664
        %712 = vst.msk [vmem:[%s685 + $0xc0] sm:$0xf0] %vm686, %v665
        %713 = vst.msk [vmem:[%s685 + $0xc8] sm:$0xf] %vm688, %v665
        %714 = vst.msk [vmem:[%s685 + $0xd0] sm:$0xf0] %vm686, %v666
        %715 = vst.msk [vmem:[%s685 + $0xd8] sm:$0xf] %vm688, %v666
        %716 = vst.msk [vmem:[%s685 + $0xe0] sm:$0xf0] %vm686, %v667
        %717 = vst.msk [vmem:[%s685 + $0xe8] sm:$0xf] %vm688, %v667
        %718 = vst.msk [vmem:[%s685 + $0xf0] sm:$0xf0] %vm686, %v668
        %719 = vst.msk [vmem:[%s685 + $0xf8] sm:$0xf] %vm688, %v668
        %v720 = vld [vmem:[%s434] sm:$0xff]
        %v721 = vld [vmem:[%s434 + $0x8] sm:$0xff]
        %v722 = vld [vmem:[#allocation9] sm:$0x1]
        %v724 = vlaneseq
        %v725 = vshrl.u32 %v724, 7
        %v726 = vsub.s32 0, %v725
        %v727 = vrot.slane %v722, %v726
        %v729 = vmul.f32 %v720, %v727
        %v730 = vmul.f32 %v721, %v727
        %v731 = vld [vmem:[#allocation11] sm:$0x1]
        %v733 = vlaneseq
        %v734 = vshrl.u32 %v733, 7
        %v735 = vsub.s32 0, %v734
        %v736 = vrot.slane %v731, %v735
        %v738 = vadd.f32 %v729, %v736
        %v739 = vadd.f32 %v730, %v736
        %v740 = vpack.c.bf16 %v739, %v738
        %v742 = vrot.slane %v740, 4
        %744 = vst.msk [vmem:[#allocation2] sm:$0xf0] %vm686, %v742
        %745 = vst.msk [vmem:[#allocation2 + $0x8] sm:$0xf] %vm688, %v742
        %v746 = vld [vmem:[%s443] sm:$0xff]
        %v747 = vld [vmem:[%s443 + $0x8] sm:$0xff]
        %v748 = vld [vmem:[#allocation9] sm:$0x1]
        %v750 = vlaneseq
        %v751 = vshrl.u32 %v750, 7
        %v752 = vsub.s32 0, %v751
        %v753 = vrot.slane %v748, %v752
        %v755 = vmul.f32 %v746, %v753
        %v756 = vmul.f32 %v747, %v753
        %v757 = vld [vmem:[#allocation11] sm:$0x1]
        %v759 = vlaneseq
        %v760 = vshrl.u32 %v759, 7
        %v761 = vsub.s32 0, %v760
        %v762 = vrot.slane %v757, %v761
        %v764 = vadd.f32 %v755, %v762
        %v765 = vadd.f32 %v756, %v762
        %v766 = vpack.c.bf16 %v765, %v764
        %v768 = vrot.slane %v766, 4
        %s770 = scalar_lea.vmem [#allocation2], 272
        %771 = vst.msk [vmem:[%s770] sm:$0xf0] %vm686, %v768
        %772 = vst.msk [vmem:[%s770 + $0x8] sm:$0xf] %vm688, %v768
        %p773 = scmp.eq.s32.totalorder %s36, 0
        // Predicated region
        $region77: #{tpu_custom_call.1} parent=47 // pred_check
          %p774 = pneg %p773
        $region78: #{tpu_custom_call.1} parent=47 // pred_check_branch
          %776 = sbr.rel (%p774) target = $region80
        $region79: #{tpu_custom_call.1} parent=47 // pred_region
          %777 = vst.msk [vmem:[#allocation2] sm:$0xf0] %vm686, 0
          %778 = vst.msk [vmem:[#allocation2 + $0x8] sm:$0xf] %vm688, 0
          %779 = vst.msk [vmem:[%s770] sm:$0xf0] %vm686, 0
          %780 = vst.msk [vmem:[%s770 + $0x8] sm:$0xf] %vm688, 0
        $region80: #{tpu_custom_call.1} parent=47 // pred_fallthru
          _
        %vm781 = vcmask 19459
        %vm782 = vsmask.f32 7950
        %vm783 = vmand %vm781, %vm782
        %v784 = vld [vmem:[#allocation2] sm:$0x8]
        %v785 = vsel %vm783, 0, %v784
        %786 = vst [vmem:[#allocation2] sm:$0x8] %v785
        %v787 = vld [vmem:[#allocation2 + $0x10] sm:$0x8]
        %v788 = vsel %vm783, 0, %v787
        %789 = vst [vmem:[#allocation2 + $0x10] sm:$0x8] %v788
        %v790 = vld [vmem:[#allocation2 + $0x20] sm:$0x8]
        %v791 = vsel %vm783, 0, %v790
        %792 = vst [vmem:[#allocation2 + $0x20] sm:$0x8] %v791
        %v793 = vld [vmem:[#allocation2 + $0x30] sm:$0x8]
        %v794 = vsel %vm783, 0, %v793
        %795 = vst [vmem:[#allocation2 + $0x30] sm:$0x8] %v794
        %v796 = vld [vmem:[#allocation2 + $0x40] sm:$0x8]
        %v797 = vsel %vm783, 0, %v796
        %798 = vst [vmem:[#allocation2 + $0x40] sm:$0x8] %v797
        %v799 = vld [vmem:[#allocation2 + $0x50] sm:$0x8]
        %v800 = vsel %vm783, 0, %v799
        %801 = vst [vmem:[#allocation2 + $0x50] sm:$0x8] %v800
        %v802 = vld [vmem:[#allocation2 + $0x60] sm:$0x8]
        %v803 = vsel %vm783, 0, %v802
        %804 = vst [vmem:[#allocation2 + $0x60] sm:$0x8] %v803
        %v805 = vld [vmem:[#allocation2 + $0x70] sm:$0x8]
        %v806 = vsel %vm783, 0, %v805
        %807 = vst [vmem:[#allocation2 + $0x70] sm:$0x8] %v806
        %v808 = vld [vmem:[#allocation2 + $0x80] sm:$0x8]
        %v809 = vsel %vm783, 0, %v808
        %810 = vst [vmem:[#allocation2 + $0x80] sm:$0x8] %v809
        %v811 = vld [vmem:[#allocation2 + $0x90] sm:$0x8]
        %v812 = vsel %vm783, 0, %v811
        %813 = vst [vmem:[#allocation2 + $0x90] sm:$0x8] %v812
        %v814 = vld [vmem:[#allocation2 + $0xa0] sm:$0x8]
        %v815 = vsel %vm783, 0, %v814
        %816 = vst [vmem:[#allocation2 + $0xa0] sm:$0x8] %v815
        %v817 = vld [vmem:[#allocation2 + $0xb0] sm:$0x8]
        %v818 = vsel %vm783, 0, %v817
        %819 = vst [vmem:[#allocation2 + $0xb0] sm:$0x8] %v818
        %v820 = vld [vmem:[#allocation2 + $0xc0] sm:$0x8]
        %v821 = vsel %vm783, 0, %v820
        %822 = vst [vmem:[#allocation2 + $0xc0] sm:$0x8] %v821
        %v823 = vld [vmem:[#allocation2 + $0xd0] sm:$0x8]
        %v824 = vsel %vm783, 0, %v823
        %825 = vst [vmem:[#allocation2 + $0xd0] sm:$0x8] %v824
        %v826 = vld [vmem:[#allocation2 + $0xe0] sm:$0x8]
        %v827 = vsel %vm783, 0, %v826
        %828 = vst [vmem:[#allocation2 + $0xe0] sm:$0x8] %v827
        %v829 = vld [vmem:[#allocation2 + $0xf0] sm:$0x8]
        %v830 = vsel %vm783, 0, %v829
        %831 = vst [vmem:[#allocation2 + $0xf0] sm:$0x8] %v830
        %v832 = vld [vmem:[#allocation2 + $0x100] sm:$0x8]
        %v833 = vsel %vm783, 0, %v832
        %834 = vst [vmem:[#allocation2 + $0x100] sm:$0x8] %v833
        %v835 = vld [vmem:[#allocation2 + $0x110] sm:$0x8]
        %v836 = vsel %vm783, 0, %v835
        %837 = vst [vmem:[#allocation2 + $0x110] sm:$0x8] %v836
        %vm838 = vcmask 20484
        %vm839 = vsmask.f32 4352
        %vm840 = vmand %vm838, %vm839
        %v841 = vld [vmem:[#allocation2 + $0x8] sm:$0x10]
        %v842 = vsel %vm840, 0, %v841
        %843 = vst [vmem:[#allocation2 + $0x8] sm:$0x10] %v842
        %v844 = vld [vmem:[#allocation2 + $0x18] sm:$0x10]
        %v845 = vsel %vm840, 0, %v844
        %846 = vst [vmem:[#allocation2 + $0x18] sm:$0x10] %v845
        %v847 = vld [vmem:[#allocation2 + $0x28] sm:$0x10]
        %v848 = vsel %vm840, 0, %v847
        %849 = vst [vmem:[#allocation2 + $0x28] sm:$0x10] %v848
        %v850 = vld [vmem:[#allocation2 + $0x38] sm:$0x10]
        %v851 = vsel %vm840, 0, %v850
        %852 = vst [vmem:[#allocation2 + $0x38] sm:$0x10] %v851
        %v853 = vld [vmem:[#allocation2 + $0x48] sm:$0x10]
        %v854 = vsel %vm840, 0, %v853
        %855 = vst [vmem:[#allocation2 + $0x48] sm:$0x10] %v854
        %v856 = vld [vmem:[#allocation2 + $0x58] sm:$0x10]
        %v857 = vsel %vm840, 0, %v856
        %858 = vst [vmem:[#allocation2 + $0x58] sm:$0x10] %v857
        %v859 = vld [vmem:[#allocation2 + $0x68] sm:$0x10]
        %v860 = vsel %vm840, 0, %v859
        %861 = vst [vmem:[#allocation2 + $0x68] sm:$0x10] %v860
        %v862 = vld [vmem:[#allocation2 + $0x78] sm:$0x10]
        %v863 = vsel %vm840, 0, %v862
        %864 = vst [vmem:[#allocation2 + $0x78] sm:$0x10] %v863
        %v865 = vld [vmem:[#allocation2 + $0x88] sm:$0x10]
        %v866 = vsel %vm840, 0, %v865
        %867 = vst [vmem:[#allocation2 + $0x88] sm:$0x10] %v866
        %v868 = vld [vmem:[#allocation2 + $0x98] sm:$0x10]
        %v869 = vsel %vm840, 0, %v868
        %870 = vst [vmem:[#allocation2 + $0x98] sm:$0x10] %v869
        %v871 = vld [vmem:[#allocation2 + $0xa8] sm:$0x10]
        %v872 = vsel %vm840, 0, %v871
        %873 = vst [vmem:[#allocation2 + $0xa8] sm:$0x10] %v872
        %v874 = vld [vmem:[#allocation2 + $0xb8] sm:$0x10]
        %v875 = vsel %vm840, 0, %v874
        %876 = vst [vmem:[#allocation2 + $0xb8] sm:$0x10] %v875
        %v877 = vld [vmem:[#allocation2 + $0xc8] sm:$0x10]
        %v878 = vsel %vm840, 0, %v877
        %879 = vst [vmem:[#allocation2 + $0xc8] sm:$0x10] %v878
        %v880 = vld [vmem:[#allocation2 + $0xd8] sm:$0x10]
        %v881 = vsel %vm840, 0, %v880
        %882 = vst [vmem:[#allocation2 + $0xd8] sm:$0x10] %v881
        %v883 = vld [vmem:[#allocation2 + $0xe8] sm:$0x10]
        %v884 = vsel %vm840, 0, %v883
        %885 = vst [vmem:[#allocation2 + $0xe8] sm:$0x10] %v884
        %v886 = vld [vmem:[#allocation2 + $0xf8] sm:$0x10]
        %v887 = vsel %vm840, 0, %v886
        %888 = vst [vmem:[#allocation2 + $0xf8] sm:$0x10] %v887
        %v889 = vld [vmem:[#allocation2 + $0x108] sm:$0x10]
        %v890 = vsel %vm840, 0, %v889
        %891 = vst [vmem:[#allocation2 + $0x108] sm:$0x10] %v890
        %v892 = vld [vmem:[#allocation2 + $0x118] sm:$0x10]
        %v893 = vsel %vm840, 0, %v892
        %894 = vst [vmem:[#allocation2 + $0x118] sm:$0x10] %v893
        %v895 = vld [vmem:[#allocation2] sm:$0xf8]
        %v896 = vld [vmem:[#allocation2 + $0x8] sm:$0xf]
        %v897 = vld [vmem:[#allocation2 + $0x10] sm:$0xf8]
        %v898 = vld [vmem:[#allocation2 + $0x18] sm:$0xf]
        %v899 = vld [vmem:[#allocation2 + $0x20] sm:$0xf8]
        %v900 = vld [vmem:[#allocation2 + $0x28] sm:$0xf]
        %v901 = vld [vmem:[#allocation2 + $0x30] sm:$0xf8]
        %v902 = vld [vmem:[#allocation2 + $0x38] sm:$0xf]
        %v903 = vld [vmem:[#allocation2 + $0x40] sm:$0xf8]
        %v904 = vld [vmem:[#allocation2 + $0x48] sm:$0xf]
        %v905 = vld [vmem:[#allocation2 + $0x50] sm:$0xf8]
        %v906 = vld [vmem:[#allocation2 + $0x58] sm:$0xf]
        %v907 = vld [vmem:[#allocation2 + $0x60] sm:$0xf8]
        %v908 = vld [vmem:[#allocation2 + $0x68] sm:$0xf]
        %v909 = vld [vmem:[#allocation2 + $0x70] sm:$0xf8]
        %v910 = vld [vmem:[#allocation2 + $0x78] sm:$0xf]
        %v911 = vld [vmem:[#allocation2 + $0x80] sm:$0xf8]
        %v912 = vld [vmem:[#allocation2 + $0x88] sm:$0xf]
        %v913 = vld [vmem:[#allocation2 + $0x90] sm:$0xf8]
        %v914 = vld [vmem:[#allocation2 + $0x98] sm:$0xf]
        %v915 = vld [vmem:[#allocation2 + $0xa0] sm:$0xf8]
        %v916 = vld [vmem:[#allocation2 + $0xa8] sm:$0xf]
        %v917 = vld [vmem:[#allocation2 + $0xb0] sm:$0xf8]
        %v918 = vld [vmem:[#allocation2 + $0xb8] sm:$0xf]
        %v919 = vld [vmem:[#allocation2 + $0xc0] sm:$0xf8]
        %v920 = vld [vmem:[#allocation2 + $0xc8] sm:$0xf]
        %v921 = vld [vmem:[#allocation2 + $0xd0] sm:$0xf8]
        %v922 = vld [vmem:[#allocation2 + $0xd8] sm:$0xf]
        %v923 = vld [vmem:[#allocation2 + $0xe0] sm:$0xf8]
        %v924 = vld [vmem:[#allocation2 + $0xe8] sm:$0xf]
        %v925 = vld [vmem:[#allocation2 + $0xf0] sm:$0xf8]
        %v926 = vld [vmem:[#allocation2 + $0xf8] sm:$0xf]
        %v928 = vshrl.u32 %v895, 16
        %v930 = vrot.slane %v928, 3
        %v931 = vshll.u32 %v895, 16
        %v933 = vrot.slane %v931, 4
        %v934 = vor.u32 %v930, %v933
        %v936 = vshrl.u32 %v896, 16
        %v938 = vrot.slane %v936, 3
        %v939 = vshll.u32 %v896, 16
        %v941 = vrot.slane %v939, 4
        %v942 = vor.u32 %v938, %v941
        %v943 = vsel %vm839, %v934, %v942
        %v945 = vshrl.u32 %v897, 16
        %v947 = vrot.slane %v945, 3
        %v948 = vshll.u32 %v897, 16
        %v950 = vrot.slane %v948, 4
        %v951 = vor.u32 %v947, %v950
        %v953 = vshrl.u32 %v898, 16
        %v955 = vrot.slane %v953, 3
        %v956 = vshll.u32 %v898, 16
        %v958 = vrot.slane %v956, 4
        %v959 = vor.u32 %v955, %v958
        %v960 = vsel %vm839, %v951, %v959
        %v962 = vshrl.u32 %v899, 16
        %v964 = vrot.slane %v962, 3
        %v965 = vshll.u32 %v899, 16
        %v967 = vrot.slane %v965, 4
        %v968 = vor.u32 %v964, %v967
        %v970 = vshrl.u32 %v900, 16
        %v972 = vrot.slane %v970, 3
        %v973 = vshll.u32 %v900, 16
        %v975 = vrot.slane %v973, 4
        %v976 = vor.u32 %v972, %v975
        %v977 = vsel %vm839, %v968, %v976
        %v979 = vshrl.u32 %v901, 16
        %v981 = vrot.slane %v979, 3
        %v982 = vshll.u32 %v901, 16
        %v984 = vrot.slane %v982, 4
        %v985 = vor.u32 %v981, %v984
        %v987 = vshrl.u32 %v902, 16
        %v989 = vrot.slane %v987, 3
        %v990 = vshll.u32 %v902, 16
        %v992 = vrot.slane %v990, 4
        %v993 = vor.u32 %v989, %v992
        %v994 = vsel %vm839, %v985, %v993
        %v996 = vshrl.u32 %v903, 16
        %v998 = vrot.slane %v996, 3
        %v999 = vshll.u32 %v903, 16
        %v1001 = vrot.slane %v999, 4
        %v1002 = vor.u32 %v998, %v1001
        %v1004 = vshrl.u32 %v904, 16
        %v1006 = vrot.slane %v1004, 3
        %v1007 = vshll.u32 %v904, 16
        %v1009 = vrot.slane %v1007, 4
        %v1010 = vor.u32 %v1006, %v1009
        %v1011 = vsel %vm839, %v1002, %v1010
        %v1013 = vshrl.u32 %v905, 16
        %v1015 = vrot.slane %v1013, 3
        %v1016 = vshll.u32 %v905, 16
        %v1018 = vrot.slane %v1016, 4
        %v1019 = vor.u32 %v1015, %v1018
        %v1021 = vshrl.u32 %v906, 16
        %v1023 = vrot.slane %v1021, 3
        %v1024 = vshll.u32 %v906, 16
        %v1026 = vrot.slane %v1024, 4
        %v1027 = vor.u32 %v1023, %v1026
        %v1028 = vsel %vm839, %v1019, %v1027
        %v1030 = vshrl.u32 %v907, 16
        %v1032 = vrot.slane %v1030, 3
        %v1033 = vshll.u32 %v907, 16
        %v1035 = vrot.slane %v1033, 4
        %v1036 = vor.u32 %v1032, %v1035
        %v1038 = vshrl.u32 %v908, 16
        %v1040 = vrot.slane %v1038, 3
        %v1041 = vshll.u32 %v908, 16
        %v1043 = vrot.slane %v1041, 4
        %v1044 = vor.u32 %v1040, %v1043
        %v1045 = vsel %vm839, %v1036, %v1044
        %v1047 = vshrl.u32 %v909, 16
        %v1049 = vrot.slane %v1047, 3
        %v1050 = vshll.u32 %v909, 16
        %v1052 = vrot.slane %v1050, 4
        %v1053 = vor.u32 %v1049, %v1052
        %v1055 = vshrl.u32 %v910, 16
        %v1057 = vrot.slane %v1055, 3
        %v1058 = vshll.u32 %v910, 16
        %v1060 = vrot.slane %v1058, 4
        %v1061 = vor.u32 %v1057, %v1060
        %v1062 = vsel %vm839, %v1053, %v1061
        %v1064 = vshrl.u32 %v911, 16
        %v1066 = vrot.slane %v1064, 3
        %v1067 = vshll.u32 %v911, 16
        %v1069 = vrot.slane %v1067, 4
        %v1070 = vor.u32 %v1066, %v1069
        %v1072 = vshrl.u32 %v912, 16
        %v1074 = vrot.slane %v1072, 3
        %v1075 = vshll.u32 %v912, 16
        %v1077 = vrot.slane %v1075, 4
        %v1078 = vor.u32 %v1074, %v1077
        %v1079 = vsel %vm839, %v1070, %v1078
        %v1081 = vshrl.u32 %v913, 16
        %v1083 = vrot.slane %v1081, 3
        %v1084 = vshll.u32 %v913, 16
        %v1086 = vrot.slane %v1084, 4
        %v1087 = vor.u32 %v1083, %v1086
        %v1089 = vshrl.u32 %v914, 16
        %v1091 = vrot.slane %v1089, 3
        %v1092 = vshll.u32 %v914, 16
        %v1094 = vrot.slane %v1092, 4
        %v1095 = vor.u32 %v1091, %v1094
        %v1096 = vsel %vm839, %v1087, %v1095
        %v1098 = vshrl.u32 %v915, 16
        %v1100 = vrot.slane %v1098, 3
        %v1101 = vshll.u32 %v915, 16
        %v1103 = vrot.slane %v1101, 4
        %v1104 = vor.u32 %v1100, %v1103
        %v1106 = vshrl.u32 %v916, 16
        %v1108 = vrot.slane %v1106, 3
        %v1109 = vshll.u32 %v916, 16
        %v1111 = vrot.slane %v1109, 4
        %v1112 = vor.u32 %v1108, %v1111
        %v1113 = vsel %vm839, %v1104, %v1112
        %v1115 = vshrl.u32 %v917, 16
        %v1117 = vrot.slane %v1115, 3
        %v1118 = vshll.u32 %v917, 16
        %v1120 = vrot.slane %v1118, 4
        %v1121 = vor.u32 %v1117, %v1120
        %v1123 = vshrl.u32 %v918, 16
        %v1125 = vrot.slane %v1123, 3
        %v1126 = vshll.u32 %v918, 16
        %v1128 = vrot.slane %v1126, 4
        %v1129 = vor.u32 %v1125, %v1128
        %v1130 = vsel %vm839, %v1121, %v1129
        %v1132 = vshrl.u32 %v919, 16
        %v1134 = vrot.slane %v1132, 3
        %v1135 = vshll.u32 %v919, 16
        %v1137 = vrot.slane %v1135, 4
        %v1138 = vor.u32 %v1134, %v1137
        %v1140 = vshrl.u32 %v920, 16
        %v1142 = vrot.slane %v1140, 3
        %v1143 = vshll.u32 %v920, 16
        %v1145 = vrot.slane %v1143, 4
        %v1146 = vor.u32 %v1142, %v1145
        %v1147 = vsel %vm839, %v1138, %v1146
        %v1149 = vshrl.u32 %v921, 16
        %v1151 = vrot.slane %v1149, 3
        %v1152 = vshll.u32 %v921, 16
        %v1154 = vrot.slane %v1152, 4
        %v1155 = vor.u32 %v1151, %v1154
        %v1157 = vshrl.u32 %v922, 16
        %v1159 = vrot.slane %v1157, 3
        %v1160 = vshll.u32 %v922, 16
        %v1162 = vrot.slane %v1160, 4
        %v1163 = vor.u32 %v1159, %v1162
        %v1164 = vsel %vm839, %v1155, %v1163
        %v1166 = vshrl.u32 %v923, 16
        %v1168 = vrot.slane %v1166, 3
        %v1169 = vshll.u32 %v923, 16
        %v1171 = vrot.slane %v1169, 4
        %v1172 = vor.u32 %v1168, %v1171
        %v1174 = vshrl.u32 %v924, 16
        %v1176 = vrot.slane %v1174, 3
        %v1177 = vshll.u32 %v924, 16
        %v1179 = vrot.slane %v1177, 4
        %v1180 = vor.u32 %v1176, %v1179
        %v1181 = vsel %vm839, %v1172, %v1180
        %v1183 = vshrl.u32 %v925, 16
        %v1185 = vrot.slane %v1183, 3
        %v1186 = vshll.u32 %v925, 16
        %v1188 = vrot.slane %v1186, 4
        %v1189 = vor.u32 %v1185, %v1188
        %v1191 = vshrl.u32 %v926, 16
        %v1193 = vrot.slane %v1191, 3
        %v1194 = vshll.u32 %v926, 16
        %v1196 = vrot.slane %v1194, 4
        %v1197 = vor.u32 %v1193, %v1196
        %v1198 = vsel %vm839, %v1189, %v1197
        %v1199 = vld [vmem:[#allocation12] sm:$0x3]
        %v1200 = vld [vmem:[#allocation2] sm:$0xf0]
        %v1201 = vld [vmem:[#allocation2 + $0x10] sm:$0xf0]
        %v1202 = vld [vmem:[#allocation2 + $0x20] sm:$0xf0]
        %v1203 = vld [vmem:[#allocation2 + $0x30] sm:$0xf0]
        %v1204 = vld [vmem:[#allocation2 + $0x40] sm:$0xf0]
        %v1205 = vld [vmem:[#allocation2 + $0x50] sm:$0xf0]
        %v1206 = vld [vmem:[#allocation2 + $0x60] sm:$0xf0]
        %v1207 = vld [vmem:[#allocation2 + $0x70] sm:$0xf0]
        %v1208 = vld [vmem:[#allocation2 + $0x80] sm:$0xf0]
        %v1209 = vld [vmem:[#allocation2 + $0x90] sm:$0xf0]
        %v1210 = vld [vmem:[#allocation2 + $0xa0] sm:$0xf0]
        %v1211 = vld [vmem:[#allocation2 + $0xb0] sm:$0xf0]
        %v1212 = vld [vmem:[#allocation2 + $0xc0] sm:$0xf0]
        %v1213 = vld [vmem:[#allocation2 + $0xd0] sm:$0xf0]
        %v1214 = vld [vmem:[#allocation2 + $0xe0] sm:$0xf0]
        %v1215 = vld [vmem:[#allocation2 + $0xf0] sm:$0xf0]
        %vm1248 = vcmask 1043456
        %v1249 = vrot.slane %v1200, 4
        %v1250 = vrot.slane %v896, 4
        %v1251 = vsel %vm1248, %v1249, %v1250
        %v1252 = vrot.slane %v1201, 4
        %v1253 = vrot.slane %v898, 4
        %v1254 = vsel %vm1248, %v1252, %v1253
        %v1255 = vrot.slane %v1202, 4
        %v1256 = vrot.slane %v900, 4
        %v1257 = vsel %vm1248, %v1255, %v1256
        %v1258 = vrot.slane %v1203, 4
        %v1259 = vrot.slane %v902, 4
        %v1260 = vsel %vm1248, %v1258, %v1259
        %v1261 = vrot.slane %v1204, 4
        %v1262 = vrot.slane %v904, 4
        %v1263 = vsel %vm1248, %v1261, %v1262
        %v1264 = vrot.slane %v1205, 4
        %v1265 = vrot.slane %v906, 4
        %v1266 = vsel %vm1248, %v1264, %v1265
        %v1267 = vrot.slane %v1206, 4
        %v1268 = vrot.slane %v908, 4
        %v1269 = vsel %vm1248, %v1267, %v1268
        %v1270 = vrot.slane %v1207, 4
        %v1271 = vrot.slane %v910, 4
        %v1272 = vsel %vm1248, %v1270, %v1271
        %v1273 = vrot.slane %v1208, 4
        %v1274 = vrot.slane %v912, 4
        %v1275 = vsel %vm1248, %v1273, %v1274
        %v1276 = vrot.slane %v1209, 4
        %v1277 = vrot.slane %v914, 4
        %v1278 = vsel %vm1248, %v1276, %v1277
        %v1279 = vrot.slane %v1210, 4
        %v1280 = vrot.slane %v916, 4
        %v1281 = vsel %vm1248, %v1279, %v1280
        %v1282 = vrot.slane %v1211, 4
        %v1283 = vrot.slane %v918, 4
        %v1284 = vsel %vm1248, %v1282, %v1283
        %v1285 = vrot.slane %v1212, 4
        %v1286 = vrot.slane %v920, 4
        %v1287 = vsel %vm1248, %v1285, %v1286
        %v1288 = vrot.slane %v1213, 4
        %v1289 = vrot.slane %v922, 4
        %v1290 = vsel %vm1248, %v1288, %v1289
        %v1291 = vrot.slane %v1214, 4
        %v1292 = vrot.slane %v924, 4
        %v1293 = vsel %vm1248, %v1291, %v1292
        %v1294 = vrot.slane %v1215, 4
        %v1295 = vrot.slane %v926, 4
        %v1296 = vsel %vm1248, %v1294, %v1295
        %s1297 = scalar_lea.vmem [#allocation12], 2
        %v1298 = vld [vmem:[%s1297] sm:$0x3]
        %vm1299 = vcmask 23552
        %v1301 = vsel %vm1299, %v1251, 0
        %v1304 = vsel %vm1299, %v1254, 0
        %v1307 = vsel %vm1299, %v1257, 0
        %v1310 = vsel %vm1299, %v1260, 0
        %v1313 = vsel %vm1299, %v1263, 0
        %v1316 = vsel %vm1299, %v1266, 0
        %v1319 = vsel %vm1299, %v1269, 0
        %v1322 = vsel %vm1299, %v1272, 0
        %v1325 = vsel %vm1299, %v1275, 0
        %v1328 = vsel %vm1299, %v1278, 0
        %v1331 = vsel %vm1299, %v1281, 0
        %v1334 = vsel %vm1299, %v1284, 0
        %v1337 = vsel %vm1299, %v1287, 0
        %v1340 = vsel %vm1299, %v1290, 0
        %v1343 = vsel %vm1299, %v1293, 0
        %v1346 = vsel %vm1299, %v1296, 0
        %vm1348 = vcmask 1040384
        %vm1349 = vcmask 1041408
        %v1350 = vsel %vm1348, 4294967295, 65535
        %v1351 = vsel %vm1349, %v1350, 0
        %v1353 = vand.u32 %v1298, %v1351
        %1355 = vmatprep.subr.bf16.mxu0 0
        %1356 = vmatpush1.bf16.msra.mxu0 %v1353
        %1357 = vmatprep.subr.bf16.mxu0 0
        %1358 = vmatpush1.bf16.msra.mxu0 0
        %1359 = vmatprep.subr.bf16.mxu0 0
        %1360 = vmatpush1.bf16.msra.mxu0 0
        %1361 = vmatprep.subr.bf16.mxu0 0
        %1362 = vmatpush1.bf16.msra.mxu0 0
        %1363 = vmatprep.subr.bf16.mxu0 0
        %1364 = vmatpush1.bf16.msra.mxu0 0
        %1365 = vmatprep.subr.bf16.mxu0 0
        %1366 = vmatpush1.bf16.msra.mxu0 0
        %1367 = vmatprep.subr.bf16.mxu0 0
        %1368 = vmatpush1.bf16.msra.mxu0 0
        %1369 = vmatprep.subr.bf16.mxu0 0
        %1370 = vmatpush1.bf16.msra.mxu0 0
        %1371 = vmatprep.subr.bf16.mxu0 0
        %1372 = vmatpush1.bf16.msra.mxu0 0
        %1373 = vmatprep.subr.bf16.mxu0 0
        %1374 = vmatpush1.bf16.msra.mxu0 0
        %1375 = vmatprep.subr.bf16.mxu0 0
        %1376 = vmatpush1.bf16.msra.mxu0 0
        %1377 = vmatprep.subr.bf16.mxu0 0
        %1378 = vmatpush1.bf16.msra.mxu0 0
        %1379 = vmatprep.subr.bf16.mxu0 0
        %1380 = vmatpush1.bf16.msra.mxu0 0
        %1381 = vmatprep.subr.bf16.mxu0 0
        %1382 = vmatpush1.bf16.msra.mxu0 0
        %1383 = vmatprep.subr.bf16.mxu0 0
        %1384 = vmatpush1.bf16.msra.mxu0 0
        %1385 = vmatprep.subr.bf16.mxu0 0
        %1386 = vmatpush1.bf16.msra.mxu0 0
        %1387 = vmatprep.mubr.bf16.mxu0 0
        %1388 = vmatmul.mubr.bf16.gmra.mrb[0].mxu0 %v1301
        %v1389 = vpop.f32.mrb[0].mxu0
        %v1390 = vadd.f32 0.0, %v1389
        %v1391 = vpop.f32.mrb[0].mxu0
        %v1392 = vpop.f32.mrb[0].mxu0
        %v1393 = vadd.f32 0.0, %v1392
        %v1394 = vpop.f32.mrb[0].mxu0
        %1395 = vmatprep.mubr.bf16.mxu0 0
        %1396 = vmatmul.mubr.bf16.gmra.mrb[0].mxu0 %v1304
        %v1397 = vpop.f32.mrb[0].mxu0
        %v1398 = vadd.f32 0.0, %v1397
        %v1399 = vpop.f32.mrb[0].mxu0
        %v1400 = vpop.f32.mrb[0].mxu0
        %v1401 = vadd.f32 0.0, %v1400
        %v1402 = vpop.f32.mrb[0].mxu0
        %1403 = vmatprep.mubr.bf16.mxu0 0
        %1404 = vmatmul.mubr.bf16.gmra.mrb[0].mxu0 %v1307
        %v1405 = vpop.f32.mrb[0].mxu0
        %v1406 = vadd.f32 0.0, %v1405
        %v1407 = vpop.f32.mrb[0].mxu0
        %v1408 = vpop.f32.mrb[0].mxu0
        %v1409 = vadd.f32 0.0, %v1408
        %v1410 = vpop.f32.mrb[0].mxu0
        %1411 = vmatprep.mubr.bf16.mxu0 0
        %1412 = vmatmul.mubr.bf16.gmra.mrb[0].mxu0 %v1310
        %v1413 = vpop.f32.mrb[0].mxu0
        %v1414 = vadd.f32 0.0, %v1413
        %v1415 = vpop.f32.mrb[0].mxu0
        %v1416 = vpop.f32.mrb[0].mxu0
        %v1417 = vadd.f32 0.0, %v1416
        %v1418 = vpop.f32.mrb[0].mxu0
        %1419 = vmatprep.mubr.bf16.mxu0 0
        %1420 = vmatmul.mubr.bf16.gmra.mrb[0].mxu0 %v1313
        %v1421 = vpop.f32.mrb[0].mxu0
        %v1422 = vadd.f32 0.0, %v1421
        %v1423 = vpop.f32.mrb[0].mxu0
        %v1424 = vpop.f32.mrb[0].mxu0
        %v1425 = vadd.f32 0.0, %v1424
        %v1426 = vpop.f32.mrb[0].mxu0
        %1427 = vmatprep.mubr.bf16.mxu0 0
        %1428 = vmatmul.mubr.bf16.gmra.mrb[0].mxu0 %v1316
        %v1429 = vpop.f32.mrb[0].mxu0
        %v1430 = vadd.f32 0.0, %v1429
        %v1431 = vpop.f32.mrb[0].mxu0
        %v1432 = vpop.f32.mrb[0].mxu0
        %v1433 = vadd.f32 0.0, %v1432
        %v1434 = vpop.f32.mrb[0].mxu0
        %1435 = vmatprep.mubr.bf16.mxu0 0
        %1436 = vmatmul.mubr.bf16.gmra.mrb[0].mxu0 %v1319
        %v1437 = vpop.f32.mrb[0].mxu0
        %v1438 = vadd.f32 0.0, %v1437
        %v1439 = vpop.f32.mrb[0].mxu0
        %v1440 = vpop.f32.mrb[0].mxu0
        %v1441 = vadd.f32 0.0, %v1440
        %v1442 = vpop.f32.mrb[0].mxu0
        %1443 = vmatprep.mubr.bf16.mxu0 0
        %1444 = vmatmul.mubr.bf16.gmra.mrb[0].mxu0 %v1322
        %v1445 = vpop.f32.mrb[0].mxu0
        %v1446 = vadd.f32 0.0, %v1445
        %v1447 = vpop.f32.mrb[0].mxu0
        %v1448 = vpop.f32.mrb[0].mxu0
        %v1449 = vadd.f32 0.0, %v1448
        %v1450 = vpop.f32.mrb[0].mxu0
        %1451 = vmatprep.mubr.bf16.mxu0 0
        %1452 = vmatmul.mubr.bf16.gmra.mrb[0].mxu0 %v1325
        %v1453 = vpop.f32.mrb[0].mxu0
        %v1454 = vadd.f32 0.0, %v1453
        %v1455 = vpop.f32.mrb[0].mxu0
        %v1456 = vpop.f32.mrb[0].mxu0
        %v1457 = vadd.f32 0.0, %v1456
        %v1458 = vpop.f32.mrb[0].mxu0
        %1459 = vmatprep.mubr.bf16.mxu0 0
        %1460 = vmatmul.mubr.bf16.gmra.mrb[0].mxu0 %v1328
        %v1461 = vpop.f32.mrb[0].mxu0
        %v1462 = vadd.f32 0.0, %v1461
        %v1463 = vpop.f32.mrb[0].mxu0
        %v1464 = vpop.f32.mrb[0].mxu0
        %v1465 = vadd.f32 0.0, %v1464
        %v1466 = vpop.f32.mrb[0].mxu0
        %1467 = vmatprep.mubr.bf16.mxu0 0
        %1468 = vmatmul.mubr.bf16.gmra.mrb[0].mxu0 %v1331
        %v1469 = vpop.f32.mrb[0].mxu0
        %v1470 = vadd.f32 0.0, %v1469
        %v1471 = vpop.f32.mrb[0].mxu0
        %v1472 = vpop.f32.mrb[0].mxu0
        %v1473 = vadd.f32 0.0, %v1472
        %v1474 = vpop.f32.mrb[0].mxu0
        %1475 = vmatprep.mubr.bf16.mxu0 0
        %1476 = vmatmul.mubr.bf16.gmra.mrb[0].mxu0 %v1334
        %v1477 = vpop.f32.mrb[0].mxu0
        %v1478 = vadd.f32 0.0, %v1477
        %v1479 = vpop.f32.mrb[0].mxu0
        %v1480 = vpop.f32.mrb[0].mxu0
        %v1481 = vadd.f32 0.0, %v1480
        %v1482 = vpop.f32.mrb[0].mxu0
        %1483 = vmatprep.mubr.bf16.mxu0 0
        %1484 = vmatmul.mubr.bf16.gmra.mrb[0].mxu0 %v1337
        %v1485 = vpop.f32.mrb[0].mxu0
        %v1486 = vadd.f32 0.0, %v1485
        %v1487 = vpop.f32.mrb[0].mxu0
        %v1488 = vpop.f32.mrb[0].mxu0
        %v1489 = vadd.f32 0.0, %v1488
        %v1490 = vpop.f32.mrb[0].mxu0
        %1491 = vmatprep.mubr.bf16.mxu0 0
        %1492 = vmatmul.mubr.bf16.gmra.mrb[0].mxu0 %v1340
        %v1493 = vpop.f32.mrb[0].mxu0
        %v1494 = vadd.f32 0.0, %v1493
        %v1495 = vpop.f32.mrb[0].mxu0
        %v1496 = vpop.f32.mrb[0].mxu0
        %v1497 = vadd.f32 0.0, %v1496
        %v1498 = vpop.f32.mrb[0].mxu0
        %1499 = vmatprep.mubr.bf16.mxu0 0
        %1500 = vmatmul.mubr.bf16.gmra.mrb[0].mxu0 %v1343
        %v1501 = vpop.f32.mrb[0].mxu0
        %v1502 = vadd.f32 0.0, %v1501
        %v1503 = vpop.f32.mrb[0].mxu0
        %v1504 = vpop.f32.mrb[0].mxu0
        %v1505 = vadd.f32 0.0, %v1504
        %v1506 = vpop.f32.mrb[0].mxu0
        %1507 = vmatprep.mubr.bf16.mxu0 0
        %1508 = vmatmul.mubr.bf16.gmra.mrb[0].mxu0 %v1346
        %v1509 = vpop.f32.mrb[0].mxu0
        %v1510 = vadd.f32 0.0, %v1509
        %v1511 = vpop.f32.mrb[0].mxu0
        %v1512 = vpop.f32.mrb[0].mxu0
        %v1513 = vadd.f32 0.0, %v1512
        %v1514 = vpop.f32.mrb[0].mxu0
        %1515 = vdwg.mxu0
        %v1517 = vsel %vm1299, %v943, 0
        %v1520 = vsel %vm1299, %v960, 0
        %v1523 = vsel %vm1299, %v977, 0
        %v1526 = vsel %vm1299, %v994, 0
        %v1529 = vsel %vm1299, %v1011, 0
        %v1532 = vsel %vm1299, %v1028, 0
        %v1535 = vsel %vm1299, %v1045, 0
        %v1538 = vsel %vm1299, %v1062, 0
        %v1541 = vsel %vm1299, %v1079, 0
        %v1544 = vsel %vm1299, %v1096, 0
        %v1547 = vsel %vm1299, %v1113, 0
        %v1550 = vsel %vm1299, %v1130, 0
        %v1553 = vsel %vm1299, %v1147, 0
        %v1556 = vsel %vm1299, %v1164, 0
        %v1559 = vsel %vm1299, %v1181, 0
        %v1562 = vsel %vm1299, %v1198, 0
        %v1565 = vand.u32 %v1199, %v1351
        %1567 = vmatprep.subr.bf16.mxu0 0
        %1568 = vmatpush1.bf16.msra.mxu0 %v1565
        %1569 = vmatprep.subr.bf16.mxu0 0
        %1570 = vmatpush1.bf16.msra.mxu0 0
        %1571 = vmatprep.subr.bf16.mxu0 0
        %1572 = vmatpush1.bf16.msra.mxu0 0
        %1573 = vmatprep.subr.bf16.mxu0 0
        %1574 = vmatpush1.bf16.msra.mxu0 0
        %1575 = vmatprep.subr.bf16.mxu0 0
        %1576 = vmatpush1.bf16.msra.mxu0 0
        %1577 = vmatprep.subr.bf16.mxu0 0
        %1578 = vmatpush1.bf16.msra.mxu0 0
        %1579 = vmatprep.subr.bf16.mxu0 0
        %1580 = vmatpush1.bf16.msra.mxu0 0
        %1581 = vmatprep.subr.bf16.mxu0 0
        %1582 = vmatpush1.bf16.msra.mxu0 0
        %1583 = vmatprep.subr.bf16.mxu0 0
        %1584 = vmatpush1.bf16.msra.mxu0 0
        %1585 = vmatprep.subr.bf16.mxu0 0
        %1586 = vmatpush1.bf16.msra.mxu0 0
        %1587 = vmatprep.subr.bf16.mxu0 0
        %1588 = vmatpush1.bf16.msra.mxu0 0
        %1589 = vmatprep.subr.bf16.mxu0 0
        %1590 = vmatpush1.bf16.msra.mxu0 0
        %1591 = vmatprep.subr.bf16.mxu0 0
        %1592 = vmatpush1.bf16.msra.mxu0 0
        %1593 = vmatprep.subr.bf16.mxu0 0
        %1594 = vmatpush1.bf16.msra.mxu0 0
        %1595 = vmatprep.subr.bf16.mxu0 0
        %1596 = vmatpush1.bf16.msra.mxu0 0
        %1597 = vmatprep.subr.bf16.mxu0 0
        %1598 = vmatpush1.bf16.msra.mxu0 0
        %1599 = vmatprep.mubr.bf16.mxu0 0
        %1600 = vmatmul.mubr.bf16.gmra.mrb[0].mxu0 %v1517
        %v1601 = vpop.f32.mrb[0].mxu0
        %v1602 = vadd.f32 %v1390, %v1601
        %v1603 = vpop.f32.mrb[0].mxu0
        %v1604 = vpop.f32.mrb[0].mxu0
        %v1605 = vadd.f32 %v1393, %v1604
        %v1606 = vpop.f32.mrb[0].mxu0
        %1607 = vmatprep.mubr.bf16.mxu0 0
        %1608 = vmatmul.mubr.bf16.gmra.mrb[0].mxu0 %v1520
        %v1609 = vpop.f32.mrb[0].mxu0
        %v1610 = vadd.f32 %v1398, %v1609
        %v1611 = vpop.f32.mrb[0].mxu0
        %v1612 = vpop.f32.mrb[0].mxu0
        %v1613 = vadd.f32 %v1401, %v1612
        %v1614 = vpop.f32.mrb[0].mxu0
        %1615 = vmatprep.mubr.bf16.mxu0 0
        %1616 = vmatmul.mubr.bf16.gmra.mrb[0].mxu0 %v1523
        %v1617 = vpop.f32.mrb[0].mxu0
        %v1618 = vadd.f32 %v1406, %v1617
        %v1619 = vpop.f32.mrb[0].mxu0
        %v1620 = vpop.f32.mrb[0].mxu0
        %v1621 = vadd.f32 %v1409, %v1620
        %v1622 = vpop.f32.mrb[0].mxu0
        %1623 = vmatprep.mubr.bf16.mxu0 0
        %1624 = vmatmul.mubr.bf16.gmra.mrb[0].mxu0 %v1526
        %v1625 = vpop.f32.mrb[0].mxu0
        %v1626 = vadd.f32 %v1414, %v1625
        %v1627 = vpop.f32.mrb[0].mxu0
        %v1628 = vpop.f32.mrb[0].mxu0
        %v1629 = vadd.f32 %v1417, %v1628
        %v1630 = vpop.f32.mrb[0].mxu0
        %1631 = vmatprep.mubr.bf16.mxu0 0
        %1632 = vmatmul.mubr.bf16.gmra.mrb[0].mxu0 %v1529
        %v1633 = vpop.f32.mrb[0].mxu0
        %v1634 = vadd.f32 %v1422, %v1633
        %v1635 = vpop.f32.mrb[0].mxu0
        %v1636 = vpop.f32.mrb[0].mxu0
        %v1637 = vadd.f32 %v1425, %v1636
        %v1638 = vpop.f32.mrb[0].mxu0
        %1639 = vmatprep.mubr.bf16.mxu0 0
        %1640 = vmatmul.mubr.bf16.gmra.mrb[0].mxu0 %v1532
        %v1641 = vpop.f32.mrb[0].mxu0
        %v1642 = vadd.f32 %v1430, %v1641
        %v1643 = vpop.f32.mrb[0].mxu0
        %v1644 = vpop.f32.mrb[0].mxu0
        %v1645 = vadd.f32 %v1433, %v1644
        %v1646 = vpop.f32.mrb[0].mxu0
        %1647 = vmatprep.mubr.bf16.mxu0 0
        %1648 = vmatmul.mubr.bf16.gmra.mrb[0].mxu0 %v1535
        %v1649 = vpop.f32.mrb[0].mxu0
        %v1650 = vadd.f32 %v1438, %v1649
        %v1651 = vpop.f32.mrb[0].mxu0
        %v1652 = vpop.f32.mrb[0].mxu0
        %v1653 = vadd.f32 %v1441, %v1652
        %v1654 = vpop.f32.mrb[0].mxu0
        %1655 = vmatprep.mubr.bf16.mxu0 0
        %1656 = vmatmul.mubr.bf16.gmra.mrb[0].mxu0 %v1538
        %v1657 = vpop.f32.mrb[0].mxu0
        %v1658 = vadd.f32 %v1446, %v1657
        %v1659 = vpop.f32.mrb[0].mxu0
        %v1660 = vpop.f32.mrb[0].mxu0
        %v1661 = vadd.f32 %v1449, %v1660
        %v1662 = vpop.f32.mrb[0].mxu0
        %1663 = vmatprep.mubr.bf16.mxu0 0
        %1664 = vmatmul.mubr.bf16.gmra.mrb[0].mxu0 %v1541
        %v1665 = vpop.f32.mrb[0].mxu0
        %v1666 = vadd.f32 %v1454, %v1665
        %v1667 = vpop.f32.mrb[0].mxu0
        %v1668 = vpop.f32.mrb[0].mxu0
        %v1669 = vadd.f32 %v1457, %v1668
        %v1670 = vpop.f32.mrb[0].mxu0
        %1671 = vmatprep.mubr.bf16.mxu0 0
        %1672 = vmatmul.mubr.bf16.gmra.mrb[0].mxu0 %v1544
        %v1673 = vpop.f32.mrb[0].mxu0
        %v1674 = vadd.f32 %v1462, %v1673
        %v1675 = vpop.f32.mrb[0].mxu0
        %v1676 = vpop.f32.mrb[0].mxu0
        %v1677 = vadd.f32 %v1465, %v1676
        %v1678 = vpop.f32.mrb[0].mxu0
        %1679 = vmatprep.mubr.bf16.mxu0 0
        %1680 = vmatmul.mubr.bf16.gmra.mrb[0].mxu0 %v1547
        %v1681 = vpop.f32.mrb[0].mxu0
        %v1682 = vadd.f32 %v1470, %v1681
        %v1683 = vpop.f32.mrb[0].mxu0
        %v1684 = vpop.f32.mrb[0].mxu0
        %v1685 = vadd.f32 %v1473, %v1684
        %v1686 = vpop.f32.mrb[0].mxu0
        %1687 = vmatprep.mubr.bf16.mxu0 0
        %1688 = vmatmul.mubr.bf16.gmra.mrb[0].mxu0 %v1550
        %v1689 = vpop.f32.mrb[0].mxu0
        %v1690 = vadd.f32 %v1478, %v1689
        %v1691 = vpop.f32.mrb[0].mxu0
        %v1692 = vpop.f32.mrb[0].mxu0
        %v1693 = vadd.f32 %v1481, %v1692
        %v1694 = vpop.f32.mrb[0].mxu0
        %1695 = vmatprep.mubr.bf16.mxu0 0
        %1696 = vmatmul.mubr.bf16.gmra.mrb[0].mxu0 %v1553
        %v1697 = vpop.f32.mrb[0].mxu0
        %v1698 = vadd.f32 %v1486, %v1697
        %v1699 = vpop.f32.mrb[0].mxu0
        %v1700 = vpop.f32.mrb[0].mxu0
        %v1701 = vadd.f32 %v1489, %v1700
        %v1702 = vpop.f32.mrb[0].mxu0
        %1703 = vmatprep.mubr.bf16.mxu0 0
        %1704 = vmatmul.mubr.bf16.gmra.mrb[0].mxu0 %v1556
        %v1705 = vpop.f32.mrb[0].mxu0
        %v1706 = vadd.f32 %v1494, %v1705
        %v1707 = vpop.f32.mrb[0].mxu0
        %v1708 = vpop.f32.mrb[0].mxu0
        %v1709 = vadd.f32 %v1497, %v1708
        %v1710 = vpop.f32.mrb[0].mxu0
        %1711 = vmatprep.mubr.bf16.mxu0 0
        %1712 = vmatmul.mubr.bf16.gmra.mrb[0].mxu0 %v1559
        %v1713 = vpop.f32.mrb[0].mxu0
        %v1714 = vadd.f32 %v1502, %v1713
        %v1715 = vpop.f32.mrb[0].mxu0
        %v1716 = vpop.f32.mrb[0].mxu0
        %v1717 = vadd.f32 %v1505, %v1716
        %v1718 = vpop.f32.mrb[0].mxu0
        %1719 = vmatprep.mubr.bf16.mxu0 0
        %1720 = vmatmul.mubr.bf16.gmra.mrb[0].mxu0 %v1562
        %v1721 = vpop.f32.mrb[0].mxu0
        %v1722 = vadd.f32 %v1510, %v1721
        %v1723 = vpop.f32.mrb[0].mxu0
        %v1724 = vpop.f32.mrb[0].mxu0
        %v1725 = vadd.f32 %v1513, %v1724
        %v1726 = vpop.f32.mrb[0].mxu0
        %1727 = vdwg.mxu0
        %v1728 = vld [vmem:[#allocation2 + $0x8] sm:$0x1f]
        %v1729 = vld [vmem:[#allocation2 + $0x18] sm:$0x1f]
        %v1730 = vld [vmem:[#allocation2 + $0x28] sm:$0x1f]
        %v1731 = vld [vmem:[#allocation2 + $0x38] sm:$0x1f]
        %v1732 = vld [vmem:[#allocation2 + $0x48] sm:$0x1f]
        %v1733 = vld [vmem:[#allocation2 + $0x58] sm:$0x1f]
        %v1734 = vld [vmem:[#allocation2 + $0x68] sm:$0x1f]
        %v1735 = vld [vmem:[#allocation2 + $0x78] sm:$0x1f]
        %v1736 = vld [vmem:[#allocation2 + $0x88] sm:$0x1f]
        %v1737 = vld [vmem:[#allocation2 + $0x98] sm:$0x1f]
        %v1738 = vld [vmem:[#allocation2 + $0xa8] sm:$0x1f]
        %v1739 = vld [vmem:[#allocation2 + $0xb8] sm:$0x1f]
        %v1740 = vld [vmem:[#allocation2 + $0xc8] sm:$0x1f]
        %v1741 = vld [vmem:[#allocation2 + $0xd8] sm:$0x1f]
        %v1742 = vld [vmem:[#allocation2 + $0xe8] sm:$0x1f]
        %v1743 = vld [vmem:[#allocation2 + $0xf8] sm:$0x1f]
        %vm1744 = vsmask.f32 3328
        %v1746 = vshrl.u32 %v1200, 16
        %v1748 = vrot.slane %v1746, 4
        %v1749 = vshll.u32 %v1200, 16
        %v1751 = vrot.slane %v1749, 5
        %v1752 = vor.u32 %v1748, %v1751
        %v1754 = vshrl.u32 %v1728, 16
        %v1756 = vrot.slane %v1754, 4
        %v1757 = vshll.u32 %v1728, 16
        %v1759 = vrot.slane %v1757, 5
        %v1760 = vor.u32 %v1756, %v1759
        %v1761 = vsel %vm1744, %v1752, %v1760
        %v1763 = vshrl.u32 %v1201, 16
        %v1765 = vrot.slane %v1763, 4
        %v1766 = vshll.u32 %v1201, 16
        %v1768 = vrot.slane %v1766, 5
        %v1769 = vor.u32 %v1765, %v1768
        %v1771 = vshrl.u32 %v1729, 16
        %v1773 = vrot.slane %v1771, 4
        %v1774 = vshll.u32 %v1729, 16
        %v1776 = vrot.slane %v1774, 5
        %v1777 = vor.u32 %v1773, %v1776
        %v1778 = vsel %vm1744, %v1769, %v1777
        %v1780 = vshrl.u32 %v1202, 16
        %v1782 = vrot.slane %v1780, 4
        %v1783 = vshll.u32 %v1202, 16
        %v1785 = vrot.slane %v1783, 5
        %v1786 = vor.u32 %v1782, %v1785
        %v1788 = vshrl.u32 %v1730, 16
        %v1790 = vrot.slane %v1788, 4
        %v1791 = vshll.u32 %v1730, 16
        %v1793 = vrot.slane %v1791, 5
        %v1794 = vor.u32 %v1790, %v1793
        %v1795 = vsel %vm1744, %v1786, %v1794
        %v1797 = vshrl.u32 %v1203, 16
        %v1799 = vrot.slane %v1797, 4
        %v1800 = vshll.u32 %v1203, 16
        %v1802 = vrot.slane %v1800, 5
        %v1803 = vor.u32 %v1799, %v1802
        %v1805 = vshrl.u32 %v1731, 16
        %v1807 = vrot.slane %v1805, 4
        %v1808 = vshll.u32 %v1731, 16
        %v1810 = vrot.slane %v1808, 5
        %v1811 = vor.u32 %v1807, %v1810
        %v1812 = vsel %vm1744, %v1803, %v1811
        %v1814 = vshrl.u32 %v1204, 16
        %v1816 = vrot.slane %v1814, 4
        %v1817 = vshll.u32 %v1204, 16
        %v1819 = vrot.slane %v1817, 5
        %v1820 = vor.u32 %v1816, %v1819
        %v1822 = vshrl.u32 %v1732, 16
        %v1824 = vrot.slane %v1822, 4
        %v1825 = vshll.u32 %v1732, 16
        %v1827 = vrot.slane %v1825, 5
        %v1828 = vor.u32 %v1824, %v1827
        %v1829 = vsel %vm1744, %v1820, %v1828
        %v1831 = vshrl.u32 %v1205, 16
        %v1833 = vrot.slane %v1831, 4
        %v1834 = vshll.u32 %v1205, 16
        %v1836 = vrot.slane %v1834, 5
        %v1837 = vor.u32 %v1833, %v1836
        %v1839 = vshrl.u32 %v1733, 16
        %v1841 = vrot.slane %v1839, 4
        %v1842 = vshll.u32 %v1733, 16
        %v1844 = vrot.slane %v1842, 5
        %v1845 = vor.u32 %v1841, %v1844
        %v1846 = vsel %vm1744, %v1837, %v1845
        %v1848 = vshrl.u32 %v1206, 16
        %v1850 = vrot.slane %v1848, 4
        %v1851 = vshll.u32 %v1206, 16
        %v1853 = vrot.slane %v1851, 5
        %v1854 = vor.u32 %v1850, %v1853
        %v1856 = vshrl.u32 %v1734, 16
        %v1858 = vrot.slane %v1856, 4
        %v1859 = vshll.u32 %v1734, 16
        %v1861 = vrot.slane %v1859, 5
        %v1862 = vor.u32 %v1858, %v1861
        %v1863 = vsel %vm1744, %v1854, %v1862
        %v1865 = vshrl.u32 %v1207, 16
        %v1867 = vrot.slane %v1865, 4
        %v1868 = vshll.u32 %v1207, 16
        %v1870 = vrot.slane %v1868, 5
        %v1871 = vor.u32 %v1867, %v1870
        %v1873 = vshrl.u32 %v1735, 16
        %v1875 = vrot.slane %v1873, 4
        %v1876 = vshll.u32 %v1735, 16
        %v1878 = vrot.slane %v1876, 5
        %v1879 = vor.u32 %v1875, %v1878
        %v1880 = vsel %vm1744, %v1871, %v1879
        %v1882 = vshrl.u32 %v1208, 16
        %v1884 = vrot.slane %v1882, 4
        %v1885 = vshll.u32 %v1208, 16
        %v1887 = vrot.slane %v1885, 5
        %v1888 = vor.u32 %v1884, %v1887
        %v1890 = vshrl.u32 %v1736, 16
        %v1892 = vrot.slane %v1890, 4
        %v1893 = vshll.u32 %v1736, 16
        %v1895 = vrot.slane %v1893, 5
        %v1896 = vor.u32 %v1892, %v1895
        %v1897 = vsel %vm1744, %v1888, %v1896
        %v1899 = vshrl.u32 %v1209, 16
        %v1901 = vrot.slane %v1899, 4
        %v1902 = vshll.u32 %v1209, 16
        %v1904 = vrot.slane %v1902, 5
        %v1905 = vor.u32 %v1901, %v1904
        %v1907 = vshrl.u32 %v1737, 16
        %v1909 = vrot.slane %v1907, 4
        %v1910 = vshll.u32 %v1737, 16
        %v1912 = vrot.slane %v1910, 5
        %v1913 = vor.u32 %v1909, %v1912
        %v1914 = vsel %vm1744, %v1905, %v1913
        %v1916 = vshrl.u32 %v1210, 16
        %v1918 = vrot.slane %v1916, 4
        %v1919 = vshll.u32 %v1210, 16
        %v1921 = vrot.slane %v1919, 5
        %v1922 = vor.u32 %v1918, %v1921
        %v1924 = vshrl.u32 %v1738, 16
        %v1926 = vrot.slane %v1924, 4
        %v1927 = vshll.u32 %v1738, 16
        %v1929 = vrot.slane %v1927, 5
        %v1930 = vor.u32 %v1926, %v1929
        %v1931 = vsel %vm1744, %v1922, %v1930
        %v1933 = vshrl.u32 %v1211, 16
        %v1935 = vrot.slane %v1933, 4
        %v1936 = vshll.u32 %v1211, 16
        %v1938 = vrot.slane %v1936, 5
        %v1939 = vor.u32 %v1935, %v1938
        %v1941 = vshrl.u32 %v1739, 16
        %v1943 = vrot.slane %v1941, 4
        %v1944 = vshll.u32 %v1739, 16
        %v1946 = vrot.slane %v1944, 5
        %v1947 = vor.u32 %v1943, %v1946
        %v1948 = vsel %vm1744, %v1939, %v1947
        %v1950 = vshrl.u32 %v1212, 16
        %v1952 = vrot.slane %v1950, 4
        %v1953 = vshll.u32 %v1212, 16
        %v1955 = vrot.slane %v1953, 5
        %v1956 = vor.u32 %v1952, %v1955
        %v1958 = vshrl.u32 %v1740, 16
        %v1960 = vrot.slane %v1958, 4
        %v1961 = vshll.u32 %v1740, 16
        %v1963 = vrot.slane %v1961, 5
        %v1964 = vor.u32 %v1960, %v1963
        %v1965 = vsel %vm1744, %v1956, %v1964
        %v1967 = vshrl.u32 %v1213, 16
        %v1969 = vrot.slane %v1967, 4
        %v1970 = vshll.u32 %v1213, 16
        %v1972 = vrot.slane %v1970, 5
        %v1973 = vor.u32 %v1969, %v1972
        %v1975 = vshrl.u32 %v1741, 16
        %v1977 = vrot.slane %v1975, 4
        %v1978 = vshll.u32 %v1741, 16
        %v1980 = vrot.slane %v1978, 5
        %v1981 = vor.u32 %v1977, %v1980
        %v1982 = vsel %vm1744, %v1973, %v1981
        %v1984 = vshrl.u32 %v1214, 16
        %v1986 = vrot.slane %v1984, 4
        %v1987 = vshll.u32 %v1214, 16
        %v1989 = vrot.slane %v1987, 5
        %v1990 = vor.u32 %v1986, %v1989
        %v1992 = vshrl.u32 %v1742, 16
        %v1994 = vrot.slane %v1992, 4
        %v1995 = vshll.u32 %v1742, 16
        %v1997 = vrot.slane %v1995, 5
        %v1998 = vor.u32 %v1994, %v1997
        %v1999 = vsel %vm1744, %v1990, %v1998
        %v2001 = vshrl.u32 %v1215, 16
        %v2003 = vrot.slane %v2001, 4
        %v2004 = vshll.u32 %v1215, 16
        %v2006 = vrot.slane %v2004, 5
        %v2007 = vor.u32 %v2003, %v2006
        %v2009 = vshrl.u32 %v1743, 16
        %v2011 = vrot.slane %v2009, 4
        %v2012 = vshll.u32 %v1743, 16
        %v2014 = vrot.slane %v2012, 5
        %v2015 = vor.u32 %v2011, %v2014
        %v2016 = vsel %vm1744, %v2007, %v2015
        %s2017 = scalar_lea.vmem [#allocation12], 4
        %v2018 = vld [vmem:[%s2017] sm:$0x3]
        %v2020 = vsel %vm1299, %v1761, 0
        %v2023 = vsel %vm1299, %v1778, 0
        %v2026 = vsel %vm1299, %v1795, 0
        %v2029 = vsel %vm1299, %v1812, 0
        %v2032 = vsel %vm1299, %v1829, 0
        %v2035 = vsel %vm1299, %v1846, 0
        %v2038 = vsel %vm1299, %v1863, 0
        %v2041 = vsel %vm1299, %v1880, 0
        %v2044 = vsel %vm1299, %v1897, 0
        %v2047 = vsel %vm1299, %v1914, 0
        %v2050 = vsel %vm1299, %v1931, 0
        %v2053 = vsel %vm1299, %v1948, 0
        %v2056 = vsel %vm1299, %v1965, 0
        %v2059 = vsel %vm1299, %v1982, 0
        %v2062 = vsel %vm1299, %v1999, 0
        %v2065 = vsel %vm1299, %v2016, 0
        %v2068 = vand.u32 %v2018, %v1351
        %2070 = vmatprep.subr.bf16.mxu0 0
        %2071 = vmatpush1.bf16.msra.mxu0 %v2068
        %2072 = vmatprep.subr.bf16.mxu0 0
        %2073 = vmatpush1.bf16.msra.mxu0 0
        %2074 = vmatprep.subr.bf16.mxu0 0
        %2075 = vmatpush1.bf16.msra.mxu0 0
        %2076 = vmatprep.subr.bf16.mxu0 0
        %2077 = vmatpush1.bf16.msra.mxu0 0
        %2078 = vmatprep.subr.bf16.mxu0 0
        %2079 = vmatpush1.bf16.msra.mxu0 0
        %2080 = vmatprep.subr.bf16.mxu0 0
        %2081 = vmatpush1.bf16.msra.mxu0 0
        %2082 = vmatprep.subr.bf16.mxu0 0
        %2083 = vmatpush1.bf16.msra.mxu0 0
        %2084 = vmatprep.subr.bf16.mxu0 0
        %2085 = vmatpush1.bf16.msra.mxu0 0
        %2086 = vmatprep.subr.bf16.mxu0 0
        %2087 = vmatpush1.bf16.msra.mxu0 0
        %2088 = vmatprep.subr.bf16.mxu0 0
        %2089 = vmatpush1.bf16.msra.mxu0 0
        %2090 = vmatprep.subr.bf16.mxu0 0
        %2091 = vmatpush1.bf16.msra.mxu0 0
        %2092 = vmatprep.subr.bf16.mxu0 0
        %2093 = vmatpush1.bf16.msra.mxu0 0
        %2094 = vmatprep.subr.bf16.mxu0 0
        %2095 = vmatpush1.bf16.msra.mxu0 0
        %2096 = vmatprep.subr.bf16.mxu0 0
        %2097 = vmatpush1.bf16.msra.mxu0 0
        %2098 = vmatprep.subr.bf16.mxu0 0
        %2099 = vmatpush1.bf16.msra.mxu0 0
        %2100 = vmatprep.subr.bf16.mxu0 0
        %2101 = vmatpush1.bf16.msra.mxu0 0
        %2102 = vmatprep.mubr.bf16.mxu0 0
        %2103 = vmatmul.mubr.bf16.gmra.mrb[0].mxu0 %v2020
        %v2104 = vpop.f32.mrb[0].mxu0
        %v2105 = vadd.f32 0.0, %v2104
        %v2106 = vpop.f32.mrb[0].mxu0
        %v2107 = vpop.f32.mrb[0].mxu0
        %v2108 = vadd.f32 0.0, %v2107
        %v2109 = vpop.f32.mrb[0].mxu0
        %2110 = vmatprep.mubr.bf16.mxu0 0
        %2111 = vmatmul.mubr.bf16.gmra.mrb[0].mxu0 %v2023
        %v2112 = vpop.f32.mrb[0].mxu0
        %v2113 = vadd.f32 0.0, %v2112
        %v2114 = vpop.f32.mrb[0].mxu0
        %v2115 = vpop.f32.mrb[0].mxu0
        %v2116 = vadd.f32 0.0, %v2115
        %v2117 = vpop.f32.mrb[0].mxu0
        %2118 = vmatprep.mubr.bf16.mxu0 0
        %2119 = vmatmul.mubr.bf16.gmra.mrb[0].mxu0 %v2026
        %v2120 = vpop.f32.mrb[0].mxu0
        %v2121 = vadd.f32 0.0, %v2120
        %v2122 = vpop.f32.mrb[0].mxu0
        %v2123 = vpop.f32.mrb[0].mxu0
        %v2124 = vadd.f32 0.0, %v2123
        %v2125 = vpop.f32.mrb[0].mxu0
        %2126 = vmatprep.mubr.bf16.mxu0 0
        %2127 = vmatmul.mubr.bf16.gmra.mrb[0].mxu0 %v2029
        %v2128 = vpop.f32.mrb[0].mxu0
        %v2129 = vadd.f32 0.0, %v2128
        %v2130 = vpop.f32.mrb[0].mxu0
        %v2131 = vpop.f32.mrb[0].mxu0
        %v2132 = vadd.f32 0.0, %v2131
        %v2133 = vpop.f32.mrb[0].mxu0
        %2134 = vmatprep.mubr.bf16.mxu0 0
        %2135 = vmatmul.mubr.bf16.gmra.mrb[0].mxu0 %v2032
        %v2136 = vpop.f32.mrb[0].mxu0
        %v2137 = vadd.f32 0.0, %v2136
        %v2138 = vpop.f32.mrb[0].mxu0
        %v2139 = vpop.f32.mrb[0].mxu0
        %v2140 = vadd.f32 0.0, %v2139
        %v2141 = vpop.f32.mrb[0].mxu0
        %2142 = vmatprep.mubr.bf16.mxu0 0
        %2143 = vmatmul.mubr.bf16.gmra.mrb[0].mxu0 %v2035
        %v2144 = vpop.f32.mrb[0].mxu0
        %v2145 = vadd.f32 0.0, %v2144
        %v2146 = vpop.f32.mrb[0].mxu0
        %v2147 = vpop.f32.mrb[0].mxu0
        %v2148 = vadd.f32 0.0, %v2147
        %v2149 = vpop.f32.mrb[0].mxu0
        %2150 = vmatprep.mubr.bf16.mxu0 0
        %2151 = vmatmul.mubr.bf16.gmra.mrb[0].mxu0 %v2038
        %v2152 = vpop.f32.mrb[0].mxu0
        %v2153 = vadd.f32 0.0, %v2152
        %v2154 = vpop.f32.mrb[0].mxu0
        %v2155 = vpop.f32.mrb[0].mxu0
        %v2156 = vadd.f32 0.0, %v2155
        %v2157 = vpop.f32.mrb[0].mxu0
        %2158 = vmatprep.mubr.bf16.mxu0 0
        %2159 = vmatmul.mubr.bf16.gmra.mrb[0].mxu0 %v2041
        %v2160 = vpop.f32.mrb[0].mxu0
        %v2161 = vadd.f32 0.0, %v2160
        %v2162 = vpop.f32.mrb[0].mxu0
        %v2163 = vpop.f32.mrb[0].mxu0
        %v2164 = vadd.f32 0.0, %v2163
        %v2165 = vpop.f32.mrb[0].mxu0
        %2166 = vmatprep.mubr.bf16.mxu0 0
        %2167 = vmatmul.mubr.bf16.gmra.mrb[0].mxu0 %v2044
        %v2168 = vpop.f32.mrb[0].mxu0
        %v2169 = vadd.f32 0.0, %v2168
        %v2170 = vpop.f32.mrb[0].mxu0
        %v2171 = vpop.f32.mrb[0].mxu0
        %v2172 = vadd.f32 0.0, %v2171
        %v2173 = vpop.f32.mrb[0].mxu0
        %2174 = vmatprep.mubr.bf16.mxu0 0
        %2175 = vmatmul.mubr.bf16.gmra.mrb[0].mxu0 %v2047
        %v2176 = vpop.f32.mrb[0].mxu0
        %v2177 = vadd.f32 0.0, %v2176
        %v2178 = vpop.f32.mrb[0].mxu0
        %v2179 = vpop.f32.mrb[0].mxu0
        %v2180 = vadd.f32 0.0, %v2179
        %v2181 = vpop.f32.mrb[0].mxu0
        %2182 = vmatprep.mubr.bf16.mxu0 0
        %2183 = vmatmul.mubr.bf16.gmra.mrb[0].mxu0 %v2050
        %v2184 = vpop.f32.mrb[0].mxu0
        %v2185 = vadd.f32 0.0, %v2184
        %v2186 = vpop.f32.mrb[0].mxu0
        %v2187 = vpop.f32.mrb[0].mxu0
        %v2188 = vadd.f32 0.0, %v2187
        %v2189 = vpop.f32.mrb[0].mxu0
        %2190 = vmatprep.mubr.bf16.mxu0 0
        %2191 = vmatmul.mubr.bf16.gmra.mrb[0].mxu0 %v2053
        %v2192 = vpop.f32.mrb[0].mxu0
        %v2193 = vadd.f32 0.0, %v2192
        %v2194 = vpop.f32.mrb[0].mxu0
        %v2195 = vpop.f32.mrb[0].mxu0
        %v2196 = vadd.f32 0.0, %v2195
        %v2197 = vpop.f32.mrb[0].mxu0
        %2198 = vmatprep.mubr.bf16.mxu0 0
        %2199 = vmatmul.mubr.bf16.gmra.mrb[0].mxu0 %v2056
        %v2200 = vpop.f32.mrb[0].mxu0
        %v2201 = vadd.f32 0.0, %v2200
        %v2202 = vpop.f32.mrb[0].mxu0
        %v2203 = vpop.f32.mrb[0].mxu0
        %v2204 = vadd.f32 0.0, %v2203
        %v2205 = vpop.f32.mrb[0].mxu0
        %2206 = vmatprep.mubr.bf16.mxu0 0
        %2207 = vmatmul.mubr.bf16.gmra.mrb[0].mxu0 %v2059
        %v2208 = vpop.f32.mrb[0].mxu0
        %v2209 = vadd.f32 0.0, %v2208
        %v2210 = vpop.f32.mrb[0].mxu0
        %v2211 = vpop.f32.mrb[0].mxu0
        %v2212 = vadd.f32 0.0, %v2211
        %v2213 = vpop.f32.mrb[0].mxu0
        %2214 = vmatprep.mubr.bf16.mxu0 0
        %2215 = vmatmul.mubr.bf16.gmra.mrb[0].mxu0 %v2062
        %v2216 = vpop.f32.mrb[0].mxu0
        %v2217 = vadd.f32 0.0, %v2216
        %v2218 = vpop.f32.mrb[0].mxu0
        %v2219 = vpop.f32.mrb[0].mxu0
        %v2220 = vadd.f32 0.0, %v2219
        %v2221 = vpop.f32.mrb[0].mxu0
        %2222 = vmatprep.mubr.bf16.mxu0 0
        %2223 = vmatmul.mubr.bf16.gmra.mrb[0].mxu0 %v2065
        %v2224 = vpop.f32.mrb[0].mxu0
        %v2225 = vadd.f32 0.0, %v2224
        %v2226 = vpop.f32.mrb[0].mxu0
        %v2227 = vpop.f32.mrb[0].mxu0
        %v2228 = vadd.f32 0.0, %v2227
        %v2229 = vpop.f32.mrb[0].mxu0
        %2230 = vdwg.mxu0
        %v2231 = vadd.f32 %v1602, %v2105
        %v2232 = vadd.f32 %v1605, %v2108
        %v2233 = vadd.f32 %v1610, %v2113
        %v2234 = vadd.f32 %v1613, %v2116
        %v2235 = vadd.f32 %v1618, %v2121
        %v2236 = vadd.f32 %v1621, %v2124
        %v2237 = vadd.f32 %v1626, %v2129
        %v2238 = vadd.f32 %v1629, %v2132
        %v2239 = vadd.f32 %v1634, %v2137
        %v2240 = vadd.f32 %v1637, %v2140
        %v2241 = vadd.f32 %v1642, %v2145
        %v2242 = vadd.f32 %v1645, %v2148
        %v2243 = vadd.f32 %v1650, %v2153
        %v2244 = vadd.f32 %v1653, %v2156
        %v2245 = vadd.f32 %v1658, %v2161
        %v2246 = vadd.f32 %v1661, %v2164
        %v2247 = vadd.f32 %v1666, %v2169
        %v2248 = vadd.f32 %v1669, %v2172
        %v2249 = vadd.f32 %v1674, %v2177
        %v2250 = vadd.f32 %v1677, %v2180
        %v2251 = vadd.f32 %v1682, %v2185
        %v2252 = vadd.f32 %v1685, %v2188
        %v2253 = vadd.f32 %v1690, %v2193
        %v2254 = vadd.f32 %v1693, %v2196
        %v2255 = vadd.f32 %v1698, %v2201
        %v2256 = vadd.f32 %v1701, %v2204
        %v2257 = vadd.f32 %v1706, %v2209
        %v2258 = vadd.f32 %v1709, %v2212
        %v2259 = vadd.f32 %v1714, %v2217
        %v2260 = vadd.f32 %v1717, %v2220
        %v2261 = vadd.f32 %v1722, %v2225
        %v2262 = vadd.f32 %v1725, %v2228
        %v2263 = vld [vmem:[%s685] sm:$0xf8]
        %v2264 = vld [vmem:[%s685 + $0x8] sm:$0xf]
        %v2265 = vld [vmem:[%s685 + $0x10] sm:$0xf8]
        %v2266 = vld [vmem:[%s685 + $0x18] sm:$0xf]
        %v2267 = vld [vmem:[%s685 + $0x20] sm:$0xf8]
        %v2268 = vld [vmem:[%s685 + $0x28] sm:$0xf]
        %v2269 = vld [vmem:[%s685 + $0x30] sm:$0xf8]
        %v2270 = vld [vmem:[%s685 + $0x38] sm:$0xf]
        %v2271 = vld [vmem:[%s685 + $0x40] sm:$0xf8]
        %v2272 = vld [vmem:[%s685 + $0x48] sm:$0xf]
        %v2273 = vld [vmem:[%s685 + $0x50] sm:$0xf8]
        %v2274 = vld [vmem:[%s685 + $0x58] sm:$0xf]
        %v2275 = vld [vmem:[%s685 + $0x60] sm:$0xf8]
        %v2276 = vld [vmem:[%s685 + $0x68] sm:$0xf]
        %v2277 = vld [vmem:[%s685 + $0x70] sm:$0xf8]
        %v2278 = vld [vmem:[%s685 + $0x78] sm:$0xf]
        %v2279 = vld [vmem:[%s685 + $0x80] sm:$0xf8]
        %v2280 = vld [vmem:[%s685 + $0x88] sm:$0xf]
        %v2281 = vld [vmem:[%s685 + $0x90] sm:$0xf8]
        %v2282 = vld [vmem:[%s685 + $0x98] sm:$0xf]
        %v2283 = vld [vmem:[%s685 + $0xa0] sm:$0xf8]
        %v2284 = vld [vmem:[%s685 + $0xa8] sm:$0xf]
        %v2285 = vld [vmem:[%s685 + $0xb0] sm:$0xf8]
        %v2286 = vld [vmem:[%s685 + $0xb8] sm:$0xf]
        %v2287 = vld [vmem:[%s685 + $0xc0] sm:$0xf8]
        %v2288 = vld [vmem:[%s685 + $0xc8] sm:$0xf]
        %v2289 = vld [vmem:[%s685 + $0xd0] sm:$0xf8]
        %v2290 = vld [vmem:[%s685 + $0xd8] sm:$0xf]
        %v2291 = vld [vmem:[%s685 + $0xe0] sm:$0xf8]
        %v2292 = vld [vmem:[%s685 + $0xe8] sm:$0xf]
        %v2293 = vld [vmem:[%s685 + $0xf0] sm:$0xf8]
        %v2294 = vld [vmem:[%s685 + $0xf8] sm:$0xf]
        %v2296 = vshrl.u32 %v2263, 16
        %v2298 = vrot.slane %v2296, 3
        %v2299 = vshll.u32 %v2263, 16
        %v2301 = vrot.slane %v2299, 4
        %v2302 = vor.u32 %v2298, %v2301
        %v2304 = vshrl.u32 %v2264, 16
        %v2306 = vrot.slane %v2304, 3
        %v2307 = vshll.u32 %v2264, 16
        %v2309 = vrot.slane %v2307, 4
        %v2310 = vor.u32 %v2306, %v2309
        %v2311 = vsel %vm839, %v2302, %v2310
        %v2313 = vshrl.u32 %v2265, 16
        %v2315 = vrot.slane %v2313, 3
        %v2316 = vshll.u32 %v2265, 16
        %v2318 = vrot.slane %v2316, 4
        %v2319 = vor.u32 %v2315, %v2318
        %v2321 = vshrl.u32 %v2266, 16
        %v2323 = vrot.slane %v2321, 3
        %v2324 = vshll.u32 %v2266, 16
        %v2326 = vrot.slane %v2324, 4
        %v2327 = vor.u32 %v2323, %v2326
        %v2328 = vsel %vm839, %v2319, %v2327
        %v2330 = vshrl.u32 %v2267, 16
        %v2332 = vrot.slane %v2330, 3
        %v2333 = vshll.u32 %v2267, 16
        %v2335 = vrot.slane %v2333, 4
        %v2336 = vor.u32 %v2332, %v2335
        %v2338 = vshrl.u32 %v2268, 16
        %v2340 = vrot.slane %v2338, 3
        %v2341 = vshll.u32 %v2268, 16
        %v2343 = vrot.slane %v2341, 4
        %v2344 = vor.u32 %v2340, %v2343
        %v2345 = vsel %vm839, %v2336, %v2344
        %v2347 = vshrl.u32 %v2269, 16
        %v2349 = vrot.slane %v2347, 3
        %v2350 = vshll.u32 %v2269, 16
        %v2352 = vrot.slane %v2350, 4
        %v2353 = vor.u32 %v2349, %v2352
        %v2355 = vshrl.u32 %v2270, 16
        %v2357 = vrot.slane %v2355, 3
        %v2358 = vshll.u32 %v2270, 16
        %v2360 = vrot.slane %v2358, 4
        %v2361 = vor.u32 %v2357, %v2360
        %v2362 = vsel %vm839, %v2353, %v2361
        %v2364 = vshrl.u32 %v2271, 16
        %v2366 = vrot.slane %v2364, 3
        %v2367 = vshll.u32 %v2271, 16
        %v2369 = vrot.slane %v2367, 4
        %v2370 = vor.u32 %v2366, %v2369
        %v2372 = vshrl.u32 %v2272, 16
        %v2374 = vrot.slane %v2372, 3
        %v2375 = vshll.u32 %v2272, 16
        %v2377 = vrot.slane %v2375, 4
        %v2378 = vor.u32 %v2374, %v2377
        %v2379 = vsel %vm839, %v2370, %v2378
        %v2381 = vshrl.u32 %v2273, 16
        %v2383 = vrot.slane %v2381, 3
        %v2384 = vshll.u32 %v2273, 16
        %v2386 = vrot.slane %v2384, 4
        %v2387 = vor.u32 %v2383, %v2386
        %v2389 = vshrl.u32 %v2274, 16
        %v2391 = vrot.slane %v2389, 3
        %v2392 = vshll.u32 %v2274, 16
        %v2394 = vrot.slane %v2392, 4
        %v2395 = vor.u32 %v2391, %v2394
        %v2396 = vsel %vm839, %v2387, %v2395
        %v2398 = vshrl.u32 %v2275, 16
        %v2400 = vrot.slane %v2398, 3
        %v2401 = vshll.u32 %v2275, 16
        %v2403 = vrot.slane %v2401, 4
        %v2404 = vor.u32 %v2400, %v2403
        %v2406 = vshrl.u32 %v2276, 16
        %v2408 = vrot.slane %v2406, 3
        %v2409 = vshll.u32 %v2276, 16
        %v2411 = vrot.slane %v2409, 4
        %v2412 = vor.u32 %v2408, %v2411
        %v2413 = vsel %vm839, %v2404, %v2412
        %v2415 = vshrl.u32 %v2277, 16
        %v2417 = vrot.slane %v2415, 3
        %v2418 = vshll.u32 %v2277, 16
        %v2420 = vrot.slane %v2418, 4
        %v2421 = vor.u32 %v2417, %v2420
        %v2423 = vshrl.u32 %v2278, 16
        %v2425 = vrot.slane %v2423, 3
        %v2426 = vshll.u32 %v2278, 16
        %v2428 = vrot.slane %v2426, 4
        %v2429 = vor.u32 %v2425, %v2428
        %v2430 = vsel %vm839, %v2421, %v2429
        %v2432 = vshrl.u32 %v2279, 16
        %v2434 = vrot.slane %v2432, 3
        %v2435 = vshll.u32 %v2279, 16
        %v2437 = vrot.slane %v2435, 4
        %v2438 = vor.u32 %v2434, %v2437
        %v2440 = vshrl.u32 %v2280, 16
        %v2442 = vrot.slane %v2440, 3
        %v2443 = vshll.u32 %v2280, 16
        %v2445 = vrot.slane %v2443, 4
        %v2446 = vor.u32 %v2442, %v2445
        %v2447 = vsel %vm839, %v2438, %v2446
        %v2449 = vshrl.u32 %v2281, 16
        %v2451 = vrot.slane %v2449, 3
        %v2452 = vshll.u32 %v2281, 16
        %v2454 = vrot.slane %v2452, 4
        %v2455 = vor.u32 %v2451, %v2454
        %v2457 = vshrl.u32 %v2282, 16
        %v2459 = vrot.slane %v2457, 3
        %v2460 = vshll.u32 %v2282, 16
        %v2462 = vrot.slane %v2460, 4
        %v2463 = vor.u32 %v2459, %v2462
        %v2464 = vsel %vm839, %v2455, %v2463
        %v2466 = vshrl.u32 %v2283, 16
        %v2468 = vrot.slane %v2466, 3
        %v2469 = vshll.u32 %v2283, 16
        %v2471 = vrot.slane %v2469, 4
        %v2472 = vor.u32 %v2468, %v2471
        %v2474 = vshrl.u32 %v2284, 16
        %v2476 = vrot.slane %v2474, 3
        %v2477 = vshll.u32 %v2284, 16
        %v2479 = vrot.slane %v2477, 4
        %v2480 = vor.u32 %v2476, %v2479
        %v2481 = vsel %vm839, %v2472, %v2480
        %v2483 = vshrl.u32 %v2285, 16
        %v2485 = vrot.slane %v2483, 3
        %v2486 = vshll.u32 %v2285, 16
        %v2488 = vrot.slane %v2486, 4
        %v2489 = vor.u32 %v2485, %v2488
        %v2491 = vshrl.u32 %v2286, 16
        %v2493 = vrot.slane %v2491, 3
        %v2494 = vshll.u32 %v2286, 16
        %v2496 = vrot.slane %v2494, 4
        %v2497 = vor.u32 %v2493, %v2496
        %v2498 = vsel %vm839, %v2489, %v2497
        %v2500 = vshrl.u32 %v2287, 16
        %v2502 = vrot.slane %v2500, 3
        %v2503 = vshll.u32 %v2287, 16
        %v2505 = vrot.slane %v2503, 4
        %v2506 = vor.u32 %v2502, %v2505
        %v2508 = vshrl.u32 %v2288, 16
        %v2510 = vrot.slane %v2508, 3
        %v2511 = vshll.u32 %v2288, 16
        %v2513 = vrot.slane %v2511, 4
        %v2514 = vor.u32 %v2510, %v2513
        %v2515 = vsel %vm839, %v2506, %v2514
        %v2517 = vshrl.u32 %v2289, 16
        %v2519 = vrot.slane %v2517, 3
        %v2520 = vshll.u32 %v2289, 16
        %v2522 = vrot.slane %v2520, 4
        %v2523 = vor.u32 %v2519, %v2522
        %v2525 = vshrl.u32 %v2290, 16
        %v2527 = vrot.slane %v2525, 3
        %v2528 = vshll.u32 %v2290, 16
        %v2530 = vrot.slane %v2528, 4
        %v2531 = vor.u32 %v2527, %v2530
        %v2532 = vsel %vm839, %v2523, %v2531
        %v2534 = vshrl.u32 %v2291, 16
        %v2536 = vrot.slane %v2534, 3
        %v2537 = vshll.u32 %v2291, 16
        %v2539 = vrot.slane %v2537, 4
        %v2540 = vor.u32 %v2536, %v2539
        %v2542 = vshrl.u32 %v2292, 16
        %v2544 = vrot.slane %v2542, 3
        %v2545 = vshll.u32 %v2292, 16
        %v2547 = vrot.slane %v2545, 4
        %v2548 = vor.u32 %v2544, %v2547
        %v2549 = vsel %vm839, %v2540, %v2548
        %v2551 = vshrl.u32 %v2293, 16
        %v2553 = vrot.slane %v2551, 3
        %v2554 = vshll.u32 %v2293, 16
        %v2556 = vrot.slane %v2554, 4
        %v2557 = vor.u32 %v2553, %v2556
        %v2559 = vshrl.u32 %v2294, 16
        %v2561 = vrot.slane %v2559, 3
        %v2562 = vshll.u32 %v2294, 16
        %v2564 = vrot.slane %v2562, 4
        %v2565 = vor.u32 %v2561, %v2564
        %v2566 = vsel %vm839, %v2557, %v2565
        %s2567 = scalar_lea.vmem [#allocation12], 6
        %v2568 = vld [vmem:[%s2567] sm:$0x3]
        %v2570 = vsel %vm1299, %v2311, 0
        %v2573 = vsel %vm1299, %v2328, 0
        %v2576 = vsel %vm1299, %v2345, 0
        %v2579 = vsel %vm1299, %v2362, 0
        %v2582 = vsel %vm1299, %v2379, 0
        %v2585 = vsel %vm1299, %v2396, 0
        %v2588 = vsel %vm1299, %v2413, 0
        %v2591 = vsel %vm1299, %v2430, 0
        %v2594 = vsel %vm1299, %v2447, 0
        %v2597 = vsel %vm1299, %v2464, 0
        %v2600 = vsel %vm1299, %v2481, 0
        %v2603 = vsel %vm1299, %v2498, 0
        %v2606 = vsel %vm1299, %v2515, 0
        %v2609 = vsel %vm1299, %v2532, 0
        %v2612 = vsel %vm1299, %v2549, 0
        %v2615 = vsel %vm1299, %v2566, 0
        %v2618 = vand.u32 %v2568, %v1351
        %2620 = vmatprep.subr.bf16.mxu0 0
        %2621 = vmatpush1.bf16.msra.mxu0 %v2618
        %2622 = vmatprep.subr.bf16.mxu0 0
        %2623 = vmatpush1.bf16.msra.mxu0 0
        %2624 = vmatprep.subr.bf16.mxu0 0
        %2625 = vmatpush1.bf16.msra.mxu0 0
        %2626 = vmatprep.subr.bf16.mxu0 0
        %2627 = vmatpush1.bf16.msra.mxu0 0
        %2628 = vmatprep.subr.bf16.mxu0 0
        %2629 = vmatpush1.bf16.msra.mxu0 0
        %2630 = vmatprep.subr.bf16.mxu0 0
        %2631 = vmatpush1.bf16.msra.mxu0 0
        %2632 = vmatprep.subr.bf16.mxu0 0
        %2633 = vmatpush1.bf16.msra.mxu0 0
        %2634 = vmatprep.subr.bf16.mxu0 0
        %2635 = vmatpush1.bf16.msra.mxu0 0
        %2636 = vmatprep.subr.bf16.mxu0 0
        %2637 = vmatpush1.bf16.msra.mxu0 0
        %2638 = vmatprep.subr.bf16.mxu0 0
        %2639 = vmatpush1.bf16.msra.mxu0 0
        %2640 = vmatprep.subr.bf16.mxu0 0
        %2641 = vmatpush1.bf16.msra.mxu0 0
        %2642 = vmatprep.subr.bf16.mxu0 0
        %2643 = vmatpush1.bf16.msra.mxu0 0
        %2644 = vmatprep.subr.bf16.mxu0 0
        %2645 = vmatpush1.bf16.msra.mxu0 0
        %2646 = vmatprep.subr.bf16.mxu0 0
        %2647 = vmatpush1.bf16.msra.mxu0 0
        %2648 = vmatprep.subr.bf16.mxu0 0
        %2649 = vmatpush1.bf16.msra.mxu0 0
        %2650 = vmatprep.subr.bf16.mxu0 0
        %2651 = vmatpush1.bf16.msra.mxu0 0
        %2652 = vmatprep.mubr.bf16.mxu0 0
        %2653 = vmatmul.mubr.bf16.gmra.mrb[0].mxu0 %v2570
        %v2654 = vpop.f32.mrb[0].mxu0
        %v2655 = vadd.f32 0.0, %v2654
        %v2656 = vpop.f32.mrb[0].mxu0
        %v2657 = vpop.f32.mrb[0].mxu0
        %v2658 = vadd.f32 0.0, %v2657
        %v2659 = vpop.f32.mrb[0].mxu0
        %2660 = vmatprep.mubr.bf16.mxu0 0
        %2661 = vmatmul.mubr.bf16.gmra.mrb[0].mxu0 %v2573
        %v2662 = vpop.f32.mrb[0].mxu0
        %v2663 = vadd.f32 0.0, %v2662
        %v2664 = vpop.f32.mrb[0].mxu0
        %v2665 = vpop.f32.mrb[0].mxu0
        %v2666 = vadd.f32 0.0, %v2665
        %v2667 = vpop.f32.mrb[0].mxu0
        %2668 = vmatprep.mubr.bf16.mxu0 0
        %2669 = vmatmul.mubr.bf16.gmra.mrb[0].mxu0 %v2576
        %v2670 = vpop.f32.mrb[0].mxu0
        %v2671 = vadd.f32 0.0, %v2670
        %v2672 = vpop.f32.mrb[0].mxu0
        %v2673 = vpop.f32.mrb[0].mxu0
        %v2674 = vadd.f32 0.0, %v2673
        %v2675 = vpop.f32.mrb[0].mxu0
        %2676 = vmatprep.mubr.bf16.mxu0 0
        %2677 = vmatmul.mubr.bf16.gmra.mrb[0].mxu0 %v2579
        %v2678 = vpop.f32.mrb[0].mxu0
        %v2679 = vadd.f32 0.0, %v2678
        %v2680 = vpop.f32.mrb[0].mxu0
        %v2681 = vpop.f32.mrb[0].mxu0
        %v2682 = vadd.f32 0.0, %v2681
        %v2683 = vpop.f32.mrb[0].mxu0
        %2684 = vmatprep.mubr.bf16.mxu0 0
        %2685 = vmatmul.mubr.bf16.gmra.mrb[0].mxu0 %v2582
        %v2686 = vpop.f32.mrb[0].mxu0
        %v2687 = vadd.f32 0.0, %v2686
        %v2688 = vpop.f32.mrb[0].mxu0
        %v2689 = vpop.f32.mrb[0].mxu0
        %v2690 = vadd.f32 0.0, %v2689
        %v2691 = vpop.f32.mrb[0].mxu0
        %2692 = vmatprep.mubr.bf16.mxu0 0
        %2693 = vmatmul.mubr.bf16.gmra.mrb[0].mxu0 %v2585
        %v2694 = vpop.f32.mrb[0].mxu0
        %v2695 = vadd.f32 0.0, %v2694
        %v2696 = vpop.f32.mrb[0].mxu0
        %v2697 = vpop.f32.mrb[0].mxu0
        %v2698 = vadd.f32 0.0, %v2697
        %v2699 = vpop.f32.mrb[0].mxu0
        %2700 = vmatprep.mubr.bf16.mxu0 0
        %2701 = vmatmul.mubr.bf16.gmra.mrb[0].mxu0 %v2588
        %v2702 = vpop.f32.mrb[0].mxu0
        %v2703 = vadd.f32 0.0, %v2702
        %v2704 = vpop.f32.mrb[0].mxu0
        %v2705 = vpop.f32.mrb[0].mxu0
        %v2706 = vadd.f32 0.0, %v2705
        %v2707 = vpop.f32.mrb[0].mxu0
        %2708 = vmatprep.mubr.bf16.mxu0 0
        %2709 = vmatmul.mubr.bf16.gmra.mrb[0].mxu0 %v2591
        %v2710 = vpop.f32.mrb[0].mxu0
        %v2711 = vadd.f32 0.0, %v2710
        %v2712 = vpop.f32.mrb[0].mxu0
        %v2713 = vpop.f32.mrb[0].mxu0
        %v2714 = vadd.f32 0.0, %v2713
        %v2715 = vpop.f32.mrb[0].mxu0
        %2716 = vmatprep.mubr.bf16.mxu0 0
        %2717 = vmatmul.mubr.bf16.gmra.mrb[0].mxu0 %v2594
        %v2718 = vpop.f32.mrb[0].mxu0
        %v2719 = vadd.f32 0.0, %v2718
        %v2720 = vpop.f32.mrb[0].mxu0
        %v2721 = vpop.f32.mrb[0].mxu0
        %v2722 = vadd.f32 0.0, %v2721
        %v2723 = vpop.f32.mrb[0].mxu0
        %2724 = vmatprep.mubr.bf16.mxu0 0
        %2725 = vmatmul.mubr.bf16.gmra.mrb[0].mxu0 %v2597
        %v2726 = vpop.f32.mrb[0].mxu0
        %v2727 = vadd.f32 0.0, %v2726
        %v2728 = vpop.f32.mrb[0].mxu0
        %v2729 = vpop.f32.mrb[0].mxu0
        %v2730 = vadd.f32 0.0, %v2729
        %v2731 = vpop.f32.mrb[0].mxu0
        %2732 = vmatprep.mubr.bf16.mxu0 0
        %2733 = vmatmul.mubr.bf16.gmra.mrb[0].mxu0 %v2600
        %v2734 = vpop.f32.mrb[0].mxu0
        %v2735 = vadd.f32 0.0, %v2734
        %v2736 = vpop.f32.mrb[0].mxu0
        %v2737 = vpop.f32.mrb[0].mxu0
        %v2738 = vadd.f32 0.0, %v2737
        %v2739 = vpop.f32.mrb[0].mxu0
        %2740 = vmatprep.mubr.bf16.mxu0 0
        %2741 = vmatmul.mubr.bf16.gmra.mrb[0].mxu0 %v2603
        %v2742 = vpop.f32.mrb[0].mxu0
        %v2743 = vadd.f32 0.0, %v2742
        %v2744 = vpop.f32.mrb[0].mxu0
        %v2745 = vpop.f32.mrb[0].mxu0
        %v2746 = vadd.f32 0.0, %v2745
        %v2747 = vpop.f32.mrb[0].mxu0
        %2748 = vmatprep.mubr.bf16.mxu0 0
        %2749 = vmatmul.mubr.bf16.gmra.mrb[0].mxu0 %v2606
        %v2750 = vpop.f32.mrb[0].mxu0
        %v2751 = vadd.f32 0.0, %v2750
        %v2752 = vpop.f32.mrb[0].mxu0
        %v2753 = vpop.f32.mrb[0].mxu0
        %v2754 = vadd.f32 0.0, %v2753
        %v2755 = vpop.f32.mrb[0].mxu0
        %2756 = vmatprep.mubr.bf16.mxu0 0
        %2757 = vmatmul.mubr.bf16.gmra.mrb[0].mxu0 %v2609
        %v2758 = vpop.f32.mrb[0].mxu0
        %v2759 = vadd.f32 0.0, %v2758
        %v2760 = vpop.f32.mrb[0].mxu0
        %v2761 = vpop.f32.mrb[0].mxu0
        %v2762 = vadd.f32 0.0, %v2761
        %v2763 = vpop.f32.mrb[0].mxu0
        %2764 = vmatprep.mubr.bf16.mxu0 0
        %2765 = vmatmul.mubr.bf16.gmra.mrb[0].mxu0 %v2612
        %v2766 = vpop.f32.mrb[0].mxu0
        %v2767 = vadd.f32 0.0, %v2766
        %v2768 = vpop.f32.mrb[0].mxu0
        %v2769 = vpop.f32.mrb[0].mxu0
        %v2770 = vadd.f32 0.0, %v2769
        %v2771 = vpop.f32.mrb[0].mxu0
        %2772 = vmatprep.mubr.bf16.mxu0 0
        %2773 = vmatmul.mubr.bf16.gmra.mrb[0].mxu0 %v2615
        %v2774 = vpop.f32.mrb[0].mxu0
        %v2775 = vadd.f32 0.0, %v2774
        %v2776 = vpop.f32.mrb[0].mxu0
        %v2777 = vpop.f32.mrb[0].mxu0
        %v2778 = vadd.f32 0.0, %v2777
        %v2779 = vpop.f32.mrb[0].mxu0
        %2780 = vdwg.mxu0
        %v2781 = vadd.f32 %v2231, %v2655
        %v2782 = vadd.f32 %v2232, %v2658
        %v2783 = vadd.f32 %v2233, %v2663
        %v2784 = vadd.f32 %v2234, %v2666
        %v2785 = vadd.f32 %v2235, %v2671
        %v2786 = vadd.f32 %v2236, %v2674
        %v2787 = vadd.f32 %v2237, %v2679
        %v2788 = vadd.f32 %v2238, %v2682
        %v2789 = vadd.f32 %v2239, %v2687
        %v2790 = vadd.f32 %v2240, %v2690
        %v2791 = vadd.f32 %v2241, %v2695
        %v2792 = vadd.f32 %v2242, %v2698
        %v2793 = vadd.f32 %v2243, %v2703
        %v2794 = vadd.f32 %v2244, %v2706
        %v2795 = vadd.f32 %v2245, %v2711
        %v2796 = vadd.f32 %v2246, %v2714
        %v2797 = vadd.f32 %v2247, %v2719
        %v2798 = vadd.f32 %v2248, %v2722
        %v2799 = vadd.f32 %v2249, %v2727
        %v2800 = vadd.f32 %v2250, %v2730
        %v2801 = vadd.f32 %v2251, %v2735
        %v2802 = vadd.f32 %v2252, %v2738
        %v2803 = vadd.f32 %v2253, %v2743
        %v2804 = vadd.f32 %v2254, %v2746
        %v2805 = vadd.f32 %v2255, %v2751
        %v2806 = vadd.f32 %v2256, %v2754
        %v2807 = vadd.f32 %v2257, %v2759
        %v2808 = vadd.f32 %v2258, %v2762
        %v2809 = vadd.f32 %v2259, %v2767
        %v2810 = vadd.f32 %v2260, %v2770
        %v2811 = vadd.f32 %v2261, %v2775
        %v2812 = vadd.f32 %v2262, %v2778
        %v2813 = vld [vmem:[%s685] sm:$0xf0]
        %v2814 = vld [vmem:[%s685 + $0x10] sm:$0xf0]
        %v2815 = vld [vmem:[%s685 + $0x20] sm:$0xf0]
        %v2816 = vld [vmem:[%s685 + $0x30] sm:$0xf0]
        %v2817 = vld [vmem:[%s685 + $0x40] sm:$0xf0]
        %v2818 = vld [vmem:[%s685 + $0x50] sm:$0xf0]
        %v2819 = vld [vmem:[%s685 + $0x60] sm:$0xf0]
        %v2820 = vld [vmem:[%s685 + $0x70] sm:$0xf0]
        %v2821 = vld [vmem:[%s685 + $0x80] sm:$0xf0]
        %v2822 = vld [vmem:[%s685 + $0x90] sm:$0xf0]
        %v2823 = vld [vmem:[%s685 + $0xa0] sm:$0xf0]
        %v2824 = vld [vmem:[%s685 + $0xb0] sm:$0xf0]
        %v2825 = vld [vmem:[%s685 + $0xc0] sm:$0xf0]
        %v2826 = vld [vmem:[%s685 + $0xd0] sm:$0xf0]
        %v2827 = vld [vmem:[%s685 + $0xe0] sm:$0xf0]
        %v2828 = vld [vmem:[%s685 + $0xf0] sm:$0xf0]
        %v2861 = vrot.slane %v2813, 4
        %v2862 = vrot.slane %v2264, 4
        %v2863 = vsel %vm1248, %v2861, %v2862
        %v2864 = vrot.slane %v2814, 4
        %v2865 = vrot.slane %v2266, 4
        %v2866 = vsel %vm1248, %v2864, %v2865
        %v2867 = vrot.slane %v2815, 4
        %v2868 = vrot.slane %v2268, 4
        %v2869 = vsel %vm1248, %v2867, %v2868
        %v2870 = vrot.slane %v2816, 4
        %v2871 = vrot.slane %v2270, 4
        %v2872 = vsel %vm1248, %v2870, %v2871
        %v2873 = vrot.slane %v2817, 4
        %v2874 = vrot.slane %v2272, 4
        %v2875 = vsel %vm1248, %v2873, %v2874
        %v2876 = vrot.slane %v2818, 4
        %v2877 = vrot.slane %v2274, 4
        %v2878 = vsel %vm1248, %v2876, %v2877
        %v2879 = vrot.slane %v2819, 4
        %v2880 = vrot.slane %v2276, 4
        %v2881 = vsel %vm1248, %v2879, %v2880
        %v2882 = vrot.slane %v2820, 4
        %v2883 = vrot.slane %v2278, 4
        %v2884 = vsel %vm1248, %v2882, %v2883
        %v2885 = vrot.slane %v2821, 4
        %v2886 = vrot.slane %v2280, 4
        %v2887 = vsel %vm1248, %v2885, %v2886
        %v2888 = vrot.slane %v2822, 4
        %v2889 = vrot.slane %v2282, 4
        %v2890 = vsel %vm1248, %v2888, %v2889
        %v2891 = vrot.slane %v2823, 4
        %v2892 = vrot.slane %v2284, 4
        %v2893 = vsel %vm1248, %v2891, %v2892
        %v2894 = vrot.slane %v2824, 4
        %v2895 = vrot.slane %v2286, 4
        %v2896 = vsel %vm1248, %v2894, %v2895
        %v2897 = vrot.slane %v2825, 4
        %v2898 = vrot.slane %v2288, 4
        %v2899 = vsel %vm1248, %v2897, %v2898
        %v2900 = vrot.slane %v2826, 4
        %v2901 = vrot.slane %v2290, 4
        %v2902 = vsel %vm1248, %v2900, %v2901
        %v2903 = vrot.slane %v2827, 4
        %v2904 = vrot.slane %v2292, 4
        %v2905 = vsel %vm1248, %v2903, %v2904
        %v2906 = vrot.slane %v2828, 4
        %v2907 = vrot.slane %v2294, 4
        %v2908 = vsel %vm1248, %v2906, %v2907
        %s2909 = scalar_lea.vmem [#allocation12], 8
        %v2910 = vld [vmem:[%s2909] sm:$0x3]
        %v2912 = vsel %vm1299, %v2863, 0
        %v2915 = vsel %vm1299, %v2866, 0
        %v2918 = vsel %vm1299, %v2869, 0
        %v2921 = vsel %vm1299, %v2872, 0
        %v2924 = vsel %vm1299, %v2875, 0
        %v2927 = vsel %vm1299, %v2878, 0
        %v2930 = vsel %vm1299, %v2881, 0
        %v2933 = vsel %vm1299, %v2884, 0
        %v2936 = vsel %vm1299, %v2887, 0
        %v2939 = vsel %vm1299, %v2890, 0
        %v2942 = vsel %vm1299, %v2893, 0
        %v2945 = vsel %vm1299, %v2896, 0
        %v2948 = vsel %vm1299, %v2899, 0
        %v2951 = vsel %vm1299, %v2902, 0
        %v2954 = vsel %vm1299, %v2905, 0
        %v2957 = vsel %vm1299, %v2908, 0
        %v2960 = vand.u32 %v2910, %v1351
        %2962 = vmatprep.subr.bf16.mxu0 0
        %2963 = vmatpush1.bf16.msra.mxu0 %v2960
        %2964 = vmatprep.subr.bf16.mxu0 0
        %2965 = vmatpush1.bf16.msra.mxu0 0
        %2966 = vmatprep.subr.bf16.mxu0 0
        %2967 = vmatpush1.bf16.msra.mxu0 0
        %2968 = vmatprep.subr.bf16.mxu0 0
        %2969 = vmatpush1.bf16.msra.mxu0 0
        %2970 = vmatprep.subr.bf16.mxu0 0
        %2971 = vmatpush1.bf16.msra.mxu0 0
        %2972 = vmatprep.subr.bf16.mxu0 0
        %2973 = vmatpush1.bf16.msra.mxu0 0
        %2974 = vmatprep.subr.bf16.mxu0 0
        %2975 = vmatpush1.bf16.msra.mxu0 0
        %2976 = vmatprep.subr.bf16.mxu0 0
        %2977 = vmatpush1.bf16.msra.mxu0 0
        %2978 = vmatprep.subr.bf16.mxu0 0
        %2979 = vmatpush1.bf16.msra.mxu0 0
        %2980 = vmatprep.subr.bf16.mxu0 0
        %2981 = vmatpush1.bf16.msra.mxu0 0
        %2982 = vmatprep.subr.bf16.mxu0 0
        %2983 = vmatpush1.bf16.msra.mxu0 0
        %2984 = vmatprep.subr.bf16.mxu0 0
        %2985 = vmatpush1.bf16.msra.mxu0 0
        %2986 = vmatprep.subr.bf16.mxu0 0
        %2987 = vmatpush1.bf16.msra.mxu0 0
        %2988 = vmatprep.subr.bf16.mxu0 0
        %2989 = vmatpush1.bf16.msra.mxu0 0
        %2990 = vmatprep.subr.bf16.mxu0 0
        %2991 = vmatpush1.bf16.msra.mxu0 0
        %2992 = vmatprep.subr.bf16.mxu0 0
        %2993 = vmatpush1.bf16.msra.mxu0 0
        %2994 = vmatprep.mubr.bf16.mxu0 0
        %2995 = vmatmul.mubr.bf16.gmra.mrb[0].mxu0 %v2912
        %v2996 = vpop.f32.mrb[0].mxu0
        %v2997 = vadd.f32 0.0, %v2996
        %v2998 = vpop.f32.mrb[0].mxu0
        %v2999 = vpop.f32.mrb[0].mxu0
        %v3000 = vadd.f32 0.0, %v2999
        %v3001 = vpop.f32.mrb[0].mxu0
        %3002 = vmatprep.mubr.bf16.mxu0 0
        %3003 = vmatmul.mubr.bf16.gmra.mrb[0].mxu0 %v2915
        %v3004 = vpop.f32.mrb[0].mxu0
        %v3005 = vadd.f32 0.0, %v3004
        %v3006 = vpop.f32.mrb[0].mxu0
        %v3007 = vpop.f32.mrb[0].mxu0
        %v3008 = vadd.f32 0.0, %v3007
        %v3009 = vpop.f32.mrb[0].mxu0
        %3010 = vmatprep.mubr.bf16.mxu0 0
        %3011 = vmatmul.mubr.bf16.gmra.mrb[0].mxu0 %v2918
        %v3012 = vpop.f32.mrb[0].mxu0
        %v3013 = vadd.f32 0.0, %v3012
        %v3014 = vpop.f32.mrb[0].mxu0
        %v3015 = vpop.f32.mrb[0].mxu0
        %v3016 = vadd.f32 0.0, %v3015
        %v3017 = vpop.f32.mrb[0].mxu0
        %3018 = vmatprep.mubr.bf16.mxu0 0
        %3019 = vmatmul.mubr.bf16.gmra.mrb[0].mxu0 %v2921
        %v3020 = vpop.f32.mrb[0].mxu0
        %v3021 = vadd.f32 0.0, %v3020
        %v3022 = vpop.f32.mrb[0].mxu0
        %v3023 = vpop.f32.mrb[0].mxu0
        %v3024 = vadd.f32 0.0, %v3023
        %v3025 = vpop.f32.mrb[0].mxu0
        %3026 = vmatprep.mubr.bf16.mxu0 0
        %3027 = vmatmul.mubr.bf16.gmra.mrb[0].mxu0 %v2924
        %v3028 = vpop.f32.mrb[0].mxu0
        %v3029 = vadd.f32 0.0, %v3028
        %v3030 = vpop.f32.mrb[0].mxu0
        %v3031 = vpop.f32.mrb[0].mxu0
        %v3032 = vadd.f32 0.0, %v3031
        %v3033 = vpop.f32.mrb[0].mxu0
        %3034 = vmatprep.mubr.bf16.mxu0 0
        %3035 = vmatmul.mubr.bf16.gmra.mrb[0].mxu0 %v2927
        %v3036 = vpop.f32.mrb[0].mxu0
        %v3037 = vadd.f32 0.0, %v3036
        %v3038 = vpop.f32.mrb[0].mxu0
        %v3039 = vpop.f32.mrb[0].mxu0
        %v3040 = vadd.f32 0.0, %v3039
        %v3041 = vpop.f32.mrb[0].mxu0
        %3042 = vmatprep.mubr.bf16.mxu0 0
        %3043 = vmatmul.mubr.bf16.gmra.mrb[0].mxu0 %v2930
        %v3044 = vpop.f32.mrb[0].mxu0
        %v3045 = vadd.f32 0.0, %v3044
        %v3046 = vpop.f32.mrb[0].mxu0
        %v3047 = vpop.f32.mrb[0].mxu0
        %v3048 = vadd.f32 0.0, %v3047
        %v3049 = vpop.f32.mrb[0].mxu0
        %3050 = vmatprep.mubr.bf16.mxu0 0
        %3051 = vmatmul.mubr.bf16.gmra.mrb[0].mxu0 %v2933
        %v3052 = vpop.f32.mrb[0].mxu0
        %v3053 = vadd.f32 0.0, %v3052
        %v3054 = vpop.f32.mrb[0].mxu0
        %v3055 = vpop.f32.mrb[0].mxu0
        %v3056 = vadd.f32 0.0, %v3055
        %v3057 = vpop.f32.mrb[0].mxu0
        %3058 = vmatprep.mubr.bf16.mxu0 0
        %3059 = vmatmul.mubr.bf16.gmra.mrb[0].mxu0 %v2936
        %v3060 = vpop.f32.mrb[0].mxu0
        %v3061 = vadd.f32 0.0, %v3060
        %v3062 = vpop.f32.mrb[0].mxu0
        %v3063 = vpop.f32.mrb[0].mxu0
        %v3064 = vadd.f32 0.0, %v3063
        %v3065 = vpop.f32.mrb[0].mxu0
        %3066 = vmatprep.mubr.bf16.mxu0 0
        %3067 = vmatmul.mubr.bf16.gmra.mrb[0].mxu0 %v2939
        %v3068 = vpop.f32.mrb[0].mxu0
        %v3069 = vadd.f32 0.0, %v3068
        %v3070 = vpop.f32.mrb[0].mxu0
        %v3071 = vpop.f32.mrb[0].mxu0
        %v3072 = vadd.f32 0.0, %v3071
        %v3073 = vpop.f32.mrb[0].mxu0
        %3074 = vmatprep.mubr.bf16.mxu0 0
        %3075 = vmatmul.mubr.bf16.gmra.mrb[0].mxu0 %v2942
        %v3076 = vpop.f32.mrb[0].mxu0
        %v3077 = vadd.f32 0.0, %v3076
        %v3078 = vpop.f32.mrb[0].mxu0
        %v3079 = vpop.f32.mrb[0].mxu0
        %v3080 = vadd.f32 0.0, %v3079
        %v3081 = vpop.f32.mrb[0].mxu0
        %3082 = vmatprep.mubr.bf16.mxu0 0
        %3083 = vmatmul.mubr.bf16.gmra.mrb[0].mxu0 %v2945
        %v3084 = vpop.f32.mrb[0].mxu0
        %v3085 = vadd.f32 0.0, %v3084
        %v3086 = vpop.f32.mrb[0].mxu0
        %v3087 = vpop.f32.mrb[0].mxu0
        %v3088 = vadd.f32 0.0, %v3087
        %v3089 = vpop.f32.mrb[0].mxu0
        %3090 = vmatprep.mubr.bf16.mxu0 0
        %3091 = vmatmul.mubr.bf16.gmra.mrb[0].mxu0 %v2948
        %v3092 = vpop.f32.mrb[0].mxu0
        %v3093 = vadd.f32 0.0, %v3092
        %v3094 = vpop.f32.mrb[0].mxu0
        %v3095 = vpop.f32.mrb[0].mxu0
        %v3096 = vadd.f32 0.0, %v3095
        %v3097 = vpop.f32.mrb[0].mxu0
        %3098 = vmatprep.mubr.bf16.mxu0 0
        %3099 = vmatmul.mubr.bf16.gmra.mrb[0].mxu0 %v2951
        %v3100 = vpop.f32.mrb[0].mxu0
        %v3101 = vadd.f32 0.0, %v3100
        %v3102 = vpop.f32.mrb[0].mxu0
        %v3103 = vpop.f32.mrb[0].mxu0
        %v3104 = vadd.f32 0.0, %v3103
        %v3105 = vpop.f32.mrb[0].mxu0
        %3106 = vmatprep.mubr.bf16.mxu0 0
        %3107 = vmatmul.mubr.bf16.gmra.mrb[0].mxu0 %v2954
        %v3108 = vpop.f32.mrb[0].mxu0
        %v3109 = vadd.f32 0.0, %v3108
        %v3110 = vpop.f32.mrb[0].mxu0
        %v3111 = vpop.f32.mrb[0].mxu0
        %v3112 = vadd.f32 0.0, %v3111
        %v3113 = vpop.f32.mrb[0].mxu0
        %3114 = vmatprep.mubr.bf16.mxu0 0
        %3115 = vmatmul.mubr.bf16.gmra.mrb[0].mxu0 %v2957
        %v3116 = vpop.f32.mrb[0].mxu0
        %v3117 = vadd.f32 0.0, %v3116
        %v3118 = vpop.f32.mrb[0].mxu0
        %v3119 = vpop.f32.mrb[0].mxu0
        %v3120 = vadd.f32 0.0, %v3119
        %v3121 = vpop.f32.mrb[0].mxu0
        %3122 = vdwg.mxu0
        %v3123 = vadd.f32 %v2781, %v2997
        %v3124 = vadd.f32 %v2782, %v3000
        %v3125 = vadd.f32 %v2783, %v3005
        %v3126 = vadd.f32 %v2784, %v3008
        %v3127 = vadd.f32 %v2785, %v3013
        %v3128 = vadd.f32 %v2786, %v3016
        %v3129 = vadd.f32 %v2787, %v3021
        %v3130 = vadd.f32 %v2788, %v3024
        %v3131 = vadd.f32 %v2789, %v3029
        %v3132 = vadd.f32 %v2790, %v3032
        %v3133 = vadd.f32 %v2791, %v3037
        %v3134 = vadd.f32 %v2792, %v3040
        %v3135 = vadd.f32 %v2793, %v3045
        %v3136 = vadd.f32 %v2794, %v3048
        %v3137 = vadd.f32 %v2795, %v3053
        %v3138 = vadd.f32 %v2796, %v3056
        %v3139 = vadd.f32 %v2797, %v3061
        %v3140 = vadd.f32 %v2798, %v3064
        %v3141 = vadd.f32 %v2799, %v3069
        %v3142 = vadd.f32 %v2800, %v3072
        %v3143 = vadd.f32 %v2801, %v3077
        %v3144 = vadd.f32 %v2802, %v3080
        %v3145 = vadd.f32 %v2803, %v3085
        %v3146 = vadd.f32 %v2804, %v3088
        %v3147 = vadd.f32 %v2805, %v3093
        %v3148 = vadd.f32 %v2806, %v3096
        %v3149 = vadd.f32 %v2807, %v3101
        %v3150 = vadd.f32 %v2808, %v3104
        %v3151 = vadd.f32 %v2809, %v3109
        %v3152 = vadd.f32 %v2810, %v3112
        %v3153 = vadd.f32 %v2811, %v3117
        %v3154 = vadd.f32 %v2812, %v3120
        %v3155 = vld [vmem:[%s685 + $0x8] sm:$0x1f]
        %v3156 = vld [vmem:[%s685 + $0x18] sm:$0x1f]
        %v3157 = vld [vmem:[%s685 + $0x28] sm:$0x1f]
        %v3158 = vld [vmem:[%s685 + $0x38] sm:$0x1f]
        %v3159 = vld [vmem:[%s685 + $0x48] sm:$0x1f]
        %v3160 = vld [vmem:[%s685 + $0x58] sm:$0x1f]
        %v3161 = vld [vmem:[%s685 + $0x68] sm:$0x1f]
        %v3162 = vld [vmem:[%s685 + $0x78] sm:$0x1f]
        %v3163 = vld [vmem:[%s685 + $0x88] sm:$0x1f]
        %v3164 = vld [vmem:[%s685 + $0x98] sm:$0x1f]
        %v3165 = vld [vmem:[%s685 + $0xa8] sm:$0x1f]
        %v3166 = vld [vmem:[%s685 + $0xb8] sm:$0x1f]
        %v3167 = vld [vmem:[%s685 + $0xc8] sm:$0x1f]
        %v3168 = vld [vmem:[%s685 + $0xd8] sm:$0x1f]
        %v3169 = vld [vmem:[%s685 + $0xe8] sm:$0x1f]
        %v3170 = vld [vmem:[%s685 + $0xf8] sm:$0x1f]
        %v3172 = vshrl.u32 %v2813, 16
        %v3174 = vrot.slane %v3172, 4
        %v3175 = vshll.u32 %v2813, 16
        %v3177 = vrot.slane %v3175, 5
        %v3178 = vor.u32 %v3174, %v3177
        %v3180 = vshrl.u32 %v3155, 16
        %v3182 = vrot.slane %v3180, 4
        %v3183 = vshll.u32 %v3155, 16
        %v3185 = vrot.slane %v3183, 5
        %v3186 = vor.u32 %v3182, %v3185
        %v3187 = vsel %vm1744, %v3178, %v3186
        %v3189 = vshrl.u32 %v2814, 16
        %v3191 = vrot.slane %v3189, 4
        %v3192 = vshll.u32 %v2814, 16
        %v3194 = vrot.slane %v3192, 5
        %v3195 = vor.u32 %v3191, %v3194
        %v3197 = vshrl.u32 %v3156, 16
        %v3199 = vrot.slane %v3197, 4
        %v3200 = vshll.u32 %v3156, 16
        %v3202 = vrot.slane %v3200, 5
        %v3203 = vor.u32 %v3199, %v3202
        %v3204 = vsel %vm1744, %v3195, %v3203
        %v3206 = vshrl.u32 %v2815, 16
        %v3208 = vrot.slane %v3206, 4
        %v3209 = vshll.u32 %v2815, 16
        %v3211 = vrot.slane %v3209, 5
        %v3212 = vor.u32 %v3208, %v3211
        %v3214 = vshrl.u32 %v3157, 16
        %v3216 = vrot.slane %v3214, 4
        %v3217 = vshll.u32 %v3157, 16
        %v3219 = vrot.slane %v3217, 5
        %v3220 = vor.u32 %v3216, %v3219
        %v3221 = vsel %vm1744, %v3212, %v3220
        %v3223 = vshrl.u32 %v2816, 16
        %v3225 = vrot.slane %v3223, 4
        %v3226 = vshll.u32 %v2816, 16
        %v3228 = vrot.slane %v3226, 5
        %v3229 = vor.u32 %v3225, %v3228
        %v3231 = vshrl.u32 %v3158, 16
        %v3233 = vrot.slane %v3231, 4
        %v3234 = vshll.u32 %v3158, 16
        %v3236 = vrot.slane %v3234, 5
        %v3237 = vor.u32 %v3233, %v3236
        %v3238 = vsel %vm1744, %v3229, %v3237
        %v3240 = vshrl.u32 %v2817, 16
        %v3242 = vrot.slane %v3240, 4
        %v3243 = vshll.u32 %v2817, 16
        %v3245 = vrot.slane %v3243, 5
        %v3246 = vor.u32 %v3242, %v3245
        %v3248 = vshrl.u32 %v3159, 16
        %v3250 = vrot.slane %v3248, 4
        %v3251 = vshll.u32 %v3159, 16
        %v3253 = vrot.slane %v3251, 5
        %v3254 = vor.u32 %v3250, %v3253
        %v3255 = vsel %vm1744, %v3246, %v3254
        %v3257 = vshrl.u32 %v2818, 16
        %v3259 = vrot.slane %v3257, 4
        %v3260 = vshll.u32 %v2818, 16
        %v3262 = vrot.slane %v3260, 5
        %v3263 = vor.u32 %v3259, %v3262
        %v3265 = vshrl.u32 %v3160, 16
        %v3267 = vrot.slane %v3265, 4
        %v3268 = vshll.u32 %v3160, 16
        %v3270 = vrot.slane %v3268, 5
        %v3271 = vor.u32 %v3267, %v3270
        %v3272 = vsel %vm1744, %v3263, %v3271
        %v3274 = vshrl.u32 %v2819, 16
        %v3276 = vrot.slane %v3274, 4
        %v3277 = vshll.u32 %v2819, 16
        %v3279 = vrot.slane %v3277, 5
        %v3280 = vor.u32 %v3276, %v3279
        %v3282 = vshrl.u32 %v3161, 16
        %v3284 = vrot.slane %v3282, 4
        %v3285 = vshll.u32 %v3161, 16
        %v3287 = vrot.slane %v3285, 5
        %v3288 = vor.u32 %v3284, %v3287
        %v3289 = vsel %vm1744, %v3280, %v3288
        %v3291 = vshrl.u32 %v2820, 16
        %v3293 = vrot.slane %v3291, 4
        %v3294 = vshll.u32 %v2820, 16
        %v3296 = vrot.slane %v3294, 5
        %v3297 = vor.u32 %v3293, %v3296
        %v3299 = vshrl.u32 %v3162, 16
        %v3301 = vrot.slane %v3299, 4
        %v3302 = vshll.u32 %v3162, 16
        %v3304 = vrot.slane %v3302, 5
        %v3305 = vor.u32 %v3301, %v3304
        %v3306 = vsel %vm1744, %v3297, %v3305
        %v3308 = vshrl.u32 %v2821, 16
        %v3310 = vrot.slane %v3308, 4
        %v3311 = vshll.u32 %v2821, 16
        %v3313 = vrot.slane %v3311, 5
        %v3314 = vor.u32 %v3310, %v3313
        %v3316 = vshrl.u32 %v3163, 16
        %v3318 = vrot.slane %v3316, 4
        %v3319 = vshll.u32 %v3163, 16
        %v3321 = vrot.slane %v3319, 5
        %v3322 = vor.u32 %v3318, %v3321
        %v3323 = vsel %vm1744, %v3314, %v3322
        %v3325 = vshrl.u32 %v2822, 16
        %v3327 = vrot.slane %v3325, 4
        %v3328 = vshll.u32 %v2822, 16
        %v3330 = vrot.slane %v3328, 5
        %v3331 = vor.u32 %v3327, %v3330
        %v3333 = vshrl.u32 %v3164, 16
        %v3335 = vrot.slane %v3333, 4
        %v3336 = vshll.u32 %v3164, 16
        %v3338 = vrot.slane %v3336, 5
        %v3339 = vor.u32 %v3335, %v3338
        %v3340 = vsel %vm1744, %v3331, %v3339
        %v3342 = vshrl.u32 %v2823, 16
        %v3344 = vrot.slane %v3342, 4
        %v3345 = vshll.u32 %v2823, 16
        %v3347 = vrot.slane %v3345, 5
        %v3348 = vor.u32 %v3344, %v3347
        %v3350 = vshrl.u32 %v3165, 16
        %v3352 = vrot.slane %v3350, 4
        %v3353 = vshll.u32 %v3165, 16
        %v3355 = vrot.slane %v3353, 5
        %v3356 = vor.u32 %v3352, %v3355
        %v3357 = vsel %vm1744, %v3348, %v3356
        %v3359 = vshrl.u32 %v2824, 16
        %v3361 = vrot.slane %v3359, 4
        %v3362 = vshll.u32 %v2824, 16
        %v3364 = vrot.slane %v3362, 5
        %v3365 = vor.u32 %v3361, %v3364
        %v3367 = vshrl.u32 %v3166, 16
        %v3369 = vrot.slane %v3367, 4
        %v3370 = vshll.u32 %v3166, 16
        %v3372 = vrot.slane %v3370, 5
        %v3373 = vor.u32 %v3369, %v3372
        %v3374 = vsel %vm1744, %v3365, %v3373
        %v3376 = vshrl.u32 %v2825, 16
        %v3378 = vrot.slane %v3376, 4
        %v3379 = vshll.u32 %v2825, 16
        %v3381 = vrot.slane %v3379, 5
        %v3382 = vor.u32 %v3378, %v3381
        %v3384 = vshrl.u32 %v3167, 16
        %v3386 = vrot.slane %v3384, 4
        %v3387 = vshll.u32 %v3167, 16
        %v3389 = vrot.slane %v3387, 5
        %v3390 = vor.u32 %v3386, %v3389
        %v3391 = vsel %vm1744, %v3382, %v3390
        %v3393 = vshrl.u32 %v2826, 16
        %v3395 = vrot.slane %v3393, 4
        %v3396 = vshll.u32 %v2826, 16
        %v3398 = vrot.slane %v3396, 5
        %v3399 = vor.u32 %v3395, %v3398
        %v3401 = vshrl.u32 %v3168, 16
        %v3403 = vrot.slane %v3401, 4
        %v3404 = vshll.u32 %v3168, 16
        %v3406 = vrot.slane %v3404, 5
        %v3407 = vor.u32 %v3403, %v3406
        %v3408 = vsel %vm1744, %v3399, %v3407
        %v3410 = vshrl.u32 %v2827, 16
        %v3412 = vrot.slane %v3410, 4
        %v3413 = vshll.u32 %v2827, 16
        %v3415 = vrot.slane %v3413, 5
        %v3416 = vor.u32 %v3412, %v3415
        %v3418 = vshrl.u32 %v3169, 16
        %v3420 = vrot.slane %v3418, 4
        %v3421 = vshll.u32 %v3169, 16
        %v3423 = vrot.slane %v3421, 5
        %v3424 = vor.u32 %v3420, %v3423
        %v3425 = vsel %vm1744, %v3416, %v3424
        %v3427 = vshrl.u32 %v2828, 16
        %v3429 = vrot.slane %v3427, 4
        %v3430 = vshll.u32 %v2828, 16
        %v3432 = vrot.slane %v3430, 5
        %v3433 = vor.u32 %v3429, %v3432
        %v3435 = vshrl.u32 %v3170, 16
        %v3437 = vrot.slane %v3435, 4
        %v3438 = vshll.u32 %v3170, 16
        %v3440 = vrot.slane %v3438, 5
        %v3441 = vor.u32 %v3437, %v3440
        %v3442 = vsel %vm1744, %v3433, %v3441
        %s3443 = scalar_lea.vmem [#allocation12], 10
        %v3444 = vld [vmem:[%s3443] sm:$0x3]
        %v3446 = vsel %vm1299, %v3187, 0
        %v3449 = vsel %vm1299, %v3204, 0
        %v3452 = vsel %vm1299, %v3221, 0
        %v3455 = vsel %vm1299, %v3238, 0
        %v3458 = vsel %vm1299, %v3255, 0
        %v3461 = vsel %vm1299, %v3272, 0
        %v3464 = vsel %vm1299, %v3289, 0
        %v3467 = vsel %vm1299, %v3306, 0
        %v3470 = vsel %vm1299, %v3323, 0
        %v3473 = vsel %vm1299, %v3340, 0
        %v3476 = vsel %vm1299, %v3357, 0
        %v3479 = vsel %vm1299, %v3374, 0
        %v3482 = vsel %vm1299, %v3391, 0
        %v3485 = vsel %vm1299, %v3408, 0
        %v3488 = vsel %vm1299, %v3425, 0
        %v3491 = vsel %vm1299, %v3442, 0
        %v3494 = vand.u32 %v3444, %v1351
        %3496 = vmatprep.subr.bf16.mxu0 0
        %3497 = vmatpush1.bf16.msra.mxu0 %v3494
        %3498 = vmatprep.subr.bf16.mxu0 0
        %3499 = vmatpush1.bf16.msra.mxu0 0
        %3500 = vmatprep.subr.bf16.mxu0 0
        %3501 = vmatpush1.bf16.msra.mxu0 0
        %3502 = vmatprep.subr.bf16.mxu0 0
        %3503 = vmatpush1.bf16.msra.mxu0 0
        %3504 = vmatprep.subr.bf16.mxu0 0
        %3505 = vmatpush1.bf16.msra.mxu0 0
        %3506 = vmatprep.subr.bf16.mxu0 0
        %3507 = vmatpush1.bf16.msra.mxu0 0
        %3508 = vmatprep.subr.bf16.mxu0 0
        %3509 = vmatpush1.bf16.msra.mxu0 0
        %3510 = vmatprep.subr.bf16.mxu0 0
        %3511 = vmatpush1.bf16.msra.mxu0 0
        %3512 = vmatprep.subr.bf16.mxu0 0
        %3513 = vmatpush1.bf16.msra.mxu0 0
        %3514 = vmatprep.subr.bf16.mxu0 0
        %3515 = vmatpush1.bf16.msra.mxu0 0
        %3516 = vmatprep.subr.bf16.mxu0 0
        %3517 = vmatpush1.bf16.msra.mxu0 0
        %3518 = vmatprep.subr.bf16.mxu0 0
        %3519 = vmatpush1.bf16.msra.mxu0 0
        %3520 = vmatprep.subr.bf16.mxu0 0
        %3521 = vmatpush1.bf16.msra.mxu0 0
        %3522 = vmatprep.subr.bf16.mxu0 0
        %3523 = vmatpush1.bf16.msra.mxu0 0
        %3524 = vmatprep.subr.bf16.mxu0 0
        %3525 = vmatpush1.bf16.msra.mxu0 0
        %3526 = vmatprep.subr.bf16.mxu0 0
        %3527 = vmatpush1.bf16.msra.mxu0 0
        %3528 = vmatprep.mubr.bf16.mxu0 0
        %3529 = vmatmul.mubr.bf16.gmra.mrb[0].mxu0 %v3446
        %v3530 = vpop.f32.mrb[0].mxu0
        %v3531 = vadd.f32 0.0, %v3530
        %v3532 = vpop.f32.mrb[0].mxu0
        %v3533 = vpop.f32.mrb[0].mxu0
        %v3534 = vadd.f32 0.0, %v3533
        %v3535 = vpop.f32.mrb[0].mxu0
        %3536 = vmatprep.mubr.bf16.mxu0 0
        %3537 = vmatmul.mubr.bf16.gmra.mrb[0].mxu0 %v3449
        %v3538 = vpop.f32.mrb[0].mxu0
        %v3539 = vadd.f32 0.0, %v3538
        %v3540 = vpop.f32.mrb[0].mxu0
        %v3541 = vpop.f32.mrb[0].mxu0
        %v3542 = vadd.f32 0.0, %v3541
        %v3543 = vpop.f32.mrb[0].mxu0
        %3544 = vmatprep.mubr.bf16.mxu0 0
        %3545 = vmatmul.mubr.bf16.gmra.mrb[0].mxu0 %v3452
        %v3546 = vpop.f32.mrb[0].mxu0
        %v3547 = vadd.f32 0.0, %v3546
        %v3548 = vpop.f32.mrb[0].mxu0
        %v3549 = vpop.f32.mrb[0].mxu0
        %v3550 = vadd.f32 0.0, %v3549
        %v3551 = vpop.f32.mrb[0].mxu0
        %3552 = vmatprep.mubr.bf16.mxu0 0
        %3553 = vmatmul.mubr.bf16.gmra.mrb[0].mxu0 %v3455
        %v3554 = vpop.f32.mrb[0].mxu0
        %v3555 = vadd.f32 0.0, %v3554
        %v3556 = vpop.f32.mrb[0].mxu0
        %v3557 = vpop.f32.mrb[0].mxu0
        %v3558 = vadd.f32 0.0, %v3557
        %v3559 = vpop.f32.mrb[0].mxu0
        %3560 = vmatprep.mubr.bf16.mxu0 0
        %3561 = vmatmul.mubr.bf16.gmra.mrb[0].mxu0 %v3458
        %v3562 = vpop.f32.mrb[0].mxu0
        %v3563 = vadd.f32 0.0, %v3562
        %v3564 = vpop.f32.mrb[0].mxu0
        %v3565 = vpop.f32.mrb[0].mxu0
        %v3566 = vadd.f32 0.0, %v3565
        %v3567 = vpop.f32.mrb[0].mxu0
        %3568 = vmatprep.mubr.bf16.mxu0 0
        %3569 = vmatmul.mubr.bf16.gmra.mrb[0].mxu0 %v3461
        %v3570 = vpop.f32.mrb[0].mxu0
        %v3571 = vadd.f32 0.0, %v3570
        %v3572 = vpop.f32.mrb[0].mxu0
        %v3573 = vpop.f32.mrb[0].mxu0
        %v3574 = vadd.f32 0.0, %v3573
        %v3575 = vpop.f32.mrb[0].mxu0
        %3576 = vmatprep.mubr.bf16.mxu0 0
        %3577 = vmatmul.mubr.bf16.gmra.mrb[0].mxu0 %v3464
        %v3578 = vpop.f32.mrb[0].mxu0
        %v3579 = vadd.f32 0.0, %v3578
        %v3580 = vpop.f32.mrb[0].mxu0
        %v3581 = vpop.f32.mrb[0].mxu0
        %v3582 = vadd.f32 0.0, %v3581
        %v3583 = vpop.f32.mrb[0].mxu0
        %3584 = vmatprep.mubr.bf16.mxu0 0
        %3585 = vmatmul.mubr.bf16.gmra.mrb[0].mxu0 %v3467
        %v3586 = vpop.f32.mrb[0].mxu0
        %v3587 = vadd.f32 0.0, %v3586
        %v3588 = vpop.f32.mrb[0].mxu0
        %v3589 = vpop.f32.mrb[0].mxu0
        %v3590 = vadd.f32 0.0, %v3589
        %v3591 = vpop.f32.mrb[0].mxu0
        %3592 = vmatprep.mubr.bf16.mxu0 0
        %3593 = vmatmul.mubr.bf16.gmra.mrb[0].mxu0 %v3470
        %v3594 = vpop.f32.mrb[0].mxu0
        %v3595 = vadd.f32 0.0, %v3594
        %v3596 = vpop.f32.mrb[0].mxu0
        %v3597 = vpop.f32.mrb[0].mxu0
        %v3598 = vadd.f32 0.0, %v3597
        %v3599 = vpop.f32.mrb[0].mxu0
        %3600 = vmatprep.mubr.bf16.mxu0 0
        %3601 = vmatmul.mubr.bf16.gmra.mrb[0].mxu0 %v3473
        %v3602 = vpop.f32.mrb[0].mxu0
        %v3603 = vadd.f32 0.0, %v3602
        %v3604 = vpop.f32.mrb[0].mxu0
        %v3605 = vpop.f32.mrb[0].mxu0
        %v3606 = vadd.f32 0.0, %v3605
        %v3607 = vpop.f32.mrb[0].mxu0
        %3608 = vmatprep.mubr.bf16.mxu0 0
        %3609 = vmatmul.mubr.bf16.gmra.mrb[0].mxu0 %v3476
        %v3610 = vpop.f32.mrb[0].mxu0
        %v3611 = vadd.f32 0.0, %v3610
        %v3612 = vpop.f32.mrb[0].mxu0
        %v3613 = vpop.f32.mrb[0].mxu0
        %v3614 = vadd.f32 0.0, %v3613
        %v3615 = vpop.f32.mrb[0].mxu0
        %3616 = vmatprep.mubr.bf16.mxu0 0
        %3617 = vmatmul.mubr.bf16.gmra.mrb[0].mxu0 %v3479
        %v3618 = vpop.f32.mrb[0].mxu0
        %v3619 = vadd.f32 0.0, %v3618
        %v3620 = vpop.f32.mrb[0].mxu0
        %v3621 = vpop.f32.mrb[0].mxu0
        %v3622 = vadd.f32 0.0, %v3621
        %v3623 = vpop.f32.mrb[0].mxu0
        %3624 = vmatprep.mubr.bf16.mxu0 0
        %3625 = vmatmul.mubr.bf16.gmra.mrb[0].mxu0 %v3482
        %v3626 = vpop.f32.mrb[0].mxu0
        %v3627 = vadd.f32 0.0, %v3626
        %v3628 = vpop.f32.mrb[0].mxu0
        %v3629 = vpop.f32.mrb[0].mxu0
        %v3630 = vadd.f32 0.0, %v3629
        %v3631 = vpop.f32.mrb[0].mxu0
        %3632 = vmatprep.mubr.bf16.mxu0 0
        %3633 = vmatmul.mubr.bf16.gmra.mrb[0].mxu0 %v3485
        %v3634 = vpop.f32.mrb[0].mxu0
        %v3635 = vadd.f32 0.0, %v3634
        %v3636 = vpop.f32.mrb[0].mxu0
        %v3637 = vpop.f32.mrb[0].mxu0
        %v3638 = vadd.f32 0.0, %v3637
        %v3639 = vpop.f32.mrb[0].mxu0
        %3640 = vmatprep.mubr.bf16.mxu0 0
        %3641 = vmatmul.mubr.bf16.gmra.mrb[0].mxu0 %v3488
        %v3642 = vpop.f32.mrb[0].mxu0
        %v3643 = vadd.f32 0.0, %v3642
        %v3644 = vpop.f32.mrb[0].mxu0
        %v3645 = vpop.f32.mrb[0].mxu0
        %v3646 = vadd.f32 0.0, %v3645
        %v3647 = vpop.f32.mrb[0].mxu0
        %3648 = vmatprep.mubr.bf16.mxu0 0
        %3649 = vmatmul.mubr.bf16.gmra.mrb[0].mxu0 %v3491
        %v3650 = vpop.f32.mrb[0].mxu0
        %v3651 = vadd.f32 0.0, %v3650
        %v3652 = vpop.f32.mrb[0].mxu0
        %v3653 = vpop.f32.mrb[0].mxu0
        %v3654 = vadd.f32 0.0, %v3653
        %v3655 = vpop.f32.mrb[0].mxu0
        %3656 = vdwg.mxu0
        %v3657 = vadd.f32 %v3123, %v3531
        %v3658 = vadd.f32 %v3124, %v3534
        %v3659 = vadd.f32 %v3125, %v3539
        %v3660 = vadd.f32 %v3126, %v3542
        %v3661 = vadd.f32 %v3127, %v3547
        %v3662 = vadd.f32 %v3128, %v3550
        %v3663 = vadd.f32 %v3129, %v3555
        %v3664 = vadd.f32 %v3130, %v3558
        %v3665 = vadd.f32 %v3131, %v3563
        %v3666 = vadd.f32 %v3132, %v3566
        %v3667 = vadd.f32 %v3133, %v3571
        %v3668 = vadd.f32 %v3134, %v3574
        %v3669 = vadd.f32 %v3135, %v3579
        %v3670 = vadd.f32 %v3136, %v3582
        %v3671 = vadd.f32 %v3137, %v3587
        %v3672 = vadd.f32 %v3138, %v3590
        %v3673 = vadd.f32 %v3139, %v3595
        %v3674 = vadd.f32 %v3140, %v3598
        %v3675 = vadd.f32 %v3141, %v3603
        %v3676 = vadd.f32 %v3142, %v3606
        %v3677 = vadd.f32 %v3143, %v3611
        %v3678 = vadd.f32 %v3144, %v3614
        %v3679 = vadd.f32 %v3145, %v3619
        %v3680 = vadd.f32 %v3146, %v3622
        %v3681 = vadd.f32 %v3147, %v3627
        %v3682 = vadd.f32 %v3148, %v3630
        %v3683 = vadd.f32 %v3149, %v3635
        %v3684 = vadd.f32 %v3150, %v3638
        %v3685 = vadd.f32 %v3151, %v3643
        %v3686 = vadd.f32 %v3152, %v3646
        %v3687 = vadd.f32 %v3153, %v3651
        %v3688 = vadd.f32 %v3154, %v3654
        %s3689 = scalar_lea.vmem [#allocation2], 32
        %v3690 = vld [vmem:[%s3689] sm:$0xf8]
        %v3691 = vld [vmem:[%s3689 + $0x8] sm:$0xf]
        %v3692 = vld [vmem:[%s3689 + $0x10] sm:$0xf8]
        %v3693 = vld [vmem:[%s3689 + $0x18] sm:$0xf]
        %v3694 = vld [vmem:[%s3689 + $0x20] sm:$0xf8]
        %v3695 = vld [vmem:[%s3689 + $0x28] sm:$0xf]
        %v3696 = vld [vmem:[%s3689 + $0x30] sm:$0xf8]
        %v3697 = vld [vmem:[%s3689 + $0x38] sm:$0xf]
        %v3698 = vld [vmem:[%s3689 + $0x40] sm:$0xf8]
        %v3699 = vld [vmem:[%s3689 + $0x48] sm:$0xf]
        %v3700 = vld [vmem:[%s3689 + $0x50] sm:$0xf8]
        %v3701 = vld [vmem:[%s3689 + $0x58] sm:$0xf]
        %v3702 = vld [vmem:[%s3689 + $0x60] sm:$0xf8]
        %v3703 = vld [vmem:[%s3689 + $0x68] sm:$0xf]
        %v3704 = vld [vmem:[%s3689 + $0x70] sm:$0xf8]
        %v3705 = vld [vmem:[%s3689 + $0x78] sm:$0xf]
        %v3706 = vld [vmem:[%s3689 + $0x80] sm:$0xf8]
        %v3707 = vld [vmem:[%s3689 + $0x88] sm:$0xf]
        %v3708 = vld [vmem:[%s3689 + $0x90] sm:$0xf8]
        %v3709 = vld [vmem:[%s3689 + $0x98] sm:$0xf]
        %v3710 = vld [vmem:[%s3689 + $0xa0] sm:$0xf8]
        %v3711 = vld [vmem:[%s3689 + $0xa8] sm:$0xf]
        %v3712 = vld [vmem:[%s3689 + $0xb0] sm:$0xf8]
        %v3713 = vld [vmem:[%s3689 + $0xb8] sm:$0xf]
        %v3714 = vld [vmem:[%s3689 + $0xc0] sm:$0xf8]
        %v3715 = vld [vmem:[%s3689 + $0xc8] sm:$0xf]
        %v3716 = vld [vmem:[%s3689 + $0xd0] sm:$0xf8]
        %v3717 = vld [vmem:[%s3689 + $0xd8] sm:$0xf]
        %v3718 = vld [vmem:[%s3689 + $0xe0] sm:$0xf8]
        %v3719 = vld [vmem:[%s3689 + $0xe8] sm:$0xf]
        %v3720 = vld [vmem:[%s3689 + $0xf0] sm:$0xf8]
        %v3721 = vld [vmem:[%s3689 + $0xf8] sm:$0xf]
        %v3723 = vshrl.u32 %v3690, 16
        %v3725 = vrot.slane %v3723, 3
        %v3726 = vshll.u32 %v3690, 16
        %v3728 = vrot.slane %v3726, 4
        %v3729 = vor.u32 %v3725, %v3728
        %v3731 = vshrl.u32 %v3691, 16
        %v3733 = vrot.slane %v3731, 3
        %v3734 = vshll.u32 %v3691, 16
        %v3736 = vrot.slane %v3734, 4
        %v3737 = vor.u32 %v3733, %v3736
        %v3738 = vsel %vm839, %v3729, %v3737
        %v3740 = vshrl.u32 %v3692, 16
        %v3742 = vrot.slane %v3740, 3
        %v3743 = vshll.u32 %v3692, 16
        %v3745 = vrot.slane %v3743, 4
        %v3746 = vor.u32 %v3742, %v3745
        %v3748 = vshrl.u32 %v3693, 16
        %v3750 = vrot.slane %v3748, 3
        %v3751 = vshll.u32 %v3693, 16
        %v3753 = vrot.slane %v3751, 4
        %v3754 = vor.u32 %v3750, %v3753
        %v3755 = vsel %vm839, %v3746, %v3754
        %v3757 = vshrl.u32 %v3694, 16
        %v3759 = vrot.slane %v3757, 3
        %v3760 = vshll.u32 %v3694, 16
        %v3762 = vrot.slane %v3760, 4
        %v3763 = vor.u32 %v3759, %v3762
        %v3765 = vshrl.u32 %v3695, 16
        %v3767 = vrot.slane %v3765, 3
        %v3768 = vshll.u32 %v3695, 16
        %v3770 = vrot.slane %v3768, 4
        %v3771 = vor.u32 %v3767, %v3770
        %v3772 = vsel %vm839, %v3763, %v3771
        %v3774 = vshrl.u32 %v3696, 16
        %v3776 = vrot.slane %v3774, 3
        %v3777 = vshll.u32 %v3696, 16
        %v3779 = vrot.slane %v3777, 4
        %v3780 = vor.u32 %v3776, %v3779
        %v3782 = vshrl.u32 %v3697, 16
        %v3784 = vrot.slane %v3782, 3
        %v3785 = vshll.u32 %v3697, 16
        %v3787 = vrot.slane %v3785, 4
        %v3788 = vor.u32 %v3784, %v3787
        %v3789 = vsel %vm839, %v3780, %v3788
        %v3791 = vshrl.u32 %v3698, 16
        %v3793 = vrot.slane %v3791, 3
        %v3794 = vshll.u32 %v3698, 16
        %v3796 = vrot.slane %v3794, 4
        %v3797 = vor.u32 %v3793, %v3796
        %v3799 = vshrl.u32 %v3699, 16
        %v3801 = vrot.slane %v3799, 3
        %v3802 = vshll.u32 %v3699, 16
        %v3804 = vrot.slane %v3802, 4
        %v3805 = vor.u32 %v3801, %v3804
        %v3806 = vsel %vm839, %v3797, %v3805
        %v3808 = vshrl.u32 %v3700, 16
        %v3810 = vrot.slane %v3808, 3
        %v3811 = vshll.u32 %v3700, 16
        %v3813 = vrot.slane %v3811, 4
        %v3814 = vor.u32 %v3810, %v3813
        %v3816 = vshrl.u32 %v3701, 16
        %v3818 = vrot.slane %v3816, 3
        %v3819 = vshll.u32 %v3701, 16
        %v3821 = vrot.slane %v3819, 4
        %v3822 = vor.u32 %v3818, %v3821
        %v3823 = vsel %vm839, %v3814, %v3822
        %v3825 = vshrl.u32 %v3702, 16
        %v3827 = vrot.slane %v3825, 3
        %v3828 = vshll.u32 %v3702, 16
        %v3830 = vrot.slane %v3828, 4
        %v3831 = vor.u32 %v3827, %v3830
        %v3833 = vshrl.u32 %v3703, 16
        %v3835 = vrot.slane %v3833, 3
        %v3836 = vshll.u32 %v3703, 16
        %v3838 = vrot.slane %v3836, 4
        %v3839 = vor.u32 %v3835, %v3838
        %v3840 = vsel %vm839, %v3831, %v3839
        %v3842 = vshrl.u32 %v3704, 16
        %v3844 = vrot.slane %v3842, 3
        %v3845 = vshll.u32 %v3704, 16
        %v3847 = vrot.slane %v3845, 4
        %v3848 = vor.u32 %v3844, %v3847
        %v3850 = vshrl.u32 %v3705, 16
        %v3852 = vrot.slane %v3850, 3
        %v3853 = vshll.u32 %v3705, 16
        %v3855 = vrot.slane %v3853, 4
        %v3856 = vor.u32 %v3852, %v3855
        %v3857 = vsel %vm839, %v3848, %v3856
        %v3859 = vshrl.u32 %v3706, 16
        %v3861 = vrot.slane %v3859, 3
        %v3862 = vshll.u32 %v3706, 16
        %v3864 = vrot.slane %v3862, 4
        %v3865 = vor.u32 %v3861, %v3864
        %v3867 = vshrl.u32 %v3707, 16
        %v3869 = vrot.slane %v3867, 3
        %v3870 = vshll.u32 %v3707, 16
        %v3872 = vrot.slane %v3870, 4
        %v3873 = vor.u32 %v3869, %v3872
        %v3874 = vsel %vm839, %v3865, %v3873
        %v3876 = vshrl.u32 %v3708, 16
        %v3878 = vrot.slane %v3876, 3
        %v3879 = vshll.u32 %v3708, 16
        %v3881 = vrot.slane %v3879, 4
        %v3882 = vor.u32 %v3878, %v3881
        %v3884 = vshrl.u32 %v3709, 16
        %v3886 = vrot.slane %v3884, 3
        %v3887 = vshll.u32 %v3709, 16
        %v3889 = vrot.slane %v3887, 4
        %v3890 = vor.u32 %v3886, %v3889
        %v3891 = vsel %vm839, %v3882, %v3890
        %v3893 = vshrl.u32 %v3710, 16
        %v3895 = vrot.slane %v3893, 3
        %v3896 = vshll.u32 %v3710, 16
        %v3898 = vrot.slane %v3896, 4
        %v3899 = vor.u32 %v3895, %v3898
        %v3901 = vshrl.u32 %v3711, 16
        %v3903 = vrot.slane %v3901, 3
        %v3904 = vshll.u32 %v3711, 16
        %v3906 = vrot.slane %v3904, 4
        %v3907 = vor.u32 %v3903, %v3906
        %v3908 = vsel %vm839, %v3899, %v3907
        %v3910 = vshrl.u32 %v3712, 16
        %v3912 = vrot.slane %v3910, 3
        %v3913 = vshll.u32 %v3712, 16
        %v3915 = vrot.slane %v3913, 4
        %v3916 = vor.u32 %v3912, %v3915
        %v3918 = vshrl.u32 %v3713, 16
        %v3920 = vrot.slane %v3918, 3
        %v3921 = vshll.u32 %v3713, 16
        %v3923 = vrot.slane %v3921, 4
        %v3924 = vor.u32 %v3920, %v3923
        %v3925 = vsel %vm839, %v3916, %v3924
        %v3927 = vshrl.u32 %v3714, 16
        %v3929 = vrot.slane %v3927, 3
        %v3930 = vshll.u32 %v3714, 16
        %v3932 = vrot.slane %v3930, 4
        %v3933 = vor.u32 %v3929, %v3932
        %v3935 = vshrl.u32 %v3715, 16
        %v3937 = vrot.slane %v3935, 3
        %v3938 = vshll.u32 %v3715, 16
        %v3940 = vrot.slane %v3938, 4
        %v3941 = vor.u32 %v3937, %v3940
        %v3942 = vsel %vm839, %v3933, %v3941
        %v3944 = vshrl.u32 %v3716, 16
        %v3946 = vrot.slane %v3944, 3
        %v3947 = vshll.u32 %v3716, 16
        %v3949 = vrot.slane %v3947, 4
        %v3950 = vor.u32 %v3946, %v3949
        %v3952 = vshrl.u32 %v3717, 16
        %v3954 = vrot.slane %v3952, 3
        %v3955 = vshll.u32 %v3717, 16
        %v3957 = vrot.slane %v3955, 4
        %v3958 = vor.u32 %v3954, %v3957
        %v3959 = vsel %vm839, %v3950, %v3958
        %v3961 = vshrl.u32 %v3718, 16
        %v3963 = vrot.slane %v3961, 3
        %v3964 = vshll.u32 %v3718, 16
        %v3966 = vrot.slane %v3964, 4
        %v3967 = vor.u32 %v3963, %v3966
        %v3969 = vshrl.u32 %v3719, 16
        %v3971 = vrot.slane %v3969, 3
        %v3972 = vshll.u32 %v3719, 16
        %v3974 = vrot.slane %v3972, 4
        %v3975 = vor.u32 %v3971, %v3974
        %v3976 = vsel %vm839, %v3967, %v3975
        %v3978 = vshrl.u32 %v3720, 16
        %v3980 = vrot.slane %v3978, 3
        %v3981 = vshll.u32 %v3720, 16
        %v3983 = vrot.slane %v3981, 4
        %v3984 = vor.u32 %v3980, %v3983
        %v3986 = vshrl.u32 %v3721, 16
        %v3988 = vrot.slane %v3986, 3
        %v3989 = vshll.u32 %v3721, 16
        %v3991 = vrot.slane %v3989, 4
        %v3992 = vor.u32 %v3988, %v3991
        %v3993 = vsel %vm839, %v3984, %v3992
        %s3994 = scalar_lea.vmem [#allocation12], 12
        %v3995 = vld [vmem:[%s3994] sm:$0x3]
        %v3997 = vsel %vm1299, %v3738, 0
        %v4000 = vsel %vm1299, %v3755, 0
        %v4003 = vsel %vm1299, %v3772, 0
        %v4006 = vsel %vm1299, %v3789, 0
        %v4009 = vsel %vm1299, %v3806, 0
        %v4012 = vsel %vm1299, %v3823, 0
        %v4015 = vsel %vm1299, %v3840, 0
        %v4018 = vsel %vm1299, %v3857, 0
        %v4021 = vsel %vm1299, %v3874, 0
        %v4024 = vsel %vm1299, %v3891, 0
        %v4027 = vsel %vm1299, %v3908, 0
        %v4030 = vsel %vm1299, %v3925, 0
        %v4033 = vsel %vm1299, %v3942, 0
        %v4036 = vsel %vm1299, %v3959, 0
        %v4039 = vsel %vm1299, %v3976, 0
        %v4042 = vsel %vm1299, %v3993, 0
        %v4045 = vand.u32 %v3995, %v1351
        %4047 = vmatprep.subr.bf16.mxu0 0
        %4048 = vmatpush1.bf16.msra.mxu0 %v4045
        %4049 = vmatprep.subr.bf16.mxu0 0
        %4050 = vmatpush1.bf16.msra.mxu0 0
        %4051 = vmatprep.subr.bf16.mxu0 0
        %4052 = vmatpush1.bf16.msra.mxu0 0
        %4053 = vmatprep.subr.bf16.mxu0 0
        %4054 = vmatpush1.bf16.msra.mxu0 0
        %4055 = vmatprep.subr.bf16.mxu0 0
        %4056 = vmatpush1.bf16.msra.mxu0 0
        %4057 = vmatprep.subr.bf16.mxu0 0
        %4058 = vmatpush1.bf16.msra.mxu0 0
        %4059 = vmatprep.subr.bf16.mxu0 0
        %4060 = vmatpush1.bf16.msra.mxu0 0
        %4061 = vmatprep.subr.bf16.mxu0 0
        %4062 = vmatpush1.bf16.msra.mxu0 0
        %4063 = vmatprep.subr.bf16.mxu0 0
        %4064 = vmatpush1.bf16.msra.mxu0 0
        %4065 = vmatprep.subr.bf16.mxu0 0
        %4066 = vmatpush1.bf16.msra.mxu0 0
        %4067 = vmatprep.subr.bf16.mxu0 0
        %4068 = vmatpush1.bf16.msra.mxu0 0
        %4069 = vmatprep.subr.bf16.mxu0 0
        %4070 = vmatpush1.bf16.msra.mxu0 0
        %4071 = vmatprep.subr.bf16.mxu0 0
        %4072 = vmatpush1.bf16.msra.mxu0 0
        %4073 = vmatprep.subr.bf16.mxu0 0
        %4074 = vmatpush1.bf16.msra.mxu0 0
        %4075 = vmatprep.subr.bf16.mxu0 0
        %4076 = vmatpush1.bf16.msra.mxu0 0
        %4077 = vmatprep.subr.bf16.mxu0 0
        %4078 = vmatpush1.bf16.msra.mxu0 0
        %4079 = vmatprep.mubr.bf16.mxu0 0
        %4080 = vmatmul.mubr.bf16.gmra.mrb[0].mxu0 %v3997
        %v4081 = vpop.f32.mrb[0].mxu0
        %v4082 = vadd.f32 0.0, %v4081
        %v4083 = vpop.f32.mrb[0].mxu0
        %v4084 = vpop.f32.mrb[0].mxu0
        %v4085 = vadd.f32 0.0, %v4084
        %v4086 = vpop.f32.mrb[0].mxu0
        %4087 = vmatprep.mubr.bf16.mxu0 0
        %4088 = vmatmul.mubr.bf16.gmra.mrb[0].mxu0 %v4000
        %v4089 = vpop.f32.mrb[0].mxu0
        %v4090 = vadd.f32 0.0, %v4089
        %v4091 = vpop.f32.mrb[0].mxu0
        %v4092 = vpop.f32.mrb[0].mxu0
        %v4093 = vadd.f32 0.0, %v4092
        %v4094 = vpop.f32.mrb[0].mxu0
        %4095 = vmatprep.mubr.bf16.mxu0 0
        %4096 = vmatmul.mubr.bf16.gmra.mrb[0].mxu0 %v4003
        %v4097 = vpop.f32.mrb[0].mxu0
        %v4098 = vadd.f32 0.0, %v4097
        %v4099 = vpop.f32.mrb[0].mxu0
        %v4100 = vpop.f32.mrb[0].mxu0
        %v4101 = vadd.f32 0.0, %v4100
        %v4102 = vpop.f32.mrb[0].mxu0
        %4103 = vmatprep.mubr.bf16.mxu0 0
        %4104 = vmatmul.mubr.bf16.gmra.mrb[0].mxu0 %v4006
        %v4105 = vpop.f32.mrb[0].mxu0
        %v4106 = vadd.f32 0.0, %v4105
        %v4107 = vpop.f32.mrb[0].mxu0
        %v4108 = vpop.f32.mrb[0].mxu0
        %v4109 = vadd.f32 0.0, %v4108
        %v4110 = vpop.f32.mrb[0].mxu0
        %4111 = vmatprep.mubr.bf16.mxu0 0
        %4112 = vmatmul.mubr.bf16.gmra.mrb[0].mxu0 %v4009
        %v4113 = vpop.f32.mrb[0].mxu0
        %v4114 = vadd.f32 0.0, %v4113
        %v4115 = vpop.f32.mrb[0].mxu0
        %v4116 = vpop.f32.mrb[0].mxu0
        %v4117 = vadd.f32 0.0, %v4116
        %v4118 = vpop.f32.mrb[0].mxu0
        %4119 = vmatprep.mubr.bf16.mxu0 0
        %4120 = vmatmul.mubr.bf16.gmra.mrb[0].mxu0 %v4012
        %v4121 = vpop.f32.mrb[0].mxu0
        %v4122 = vadd.f32 0.0, %v4121
        %v4123 = vpop.f32.mrb[0].mxu0
        %v4124 = vpop.f32.mrb[0].mxu0
        %v4125 = vadd.f32 0.0, %v4124
        %v4126 = vpop.f32.mrb[0].mxu0
        %4127 = vmatprep.mubr.bf16.mxu0 0
        %4128 = vmatmul.mubr.bf16.gmra.mrb[0].mxu0 %v4015
        %v4129 = vpop.f32.mrb[0].mxu0
        %v4130 = vadd.f32 0.0, %v4129
        %v4131 = vpop.f32.mrb[0].mxu0
        %v4132 = vpop.f32.mrb[0].mxu0
        %v4133 = vadd.f32 0.0, %v4132
        %v4134 = vpop.f32.mrb[0].mxu0
        %4135 = vmatprep.mubr.bf16.mxu0 0
        %4136 = vmatmul.mubr.bf16.gmra.mrb[0].mxu0 %v4018
        %v4137 = vpop.f32.mrb[0].mxu0
        %v4138 = vadd.f32 0.0, %v4137
        %v4139 = vpop.f32.mrb[0].mxu0
        %v4140 = vpop.f32.mrb[0].mxu0
        %v4141 = vadd.f32 0.0, %v4140
        %v4142 = vpop.f32.mrb[0].mxu0
        %4143 = vmatprep.mubr.bf16.mxu0 0
        %4144 = vmatmul.mubr.bf16.gmra.mrb[0].mxu0 %v4021
        %v4145 = vpop.f32.mrb[0].mxu0
        %v4146 = vadd.f32 0.0, %v4145
        %v4147 = vpop.f32.mrb[0].mxu0
        %v4148 = vpop.f32.mrb[0].mxu0
        %v4149 = vadd.f32 0.0, %v4148
        %v4150 = vpop.f32.mrb[0].mxu0
        %4151 = vmatprep.mubr.bf16.mxu0 0
        %4152 = vmatmul.mubr.bf16.gmra.mrb[0].mxu0 %v4024
        %v4153 = vpop.f32.mrb[0].mxu0
        %v4154 = vadd.f32 0.0, %v4153
        %v4155 = vpop.f32.mrb[0].mxu0
        %v4156 = vpop.f32.mrb[0].mxu0
        %v4157 = vadd.f32 0.0, %v4156
        %v4158 = vpop.f32.mrb[0].mxu0
        %4159 = vmatprep.mubr.bf16.mxu0 0
        %4160 = vmatmul.mubr.bf16.gmra.mrb[0].mxu0 %v4027
        %v4161 = vpop.f32.mrb[0].mxu0
        %v4162 = vadd.f32 0.0, %v4161
        %v4163 = vpop.f32.mrb[0].mxu0
        %v4164 = vpop.f32.mrb[0].mxu0
        %v4165 = vadd.f32 0.0, %v4164
        %v4166 = vpop.f32.mrb[0].mxu0
        %4167 = vmatprep.mubr.bf16.mxu0 0
        %4168 = vmatmul.mubr.bf16.gmra.mrb[0].mxu0 %v4030
        %v4169 = vpop.f32.mrb[0].mxu0
        %v4170 = vadd.f32 0.0, %v4169
        %v4171 = vpop.f32.mrb[0].mxu0
        %v4172 = vpop.f32.mrb[0].mxu0
        %v4173 = vadd.f32 0.0, %v4172
        %v4174 = vpop.f32.mrb[0].mxu0
        %4175 = vmatprep.mubr.bf16.mxu0 0
        %4176 = vmatmul.mubr.bf16.gmra.mrb[0].mxu0 %v4033
        %v4177 = vpop.f32.mrb[0].mxu0
        %v4178 = vadd.f32 0.0, %v4177
        %v4179 = vpop.f32.mrb[0].mxu0
        %v4180 = vpop.f32.mrb[0].mxu0
        %v4181 = vadd.f32 0.0, %v4180
        %v4182 = vpop.f32.mrb[0].mxu0
        %4183 = vmatprep.mubr.bf16.mxu0 0
        %4184 = vmatmul.mubr.bf16.gmra.mrb[0].mxu0 %v4036
        %v4185 = vpop.f32.mrb[0].mxu0
        %v4186 = vadd.f32 0.0, %v4185
        %v4187 = vpop.f32.mrb[0].mxu0
        %v4188 = vpop.f32.mrb[0].mxu0
        %v4189 = vadd.f32 0.0, %v4188
        %v4190 = vpop.f32.mrb[0].mxu0
        %4191 = vmatprep.mubr.bf16.mxu0 0
        %4192 = vmatmul.mubr.bf16.gmra.mrb[0].mxu0 %v4039
        %v4193 = vpop.f32.mrb[0].mxu0
        %v4194 = vadd.f32 0.0, %v4193
        %v4195 = vpop.f32.mrb[0].mxu0
        %v4196 = vpop.f32.mrb[0].mxu0
        %v4197 = vadd.f32 0.0, %v4196
        %v4198 = vpop.f32.mrb[0].mxu0
        %4199 = vmatprep.mubr.bf16.mxu0 0
        %4200 = vmatmul.mubr.bf16.gmra.mrb[0].mxu0 %v4042
        %v4201 = vpop.f32.mrb[0].mxu0
        %v4202 = vadd.f32 0.0, %v4201
        %v4203 = vpop.f32.mrb[0].mxu0
        %v4204 = vpop.f32.mrb[0].mxu0
        %v4205 = vadd.f32 0.0, %v4204
        %v4206 = vpop.f32.mrb[0].mxu0
        %4207 = vdwg.mxu0
        %v4208 = vadd.f32 %v3657, %v4082
        %v4209 = vadd.f32 %v3658, %v4085
        %v4210 = vadd.f32 %v3659, %v4090
        %v4211 = vadd.f32 %v3660, %v4093
        %v4212 = vadd.f32 %v3661, %v4098
        %v4213 = vadd.f32 %v3662, %v4101
        %v4214 = vadd.f32 %v3663, %v4106
        %v4215 = vadd.f32 %v3664, %v4109
        %v4216 = vadd.f32 %v3665, %v4114
        %v4217 = vadd.f32 %v3666, %v4117
        %v4218 = vadd.f32 %v3667, %v4122
        %v4219 = vadd.f32 %v3668, %v4125
        %v4220 = vadd.f32 %v3669, %v4130
        %v4221 = vadd.f32 %v3670, %v4133
        %v4222 = vadd.f32 %v3671, %v4138
        %v4223 = vadd.f32 %v3672, %v4141
        %v4224 = vadd.f32 %v3673, %v4146
        %v4225 = vadd.f32 %v3674, %v4149
        %v4226 = vadd.f32 %v3675, %v4154
        %v4227 = vadd.f32 %v3676, %v4157
        %v4228 = vadd.f32 %v3677, %v4162
        %v4229 = vadd.f32 %v3678, %v4165
        %v4230 = vadd.f32 %v3679, %v4170
        %v4231 = vadd.f32 %v3680, %v4173
        %v4232 = vadd.f32 %v3681, %v4178
        %v4233 = vadd.f32 %v3682, %v4181
        %v4234 = vadd.f32 %v3683, %v4186
        %v4235 = vadd.f32 %v3684, %v4189
        %v4236 = vadd.f32 %v3685, %v4194
        %v4237 = vadd.f32 %v3686, %v4197
        %v4238 = vadd.f32 %v3687, %v4202
        %v4239 = vadd.f32 %v3688, %v4205
        %v4240 = vld [vmem:[%s3689] sm:$0xf0]
        %v4241 = vld [vmem:[%s3689 + $0x10] sm:$0xf0]
        %v4242 = vld [vmem:[%s3689 + $0x20] sm:$0xf0]
        %v4243 = vld [vmem:[%s3689 + $0x30] sm:$0xf0]
        %v4244 = vld [vmem:[%s3689 + $0x40] sm:$0xf0]
        %v4245 = vld [vmem:[%s3689 + $0x50] sm:$0xf0]
        %v4246 = vld [vmem:[%s3689 + $0x60] sm:$0xf0]
        %v4247 = vld [vmem:[%s3689 + $0x70] sm:$0xf0]
        %v4248 = vld [vmem:[%s3689 + $0x80] sm:$0xf0]
        %v4249 = vld [vmem:[%s3689 + $0x90] sm:$0xf0]
        %v4250 = vld [vmem:[%s3689 + $0xa0] sm:$0xf0]
        %v4251 = vld [vmem:[%s3689 + $0xb0] sm:$0xf0]
        %v4252 = vld [vmem:[%s3689 + $0xc0] sm:$0xf0]
        %v4253 = vld [vmem:[%s3689 + $0xd0] sm:$0xf0]
        %v4254 = vld [vmem:[%s3689 + $0xe0] sm:$0xf0]
        %v4255 = vld [vmem:[%s3689 + $0xf0] sm:$0xf0]
        %v4288 = vrot.slane %v4240, 4
        %v4289 = vrot.slane %v3691, 4
        %v4290 = vsel %vm1248, %v4288, %v4289
        %v4291 = vrot.slane %v4241, 4
        %v4292 = vrot.slane %v3693, 4
        %v4293 = vsel %vm1248, %v4291, %v4292
        %v4294 = vrot.slane %v4242, 4
        %v4295 = vrot.slane %v3695, 4
        %v4296 = vsel %vm1248, %v4294, %v4295
        %v4297 = vrot.slane %v4243, 4
        %v4298 = vrot.slane %v3697, 4
        %v4299 = vsel %vm1248, %v4297, %v4298
        %v4300 = vrot.slane %v4244, 4
        %v4301 = vrot.slane %v3699, 4
        %v4302 = vsel %vm1248, %v4300, %v4301
        %v4303 = vrot.slane %v4245, 4
        %v4304 = vrot.slane %v3701, 4
        %v4305 = vsel %vm1248, %v4303, %v4304
        %v4306 = vrot.slane %v4246, 4
        %v4307 = vrot.slane %v3703, 4
        %v4308 = vsel %vm1248, %v4306, %v4307
        %v4309 = vrot.slane %v4247, 4
        %v4310 = vrot.slane %v3705, 4
        %v4311 = vsel %vm1248, %v4309, %v4310
        %v4312 = vrot.slane %v4248, 4
        %v4313 = vrot.slane %v3707, 4
        %v4314 = vsel %vm1248, %v4312, %v4313
        %v4315 = vrot.slane %v4249, 4
        %v4316 = vrot.slane %v3709, 4
        %v4317 = vsel %vm1248, %v4315, %v4316
        %v4318 = vrot.slane %v4250, 4
        %v4319 = vrot.slane %v3711, 4
        %v4320 = vsel %vm1248, %v4318, %v4319
        %v4321 = vrot.slane %v4251, 4
        %v4322 = vrot.slane %v3713, 4
        %v4323 = vsel %vm1248, %v4321, %v4322
        %v4324 = vrot.slane %v4252, 4
        %v4325 = vrot.slane %v3715, 4
        %v4326 = vsel %vm1248, %v4324, %v4325
        %v4327 = vrot.slane %v4253, 4
        %v4328 = vrot.slane %v3717, 4
        %v4329 = vsel %vm1248, %v4327, %v4328
        %v4330 = vrot.slane %v4254, 4
        %v4331 = vrot.slane %v3719, 4
        %v4332 = vsel %vm1248, %v4330, %v4331
        %v4333 = vrot.slane %v4255, 4
        %v4334 = vrot.slane %v3721, 4
        %v4335 = vsel %vm1248, %v4333, %v4334
        %s4336 = scalar_lea.vmem [#allocation12], 14
        %v4337 = vld [vmem:[%s4336] sm:$0x3]
        %v4339 = vsel %vm1299, %v4290, 0
        %v4342 = vsel %vm1299, %v4293, 0
        %v4345 = vsel %vm1299, %v4296, 0
        %v4348 = vsel %vm1299, %v4299, 0
        %v4351 = vsel %vm1299, %v4302, 0
        %v4354 = vsel %vm1299, %v4305, 0
        %v4357 = vsel %vm1299, %v4308, 0
        %v4360 = vsel %vm1299, %v4311, 0
        %v4363 = vsel %vm1299, %v4314, 0
        %v4366 = vsel %vm1299, %v4317, 0
        %v4369 = vsel %vm1299, %v4320, 0
        %v4372 = vsel %vm1299, %v4323, 0
        %v4375 = vsel %vm1299, %v4326, 0
        %v4378 = vsel %vm1299, %v4329, 0
        %v4381 = vsel %vm1299, %v4332, 0
        %v4384 = vsel %vm1299, %v4335, 0
        %v4387 = vand.u32 %v4337, %v1351
        %4389 = vmatprep.subr.bf16.mxu0 0
        %4390 = vmatpush1.bf16.msra.mxu0 %v4387
        %4391 = vmatprep.subr.bf16.mxu0 0
        %4392 = vmatpush1.bf16.msra.mxu0 0
        %4393 = vmatprep.subr.bf16.mxu0 0
        %4394 = vmatpush1.bf16.msra.mxu0 0
        %4395 = vmatprep.subr.bf16.mxu0 0
        %4396 = vmatpush1.bf16.msra.mxu0 0
        %4397 = vmatprep.subr.bf16.mxu0 0
        %4398 = vmatpush1.bf16.msra.mxu0 0
        %4399 = vmatprep.subr.bf16.mxu0 0
        %4400 = vmatpush1.bf16.msra.mxu0 0
        %4401 = vmatprep.subr.bf16.mxu0 0
        %4402 = vmatpush1.bf16.msra.mxu0 0
        %4403 = vmatprep.subr.bf16.mxu0 0
        %4404 = vmatpush1.bf16.msra.mxu0 0
        %4405 = vmatprep.subr.bf16.mxu0 0
        %4406 = vmatpush1.bf16.msra.mxu0 0
        %4407 = vmatprep.subr.bf16.mxu0 0
        %4408 = vmatpush1.bf16.msra.mxu0 0
        %4409 = vmatprep.subr.bf16.mxu0 0
        %4410 = vmatpush1.bf16.msra.mxu0 0
        %4411 = vmatprep.subr.bf16.mxu0 0
        %4412 = vmatpush1.bf16.msra.mxu0 0
        %4413 = vmatprep.subr.bf16.mxu0 0
        %4414 = vmatpush1.bf16.msra.mxu0 0
        %4415 = vmatprep.subr.bf16.mxu0 0
        %4416 = vmatpush1.bf16.msra.mxu0 0
        %4417 = vmatprep.subr.bf16.mxu0 0
        %4418 = vmatpush1.bf16.msra.mxu0 0
        %4419 = vmatprep.subr.bf16.mxu0 0
        %4420 = vmatpush1.bf16.msra.mxu0 0
        %4421 = vmatprep.mubr.bf16.mxu0 0
        %4422 = vmatmul.mubr.bf16.gmra.mrb[0].mxu0 %v4339
        %v4423 = vpop.f32.mrb[0].mxu0
        %v4424 = vadd.f32 0.0, %v4423
        %v4425 = vpop.f32.mrb[0].mxu0
        %v4426 = vpop.f32.mrb[0].mxu0
        %v4427 = vadd.f32 0.0, %v4426
        %v4428 = vpop.f32.mrb[0].mxu0
        %4429 = vmatprep.mubr.bf16.mxu0 0
        %4430 = vmatmul.mubr.bf16.gmra.mrb[0].mxu0 %v4342
        %v4431 = vpop.f32.mrb[0].mxu0
        %v4432 = vadd.f32 0.0, %v4431
        %v4433 = vpop.f32.mrb[0].mxu0
        %v4434 = vpop.f32.mrb[0].mxu0
        %v4435 = vadd.f32 0.0, %v4434
        %v4436 = vpop.f32.mrb[0].mxu0
        %4437 = vmatprep.mubr.bf16.mxu0 0
        %4438 = vmatmul.mubr.bf16.gmra.mrb[0].mxu0 %v4345
        %v4439 = vpop.f32.mrb[0].mxu0
        %v4440 = vadd.f32 0.0, %v4439
        %v4441 = vpop.f32.mrb[0].mxu0
        %v4442 = vpop.f32.mrb[0].mxu0
        %v4443 = vadd.f32 0.0, %v4442
        %v4444 = vpop.f32.mrb[0].mxu0
        %4445 = vmatprep.mubr.bf16.mxu0 0
        %4446 = vmatmul.mubr.bf16.gmra.mrb[0].mxu0 %v4348
        %v4447 = vpop.f32.mrb[0].mxu0
        %v4448 = vadd.f32 0.0, %v4447
        %v4449 = vpop.f32.mrb[0].mxu0
        %v4450 = vpop.f32.mrb[0].mxu0
        %v4451 = vadd.f32 0.0, %v4450
        %v4452 = vpop.f32.mrb[0].mxu0
        %4453 = vmatprep.mubr.bf16.mxu0 0
        %4454 = vmatmul.mubr.bf16.gmra.mrb[0].mxu0 %v4351
        %v4455 = vpop.f32.mrb[0].mxu0
        %v4456 = vadd.f32 0.0, %v4455
        %v4457 = vpop.f32.mrb[0].mxu0
        %v4458 = vpop.f32.mrb[0].mxu0
        %v4459 = vadd.f32 0.0, %v4458
        %v4460 = vpop.f32.mrb[0].mxu0
        %4461 = vmatprep.mubr.bf16.mxu0 0
        %4462 = vmatmul.mubr.bf16.gmra.mrb[0].mxu0 %v4354
        %v4463 = vpop.f32.mrb[0].mxu0
        %v4464 = vadd.f32 0.0, %v4463
        %v4465 = vpop.f32.mrb[0].mxu0
        %v4466 = vpop.f32.mrb[0].mxu0
        %v4467 = vadd.f32 0.0, %v4466
        %v4468 = vpop.f32.mrb[0].mxu0
        %4469 = vmatprep.mubr.bf16.mxu0 0
        %4470 = vmatmul.mubr.bf16.gmra.mrb[0].mxu0 %v4357
        %v4471 = vpop.f32.mrb[0].mxu0
        %v4472 = vadd.f32 0.0, %v4471
        %v4473 = vpop.f32.mrb[0].mxu0
        %v4474 = vpop.f32.mrb[0].mxu0
        %v4475 = vadd.f32 0.0, %v4474
        %v4476 = vpop.f32.mrb[0].mxu0
        %4477 = vmatprep.mubr.bf16.mxu0 0
        %4478 = vmatmul.mubr.bf16.gmra.mrb[0].mxu0 %v4360
        %v4479 = vpop.f32.mrb[0].mxu0
        %v4480 = vadd.f32 0.0, %v4479
        %v4481 = vpop.f32.mrb[0].mxu0
        %v4482 = vpop.f32.mrb[0].mxu0
        %v4483 = vadd.f32 0.0, %v4482
        %v4484 = vpop.f32.mrb[0].mxu0
        %4485 = vmatprep.mubr.bf16.mxu0 0
        %4486 = vmatmul.mubr.bf16.gmra.mrb[0].mxu0 %v4363
        %v4487 = vpop.f32.mrb[0].mxu0
        %v4488 = vadd.f32 0.0, %v4487
        %v4489 = vpop.f32.mrb[0].mxu0
        %v4490 = vpop.f32.mrb[0].mxu0
        %v4491 = vadd.f32 0.0, %v4490
        %v4492 = vpop.f32.mrb[0].mxu0
        %4493 = vmatprep.mubr.bf16.mxu0 0
        %4494 = vmatmul.mubr.bf16.gmra.mrb[0].mxu0 %v4366
        %v4495 = vpop.f32.mrb[0].mxu0
        %v4496 = vadd.f32 0.0, %v4495
        %v4497 = vpop.f32.mrb[0].mxu0
        %v4498 = vpop.f32.mrb[0].mxu0
        %v4499 = vadd.f32 0.0, %v4498
        %v4500 = vpop.f32.mrb[0].mxu0
        %4501 = vmatprep.mubr.bf16.mxu0 0
        %4502 = vmatmul.mubr.bf16.gmra.mrb[0].mxu0 %v4369
        %v4503 = vpop.f32.mrb[0].mxu0
        %v4504 = vadd.f32 0.0, %v4503
        %v4505 = vpop.f32.mrb[0].mxu0
        %v4506 = vpop.f32.mrb[0].mxu0
        %v4507 = vadd.f32 0.0, %v4506
        %v4508 = vpop.f32.mrb[0].mxu0
        %4509 = vmatprep.mubr.bf16.mxu0 0
        %4510 = vmatmul.mubr.bf16.gmra.mrb[0].mxu0 %v4372
        %v4511 = vpop.f32.mrb[0].mxu0
        %v4512 = vadd.f32 0.0, %v4511
        %v4513 = vpop.f32.mrb[0].mxu0
        %v4514 = vpop.f32.mrb[0].mxu0
        %v4515 = vadd.f32 0.0, %v4514
        %v4516 = vpop.f32.mrb[0].mxu0
        %4517 = vmatprep.mubr.bf16.mxu0 0
        %4518 = vmatmul.mubr.bf16.gmra.mrb[0].mxu0 %v4375
        %v4519 = vpop.f32.mrb[0].mxu0
        %v4520 = vadd.f32 0.0, %v4519
        %v4521 = vpop.f32.mrb[0].mxu0
        %v4522 = vpop.f32.mrb[0].mxu0
        %v4523 = vadd.f32 0.0, %v4522
        %v4524 = vpop.f32.mrb[0].mxu0
        %4525 = vmatprep.mubr.bf16.mxu0 0
        %4526 = vmatmul.mubr.bf16.gmra.mrb[0].mxu0 %v4378
        %v4527 = vpop.f32.mrb[0].mxu0
        %v4528 = vadd.f32 0.0, %v4527
        %v4529 = vpop.f32.mrb[0].mxu0
        %v4530 = vpop.f32.mrb[0].mxu0
        %v4531 = vadd.f32 0.0, %v4530
        %v4532 = vpop.f32.mrb[0].mxu0
        %4533 = vmatprep.mubr.bf16.mxu0 0
        %4534 = vmatmul.mubr.bf16.gmra.mrb[0].mxu0 %v4381
        %v4535 = vpop.f32.mrb[0].mxu0
        %v4536 = vadd.f32 0.0, %v4535
        %v4537 = vpop.f32.mrb[0].mxu0
        %v4538 = vpop.f32.mrb[0].mxu0
        %v4539 = vadd.f32 0.0, %v4538
        %v4540 = vpop.f32.mrb[0].mxu0
        %4541 = vmatprep.mubr.bf16.mxu0 0
        %4542 = vmatmul.mubr.bf16.gmra.mrb[0].mxu0 %v4384
        %v4543 = vpop.f32.mrb[0].mxu0
        %v4544 = vadd.f32 0.0, %v4543
        %v4545 = vpop.f32.mrb[0].mxu0
        %v4546 = vpop.f32.mrb[0].mxu0
        %v4547 = vadd.f32 0.0, %v4546
        %v4548 = vpop.f32.mrb[0].mxu0
        %4549 = vdwg.mxu0
        %v4550 = vadd.f32 %v4208, %v4424
        %v4551 = vadd.f32 %v4209, %v4427
        %v4552 = vadd.f32 %v4210, %v4432
        %v4553 = vadd.f32 %v4211, %v4435
        %v4554 = vadd.f32 %v4212, %v4440
        %v4555 = vadd.f32 %v4213, %v4443
        %v4556 = vadd.f32 %v4214, %v4448
        %v4557 = vadd.f32 %v4215, %v4451
        %v4558 = vadd.f32 %v4216, %v4456
        %v4559 = vadd.f32 %v4217, %v4459
        %v4560 = vadd.f32 %v4218, %v4464
        %v4561 = vadd.f32 %v4219, %v4467
        %v4562 = vadd.f32 %v4220, %v4472
        %v4563 = vadd.f32 %v4221, %v4475
        %v4564 = vadd.f32 %v4222, %v4480
        %v4565 = vadd.f32 %v4223, %v4483
        %v4566 = vadd.f32 %v4224, %v4488
        %v4567 = vadd.f32 %v4225, %v4491
        %v4568 = vadd.f32 %v4226, %v4496
        %v4569 = vadd.f32 %v4227, %v4499
        %v4570 = vadd.f32 %v4228, %v4504
        %v4571 = vadd.f32 %v4229, %v4507
        %v4572 = vadd.f32 %v4230, %v4512
        %v4573 = vadd.f32 %v4231, %v4515
        %v4574 = vadd.f32 %v4232, %v4520
        %v4575 = vadd.f32 %v4233, %v4523
        %v4576 = vadd.f32 %v4234, %v4528
        %v4577 = vadd.f32 %v4235, %v4531
        %v4578 = vadd.f32 %v4236, %v4536
        %v4579 = vadd.f32 %v4237, %v4539
        %v4580 = vadd.f32 %v4238, %v4544
        %v4581 = vadd.f32 %v4239, %v4547
        %v4582 = vld [vmem:[%s3689 + $0x8] sm:$0x1f]
        %v4583 = vld [vmem:[%s3689 + $0x18] sm:$0x1f]
        %v4584 = vld [vmem:[%s3689 + $0x28] sm:$0x1f]
        %v4585 = vld [vmem:[%s3689 + $0x38] sm:$0x1f]
        %v4586 = vld [vmem:[%s3689 + $0x48] sm:$0x1f]
        %v4587 = vld [vmem:[%s3689 + $0x58] sm:$0x1f]
        %v4588 = vld [vmem:[%s3689 + $0x68] sm:$0x1f]
        %v4589 = vld [vmem:[%s3689 + $0x78] sm:$0x1f]
        %v4590 = vld [vmem:[%s3689 + $0x88] sm:$0x1f]
        %v4591 = vld [vmem:[%s3689 + $0x98] sm:$0x1f]
        %v4592 = vld [vmem:[%s3689 + $0xa8] sm:$0x1f]
        %v4593 = vld [vmem:[%s3689 + $0xb8] sm:$0x1f]
        %v4594 = vld [vmem:[%s3689 + $0xc8] sm:$0x1f]
        %v4595 = vld [vmem:[%s3689 + $0xd8] sm:$0x1f]
        %v4596 = vld [vmem:[%s3689 + $0xe8] sm:$0x1f]
        %v4597 = vld [vmem:[%s3689 + $0xf8] sm:$0x1f]
        %v4599 = vshrl.u32 %v4240, 16
        %v4601 = vrot.slane %v4599, 4
        %v4602 = vshll.u32 %v4240, 16
        %v4604 = vrot.slane %v4602, 5
        %v4605 = vor.u32 %v4601, %v4604
        %v4607 = vshrl.u32 %v4582, 16
        %v4609 = vrot.slane %v4607, 4
        %v4610 = vshll.u32 %v4582, 16
        %v4612 = vrot.slane %v4610, 5
        %v4613 = vor.u32 %v4609, %v4612
        %v4614 = vsel %vm1744, %v4605, %v4613
        %v4616 = vshrl.u32 %v4241, 16
        %v4618 = vrot.slane %v4616, 4
        %v4619 = vshll.u32 %v4241, 16
        %v4621 = vrot.slane %v4619, 5
        %v4622 = vor.u32 %v4618, %v4621
        %v4624 = vshrl.u32 %v4583, 16
        %v4626 = vrot.slane %v4624, 4
        %v4627 = vshll.u32 %v4583, 16
        %v4629 = vrot.slane %v4627, 5
        %v4630 = vor.u32 %v4626, %v4629
        %v4631 = vsel %vm1744, %v4622, %v4630
        %v4633 = vshrl.u32 %v4242, 16
        %v4635 = vrot.slane %v4633, 4
        %v4636 = vshll.u32 %v4242, 16
        %v4638 = vrot.slane %v4636, 5
        %v4639 = vor.u32 %v4635, %v4638
        %v4641 = vshrl.u32 %v4584, 16
        %v4643 = vrot.slane %v4641, 4
        %v4644 = vshll.u32 %v4584, 16
        %v4646 = vrot.slane %v4644, 5
        %v4647 = vor.u32 %v4643, %v4646
        %v4648 = vsel %vm1744, %v4639, %v4647
        %v4650 = vshrl.u32 %v4243, 16
        %v4652 = vrot.slane %v4650, 4
        %v4653 = vshll.u32 %v4243, 16
        %v4655 = vrot.slane %v4653, 5
        %v4656 = vor.u32 %v4652, %v4655
        %v4658 = vshrl.u32 %v4585, 16
        %v4660 = vrot.slane %v4658, 4
        %v4661 = vshll.u32 %v4585, 16
        %v4663 = vrot.slane %v4661, 5
        %v4664 = vor.u32 %v4660, %v4663
        %v4665 = vsel %vm1744, %v4656, %v4664
        %v4667 = vshrl.u32 %v4244, 16
        %v4669 = vrot.slane %v4667, 4
        %v4670 = vshll.u32 %v4244, 16
        %v4672 = vrot.slane %v4670, 5
        %v4673 = vor.u32 %v4669, %v4672
        %v4675 = vshrl.u32 %v4586, 16
        %v4677 = vrot.slane %v4675, 4
        %v4678 = vshll.u32 %v4586, 16
        %v4680 = vrot.slane %v4678, 5
        %v4681 = vor.u32 %v4677, %v4680
        %v4682 = vsel %vm1744, %v4673, %v4681
        %v4684 = vshrl.u32 %v4245, 16
        %v4686 = vrot.slane %v4684, 4
        %v4687 = vshll.u32 %v4245, 16
        %v4689 = vrot.slane %v4687, 5
        %v4690 = vor.u32 %v4686, %v4689
        %v4692 = vshrl.u32 %v4587, 16
        %v4694 = vrot.slane %v4692, 4
        %v4695 = vshll.u32 %v4587, 16
        %v4697 = vrot.slane %v4695, 5
        %v4698 = vor.u32 %v4694, %v4697
        %v4699 = vsel %vm1744, %v4690, %v4698
        %v4701 = vshrl.u32 %v4246, 16
        %v4703 = vrot.slane %v4701, 4
        %v4704 = vshll.u32 %v4246, 16
        %v4706 = vrot.slane %v4704, 5
        %v4707 = vor.u32 %v4703, %v4706
        %v4709 = vshrl.u32 %v4588, 16
        %v4711 = vrot.slane %v4709, 4
        %v4712 = vshll.u32 %v4588, 16
        %v4714 = vrot.slane %v4712, 5
        %v4715 = vor.u32 %v4711, %v4714
        %v4716 = vsel %vm1744, %v4707, %v4715
        %v4718 = vshrl.u32 %v4247, 16
        %v4720 = vrot.slane %v4718, 4
        %v4721 = vshll.u32 %v4247, 16
        %v4723 = vrot.slane %v4721, 5
        %v4724 = vor.u32 %v4720, %v4723
        %v4726 = vshrl.u32 %v4589, 16
        %v4728 = vrot.slane %v4726, 4
        %v4729 = vshll.u32 %v4589, 16
        %v4731 = vrot.slane %v4729, 5
        %v4732 = vor.u32 %v4728, %v4731
        %v4733 = vsel %vm1744, %v4724, %v4732
        %v4735 = vshrl.u32 %v4248, 16
        %v4737 = vrot.slane %v4735, 4
        %v4738 = vshll.u32 %v4248, 16
        %v4740 = vrot.slane %v4738, 5
        %v4741 = vor.u32 %v4737, %v4740
        %v4743 = vshrl.u32 %v4590, 16
        %v4745 = vrot.slane %v4743, 4
        %v4746 = vshll.u32 %v4590, 16
        %v4748 = vrot.slane %v4746, 5
        %v4749 = vor.u32 %v4745, %v4748
        %v4750 = vsel %vm1744, %v4741, %v4749
        %v4752 = vshrl.u32 %v4249, 16
        %v4754 = vrot.slane %v4752, 4
        %v4755 = vshll.u32 %v4249, 16
        %v4757 = vrot.slane %v4755, 5
        %v4758 = vor.u32 %v4754, %v4757
        %v4760 = vshrl.u32 %v4591, 16
        %v4762 = vrot.slane %v4760, 4
        %v4763 = vshll.u32 %v4591, 16
        %v4765 = vrot.slane %v4763, 5
        %v4766 = vor.u32 %v4762, %v4765
        %v4767 = vsel %vm1744, %v4758, %v4766
        %v4769 = vshrl.u32 %v4250, 16
        %v4771 = vrot.slane %v4769, 4
        %v4772 = vshll.u32 %v4250, 16
        %v4774 = vrot.slane %v4772, 5
        %v4775 = vor.u32 %v4771, %v4774
        %v4777 = vshrl.u32 %v4592, 16
        %v4779 = vrot.slane %v4777, 4
        %v4780 = vshll.u32 %v4592, 16
        %v4782 = vrot.slane %v4780, 5
        %v4783 = vor.u32 %v4779, %v4782
        %v4784 = vsel %vm1744, %v4775, %v4783
        %v4786 = vshrl.u32 %v4251, 16
        %v4788 = vrot.slane %v4786, 4
        %v4789 = vshll.u32 %v4251, 16
        %v4791 = vrot.slane %v4789, 5
        %v4792 = vor.u32 %v4788, %v4791
        %v4794 = vshrl.u32 %v4593, 16
        %v4796 = vrot.slane %v4794, 4
        %v4797 = vshll.u32 %v4593, 16
        %v4799 = vrot.slane %v4797, 5
        %v4800 = vor.u32 %v4796, %v4799
        %v4801 = vsel %vm1744, %v4792, %v4800
        %v4803 = vshrl.u32 %v4252, 16
        %v4805 = vrot.slane %v4803, 4
        %v4806 = vshll.u32 %v4252, 16
        %v4808 = vrot.slane %v4806, 5
        %v4809 = vor.u32 %v4805, %v4808
        %v4811 = vshrl.u32 %v4594, 16
        %v4813 = vrot.slane %v4811, 4
        %v4814 = vshll.u32 %v4594, 16
        %v4816 = vrot.slane %v4814, 5
        %v4817 = vor.u32 %v4813, %v4816
        %v4818 = vsel %vm1744, %v4809, %v4817
        %v4820 = vshrl.u32 %v4253, 16
        %v4822 = vrot.slane %v4820, 4
        %v4823 = vshll.u32 %v4253, 16
        %v4825 = vrot.slane %v4823, 5
        %v4826 = vor.u32 %v4822, %v4825
        %v4828 = vshrl.u32 %v4595, 16
        %v4830 = vrot.slane %v4828, 4
        %v4831 = vshll.u32 %v4595, 16
        %v4833 = vrot.slane %v4831, 5
        %v4834 = vor.u32 %v4830, %v4833
        %v4835 = vsel %vm1744, %v4826, %v4834
        %v4837 = vshrl.u32 %v4254, 16
        %v4839 = vrot.slane %v4837, 4
        %v4840 = vshll.u32 %v4254, 16
        %v4842 = vrot.slane %v4840, 5
        %v4843 = vor.u32 %v4839, %v4842
        %v4845 = vshrl.u32 %v4596, 16
        %v4847 = vrot.slane %v4845, 4
        %v4848 = vshll.u32 %v4596, 16
        %v4850 = vrot.slane %v4848, 5
        %v4851 = vor.u32 %v4847, %v4850
        %v4852 = vsel %vm1744, %v4843, %v4851
        %v4854 = vshrl.u32 %v4255, 16
        %v4856 = vrot.slane %v4854, 4
        %v4857 = vshll.u32 %v4255, 16
        %v4859 = vrot.slane %v4857, 5
        %v4860 = vor.u32 %v4856, %v4859
        %v4862 = vshrl.u32 %v4597, 16
        %v4864 = vrot.slane %v4862, 4
        %v4865 = vshll.u32 %v4597, 16
        %v4867 = vrot.slane %v4865, 5
        %v4868 = vor.u32 %v4864, %v4867
        %v4869 = vsel %vm1744, %v4860, %v4868
        %s4870 = scalar_lea.vmem [#allocation12], 16
        %v4871 = vld [vmem:[%s4870] sm:$0x3]
        %v4873 = vsel %vm1299, %v4614, 0
        %v4876 = vsel %vm1299, %v4631, 0
        %v4879 = vsel %vm1299, %v4648, 0
        %v4882 = vsel %vm1299, %v4665, 0
        %v4885 = vsel %vm1299, %v4682, 0
        %v4888 = vsel %vm1299, %v4699, 0
        %v4891 = vsel %vm1299, %v4716, 0
        %v4894 = vsel %vm1299, %v4733, 0
        %v4897 = vsel %vm1299, %v4750, 0
        %v4900 = vsel %vm1299, %v4767, 0
        %v4903 = vsel %vm1299, %v4784, 0
        %v4906 = vsel %vm1299, %v4801, 0
        %v4909 = vsel %vm1299, %v4818, 0
        %v4912 = vsel %vm1299, %v4835, 0
        %v4915 = vsel %vm1299, %v4852, 0
        %v4918 = vsel %vm1299, %v4869, 0
        %v4921 = vand.u32 %v4871, %v1351
        %4923 = vmatprep.subr.bf16.mxu0 0
        %4924 = vmatpush1.bf16.msra.mxu0 %v4921
        %4925 = vmatprep.subr.bf16.mxu0 0
        %4926 = vmatpush1.bf16.msra.mxu0 0
        %4927 = vmatprep.subr.bf16.mxu0 0
        %4928 = vmatpush1.bf16.msra.mxu0 0
        %4929 = vmatprep.subr.bf16.mxu0 0
        %4930 = vmatpush1.bf16.msra.mxu0 0
        %4931 = vmatprep.subr.bf16.mxu0 0
        %4932 = vmatpush1.bf16.msra.mxu0 0
        %4933 = vmatprep.subr.bf16.mxu0 0
        %4934 = vmatpush1.bf16.msra.mxu0 0
        %4935 = vmatprep.subr.bf16.mxu0 0
        %4936 = vmatpush1.bf16.msra.mxu0 0
        %4937 = vmatprep.subr.bf16.mxu0 0
        %4938 = vmatpush1.bf16.msra.mxu0 0
        %4939 = vmatprep.subr.bf16.mxu0 0
        %4940 = vmatpush1.bf16.msra.mxu0 0
        %4941 = vmatprep.subr.bf16.mxu0 0
        %4942 = vmatpush1.bf16.msra.mxu0 0
        %4943 = vmatprep.subr.bf16.mxu0 0
        %4944 = vmatpush1.bf16.msra.mxu0 0
        %4945 = vmatprep.subr.bf16.mxu0 0
        %4946 = vmatpush1.bf16.msra.mxu0 0
        %4947 = vmatprep.subr.bf16.mxu0 0
        %4948 = vmatpush1.bf16.msra.mxu0 0
        %4949 = vmatprep.subr.bf16.mxu0 0
        %4950 = vmatpush1.bf16.msra.mxu0 0
        %4951 = vmatprep.subr.bf16.mxu0 0
        %4952 = vmatpush1.bf16.msra.mxu0 0
        %4953 = vmatprep.subr.bf16.mxu0 0
        %4954 = vmatpush1.bf16.msra.mxu0 0
        %4955 = vmatprep.mubr.bf16.mxu0 0
        %4956 = vmatmul.mubr.bf16.gmra.mrb[0].mxu0 %v4873
        %v4957 = vpop.f32.mrb[0].mxu0
        %v4958 = vadd.f32 0.0, %v4957
        %v4959 = vpop.f32.mrb[0].mxu0
        %v4960 = vpop.f32.mrb[0].mxu0
        %v4961 = vadd.f32 0.0, %v4960
        %v4962 = vpop.f32.mrb[0].mxu0
        %4963 = vmatprep.mubr.bf16.mxu0 0
        %4964 = vmatmul.mubr.bf16.gmra.mrb[0].mxu0 %v4876
        %v4965 = vpop.f32.mrb[0].mxu0
        %v4966 = vadd.f32 0.0, %v4965
        %v4967 = vpop.f32.mrb[0].mxu0
        %v4968 = vpop.f32.mrb[0].mxu0
        %v4969 = vadd.f32 0.0, %v4968
        %v4970 = vpop.f32.mrb[0].mxu0
        %4971 = vmatprep.mubr.bf16.mxu0 0
        %4972 = vmatmul.mubr.bf16.gmra.mrb[0].mxu0 %v4879
        %v4973 = vpop.f32.mrb[0].mxu0
        %v4974 = vadd.f32 0.0, %v4973
        %v4975 = vpop.f32.mrb[0].mxu0
        %v4976 = vpop.f32.mrb[0].mxu0
        %v4977 = vadd.f32 0.0, %v4976
        %v4978 = vpop.f32.mrb[0].mxu0
        %4979 = vmatprep.mubr.bf16.mxu0 0
        %4980 = vmatmul.mubr.bf16.gmra.mrb[0].mxu0 %v4882
        %v4981 = vpop.f32.mrb[0].mxu0
        %v4982 = vadd.f32 0.0, %v4981
        %v4983 = vpop.f32.mrb[0].mxu0
        %v4984 = vpop.f32.mrb[0].mxu0
        %v4985 = vadd.f32 0.0, %v4984
        %v4986 = vpop.f32.mrb[0].mxu0
        %4987 = vmatprep.mubr.bf16.mxu0 0
        %4988 = vmatmul.mubr.bf16.gmra.mrb[0].mxu0 %v4885
        %v4989 = vpop.f32.mrb[0].mxu0
        %v4990 = vadd.f32 0.0, %v4989
        %v4991 = vpop.f32.mrb[0].mxu0
        %v4992 = vpop.f32.mrb[0].mxu0
        %v4993 = vadd.f32 0.0, %v4992
        %v4994 = vpop.f32.mrb[0].mxu0
        %4995 = vmatprep.mubr.bf16.mxu0 0
        %4996 = vmatmul.mubr.bf16.gmra.mrb[0].mxu0 %v4888
        %v4997 = vpop.f32.mrb[0].mxu0
        %v4998 = vadd.f32 0.0, %v4997
        %v4999 = vpop.f32.mrb[0].mxu0
        %v5000 = vpop.f32.mrb[0].mxu0
        %v5001 = vadd.f32 0.0, %v5000
        %v5002 = vpop.f32.mrb[0].mxu0
        %5003 = vmatprep.mubr.bf16.mxu0 0
        %5004 = vmatmul.mubr.bf16.gmra.mrb[0].mxu0 %v4891
        %v5005 = vpop.f32.mrb[0].mxu0
        %v5006 = vadd.f32 0.0, %v5005
        %v5007 = vpop.f32.mrb[0].mxu0
        %v5008 = vpop.f32.mrb[0].mxu0
        %v5009 = vadd.f32 0.0, %v5008
        %v5010 = vpop.f32.mrb[0].mxu0
        %5011 = vmatprep.mubr.bf16.mxu0 0
        %5012 = vmatmul.mubr.bf16.gmra.mrb[0].mxu0 %v4894
        %v5013 = vpop.f32.mrb[0].mxu0
        %v5014 = vadd.f32 0.0, %v5013
        %v5015 = vpop.f32.mrb[0].mxu0
        %v5016 = vpop.f32.mrb[0].mxu0
        %v5017 = vadd.f32 0.0, %v5016
        %v5018 = vpop.f32.mrb[0].mxu0
        %5019 = vmatprep.mubr.bf16.mxu0 0
        %5020 = vmatmul.mubr.bf16.gmra.mrb[0].mxu0 %v4897
        %v5021 = vpop.f32.mrb[0].mxu0
        %v5022 = vadd.f32 0.0, %v5021
        %v5023 = vpop.f32.mrb[0].mxu0
        %v5024 = vpop.f32.mrb[0].mxu0
        %v5025 = vadd.f32 0.0, %v5024
        %v5026 = vpop.f32.mrb[0].mxu0
        %5027 = vmatprep.mubr.bf16.mxu0 0
        %5028 = vmatmul.mubr.bf16.gmra.mrb[0].mxu0 %v4900
        %v5029 = vpop.f32.mrb[0].mxu0
        %v5030 = vadd.f32 0.0, %v5029
        %v5031 = vpop.f32.mrb[0].mxu0
        %v5032 = vpop.f32.mrb[0].mxu0
        %v5033 = vadd.f32 0.0, %v5032
        %v5034 = vpop.f32.mrb[0].mxu0
        %5035 = vmatprep.mubr.bf16.mxu0 0
        %5036 = vmatmul.mubr.bf16.gmra.mrb[0].mxu0 %v4903
        %v5037 = vpop.f32.mrb[0].mxu0
        %v5038 = vadd.f32 0.0, %v5037
        %v5039 = vpop.f32.mrb[0].mxu0
        %v5040 = vpop.f32.mrb[0].mxu0
        %v5041 = vadd.f32 0.0, %v5040
        %v5042 = vpop.f32.mrb[0].mxu0
        %5043 = vmatprep.mubr.bf16.mxu0 0
        %5044 = vmatmul.mubr.bf16.gmra.mrb[0].mxu0 %v4906
        %v5045 = vpop.f32.mrb[0].mxu0
        %v5046 = vadd.f32 0.0, %v5045
        %v5047 = vpop.f32.mrb[0].mxu0
        %v5048 = vpop.f32.mrb[0].mxu0
        %v5049 = vadd.f32 0.0, %v5048
        %v5050 = vpop.f32.mrb[0].mxu0
        %5051 = vmatprep.mubr.bf16.mxu0 0
        %5052 = vmatmul.mubr.bf16.gmra.mrb[0].mxu0 %v4909
        %v5053 = vpop.f32.mrb[0].mxu0
        %v5054 = vadd.f32 0.0, %v5053
        %v5055 = vpop.f32.mrb[0].mxu0
        %v5056 = vpop.f32.mrb[0].mxu0
        %v5057 = vadd.f32 0.0, %v5056
        %v5058 = vpop.f32.mrb[0].mxu0
        %5059 = vmatprep.mubr.bf16.mxu0 0
        %5060 = vmatmul.mubr.bf16.gmra.mrb[0].mxu0 %v4912
        %v5061 = vpop.f32.mrb[0].mxu0
        %v5062 = vadd.f32 0.0, %v5061
        %v5063 = vpop.f32.mrb[0].mxu0
        %v5064 = vpop.f32.mrb[0].mxu0
        %v5065 = vadd.f32 0.0, %v5064
        %v5066 = vpop.f32.mrb[0].mxu0
        %5067 = vmatprep.mubr.bf16.mxu0 0
        %5068 = vmatmul.mubr.bf16.gmra.mrb[0].mxu0 %v4915
        %v5069 = vpop.f32.mrb[0].mxu0
        %v5070 = vadd.f32 0.0, %v5069
        %v5071 = vpop.f32.mrb[0].mxu0
        %v5072 = vpop.f32.mrb[0].mxu0
        %v5073 = vadd.f32 0.0, %v5072
        %v5074 = vpop.f32.mrb[0].mxu0
        %5075 = vmatprep.mubr.bf16.mxu0 0
        %5076 = vmatmul.mubr.bf16.gmra.mrb[0].mxu0 %v4918
        %v5077 = vpop.f32.mrb[0].mxu0
        %v5078 = vadd.f32 0.0, %v5077
        %v5079 = vpop.f32.mrb[0].mxu0
        %v5080 = vpop.f32.mrb[0].mxu0
        %v5081 = vadd.f32 0.0, %v5080
        %v5082 = vpop.f32.mrb[0].mxu0
        %5083 = vdwg.mxu0
        %v5084 = vadd.f32 %v4550, %v4958
        %v5085 = vadd.f32 %v4551, %v4961
        %v5086 = vadd.f32 %v4552, %v4966
        %v5087 = vadd.f32 %v4553, %v4969
        %v5088 = vadd.f32 %v4554, %v4974
        %v5089 = vadd.f32 %v4555, %v4977
        %v5090 = vadd.f32 %v4556, %v4982
        %v5091 = vadd.f32 %v4557, %v4985
        %v5092 = vadd.f32 %v4558, %v4990
        %v5093 = vadd.f32 %v4559, %v4993
        %v5094 = vadd.f32 %v4560, %v4998
        %v5095 = vadd.f32 %v4561, %v5001
        %v5096 = vadd.f32 %v4562, %v5006
        %v5097 = vadd.f32 %v4563, %v5009
        %v5098 = vadd.f32 %v4564, %v5014
        %v5099 = vadd.f32 %v4565, %v5017
        %v5100 = vadd.f32 %v4566, %v5022
        %v5101 = vadd.f32 %v4567, %v5025
        %v5102 = vadd.f32 %v4568, %v5030
        %v5103 = vadd.f32 %v4569, %v5033
        %v5104 = vadd.f32 %v4570, %v5038
        %v5105 = vadd.f32 %v4571, %v5041
        %v5106 = vadd.f32 %v4572, %v5046
        %v5107 = vadd.f32 %v4573, %v5049
        %v5108 = vadd.f32 %v4574, %v5054
        %v5109 = vadd.f32 %v4575, %v5057
        %v5110 = vadd.f32 %v4576, %v5062
        %v5111 = vadd.f32 %v4577, %v5065
        %v5112 = vadd.f32 %v4578, %v5070
        %v5113 = vadd.f32 %v4579, %v5073
        %v5114 = vadd.f32 %v4580, %v5078
        %v5115 = vadd.f32 %v4581, %v5081
        %v5116 = vld [vmem:[#allocation14] sm:$0x1]
        %v5118 = vlaneseq
        %v5119 = vshrl.u32 %v5118, 7
        %v5120 = vsub.s32 0, %v5119
        %v5121 = vrot.slane %v5116, %v5120
        %v5123 = vadd.f32 %v5084, %v5121
        %v5124 = vadd.f32 %v5085, %v5121
        %v5125 = vadd.f32 %v5086, %v5121
        %v5126 = vadd.f32 %v5087, %v5121
        %v5127 = vadd.f32 %v5088, %v5121
        %v5128 = vadd.f32 %v5089, %v5121
        %v5129 = vadd.f32 %v5090, %v5121
        %v5130 = vadd.f32 %v5091, %v5121
        %v5131 = vadd.f32 %v5092, %v5121
        %v5132 = vadd.f32 %v5093, %v5121
        %v5133 = vadd.f32 %v5094, %v5121
        %v5134 = vadd.f32 %v5095, %v5121
        %v5135 = vadd.f32 %v5096, %v5121
        %v5136 = vadd.f32 %v5097, %v5121
        %v5137 = vadd.f32 %v5098, %v5121
        %v5138 = vadd.f32 %v5099, %v5121
        %v5139 = vadd.f32 %v5100, %v5121
        %v5140 = vadd.f32 %v5101, %v5121
        %v5141 = vadd.f32 %v5102, %v5121
        %v5142 = vadd.f32 %v5103, %v5121
        %v5143 = vadd.f32 %v5104, %v5121
        %v5144 = vadd.f32 %v5105, %v5121
        %v5145 = vadd.f32 %v5106, %v5121
        %v5146 = vadd.f32 %v5107, %v5121
        %v5147 = vadd.f32 %v5108, %v5121
        %v5148 = vadd.f32 %v5109, %v5121
        %v5149 = vadd.f32 %v5110, %v5121
        %v5150 = vadd.f32 %v5111, %v5121
        %v5151 = vadd.f32 %v5112, %v5121
        %v5152 = vadd.f32 %v5113, %v5121
        %v5153 = vadd.f32 %v5114, %v5121
        %v5154 = vadd.f32 %v5115, %v5121
        %v5155 = vmax.f32 %v5123, 0.0
        %v5156 = vmax.f32 %v5124, 0.0
        %v5157 = vmax.f32 %v5125, 0.0
        %v5158 = vmax.f32 %v5126, 0.0
        %v5159 = vmax.f32 %v5127, 0.0
        %v5160 = vmax.f32 %v5128, 0.0
        %v5161 = vmax.f32 %v5129, 0.0
        %v5162 = vmax.f32 %v5130, 0.0
        %v5163 = vmax.f32 %v5131, 0.0
        %v5164 = vmax.f32 %v5132, 0.0
        %v5165 = vmax.f32 %v5133, 0.0
        %v5166 = vmax.f32 %v5134, 0.0
        %v5167 = vmax.f32 %v5135, 0.0
        %v5168 = vmax.f32 %v5136, 0.0
        %v5169 = vmax.f32 %v5137, 0.0
        %v5170 = vmax.f32 %v5138, 0.0
        %v5171 = vmax.f32 %v5139, 0.0
        %v5172 = vmax.f32 %v5140, 0.0
        %v5173 = vmax.f32 %v5141, 0.0
        %v5174 = vmax.f32 %v5142, 0.0
        %v5175 = vmax.f32 %v5143, 0.0
        %v5176 = vmax.f32 %v5144, 0.0
        %v5177 = vmax.f32 %v5145, 0.0
        %v5178 = vmax.f32 %v5146, 0.0
        %v5179 = vmax.f32 %v5147, 0.0
        %v5180 = vmax.f32 %v5148, 0.0
        %v5181 = vmax.f32 %v5149, 0.0
        %v5182 = vmax.f32 %v5150, 0.0
        %v5183 = vmax.f32 %v5151, 0.0
        %v5184 = vmax.f32 %v5152, 0.0
        %v5185 = vmax.f32 %v5153, 0.0
        %v5186 = vmax.f32 %v5154, 0.0
        %v5187 = vpack.c.bf16 %v5156, %v5155
        %v5188 = vpack.c.bf16 %v5158, %v5157
        %v5189 = vpack.c.bf16 %v5160, %v5159
        %v5190 = vpack.c.bf16 %v5162, %v5161
        %v5191 = vpack.c.bf16 %v5164, %v5163
        %v5192 = vpack.c.bf16 %v5166, %v5165
        %v5193 = vpack.c.bf16 %v5168, %v5167
        %v5194 = vpack.c.bf16 %v5170, %v5169
        %v5195 = vpack.c.bf16 %v5172, %v5171
        %v5196 = vpack.c.bf16 %v5174, %v5173
        %v5197 = vpack.c.bf16 %v5176, %v5175
        %v5198 = vpack.c.bf16 %v5178, %v5177
        %v5199 = vpack.c.bf16 %v5180, %v5179
        %v5200 = vpack.c.bf16 %v5182, %v5181
        %v5201 = vpack.c.bf16 %v5184, %v5183
        %v5202 = vpack.c.bf16 %v5186, %v5185
        %v5219 = vunpack.c.l.b16 %v5187
        %v5220 = vunpack.c.h.b16 %v5187
        %v5221 = vunpack.c.l.b16 %v5188
        %v5222 = vunpack.c.h.b16 %v5188
        %v5223 = vunpack.c.l.b16 %v5189
        %v5224 = vunpack.c.h.b16 %v5189
        %v5225 = vunpack.c.l.b16 %v5190
        %v5226 = vunpack.c.h.b16 %v5190
        %v5227 = vunpack.c.l.b16 %v5191
        %v5228 = vunpack.c.h.b16 %v5191
        %v5229 = vunpack.c.l.b16 %v5192
        %v5230 = vunpack.c.h.b16 %v5192
        %v5231 = vunpack.c.l.b16 %v5193
        %v5232 = vunpack.c.h.b16 %v5193
        %v5233 = vunpack.c.l.b16 %v5194
        %v5234 = vunpack.c.h.b16 %v5194
        %v5235 = vunpack.c.l.b16 %v5195
        %v5236 = vunpack.c.h.b16 %v5195
        %v5237 = vunpack.c.l.b16 %v5196
        %v5238 = vunpack.c.h.b16 %v5196
        %v5239 = vunpack.c.l.b16 %v5197
        %v5240 = vunpack.c.h.b16 %v5197
        %v5241 = vunpack.c.l.b16 %v5198
        %v5242 = vunpack.c.h.b16 %v5198
        %v5243 = vunpack.c.l.b16 %v5199
        %v5244 = vunpack.c.h.b16 %v5199
        %v5245 = vunpack.c.l.b16 %v5200
        %v5246 = vunpack.c.h.b16 %v5200
        %v5247 = vunpack.c.l.b16 %v5201
        %v5248 = vunpack.c.h.b16 %v5201
        %v5249 = vunpack.c.l.b16 %v5202
        %v5250 = vunpack.c.h.b16 %v5202
        %v5251 = vpack.c.b16 %v5219, %v5219
        %v5252 = vpack.c.b16 %v5220, %v5220
        %v5253 = vpack.c.b16 %v5221, %v5221
        %v5254 = vpack.c.b16 %v5222, %v5222
        %v5255 = vpack.c.b16 %v5223, %v5223
        %v5256 = vpack.c.b16 %v5224, %v5224
        %v5257 = vpack.c.b16 %v5225, %v5225
        %v5258 = vpack.c.b16 %v5226, %v5226
        %v5259 = vpack.c.b16 %v5227, %v5227
        %v5260 = vpack.c.b16 %v5228, %v5228
        %v5261 = vpack.c.b16 %v5229, %v5229
        %v5262 = vpack.c.b16 %v5230, %v5230
        %v5263 = vpack.c.b16 %v5231, %v5231
        %v5264 = vpack.c.b16 %v5232, %v5232
        %v5265 = vpack.c.b16 %v5233, %v5233
        %v5266 = vpack.c.b16 %v5234, %v5234
        %v5267 = vpack.c.b16 %v5235, %v5235
        %v5268 = vpack.c.b16 %v5236, %v5236
        %v5269 = vpack.c.b16 %v5237, %v5237
        %v5270 = vpack.c.b16 %v5238, %v5238
        %v5271 = vpack.c.b16 %v5239, %v5239
        %v5272 = vpack.c.b16 %v5240, %v5240
        %v5273 = vpack.c.b16 %v5241, %v5241
        %v5274 = vpack.c.b16 %v5242, %v5242
        %v5275 = vpack.c.b16 %v5243, %v5243
        %v5276 = vpack.c.b16 %v5244, %v5244
        %v5277 = vpack.c.b16 %v5245, %v5245
        %v5278 = vpack.c.b16 %v5246, %v5246
        %v5279 = vpack.c.b16 %v5247, %v5247
        %v5280 = vpack.c.b16 %v5248, %v5248
        %v5281 = vpack.c.b16 %v5249, %v5249
        %v5282 = vpack.c.b16 %v5250, %v5250
        %vm5315 = vcmask 519168
        %5316 = vst.msk [vmem:[%s499] sm:$0xf] %vm5315, %v5251
        %5317 = vst.msk [vmem:[%s499 + $0x4] sm:$0xf] %vm5315, %v5252
        %5318 = vst.msk [vmem:[%s499 + $0x8] sm:$0xf] %vm5315, %v5253
        %5319 = vst.msk [vmem:[%s499 + $0xc] sm:$0xf] %vm5315, %v5254
        %5320 = vst.msk [vmem:[%s499 + $0x10] sm:$0xf] %vm5315, %v5255
        %5321 = vst.msk [vmem:[%s499 + $0x14] sm:$0xf] %vm5315, %v5256
        %5322 = vst.msk [vmem:[%s499 + $0x18] sm:$0xf] %vm5315, %v5257
        %5323 = vst.msk [vmem:[%s499 + $0x1c] sm:$0xf] %vm5315, %v5258
        %5324 = vst.msk [vmem:[%s499 + $0x20] sm:$0xf] %vm5315, %v5259
        %5325 = vst.msk [vmem:[%s499 + $0x24] sm:$0xf] %vm5315, %v5260
        %5326 = vst.msk [vmem:[%s499 + $0x28] sm:$0xf] %vm5315, %v5261
        %5327 = vst.msk [vmem:[%s499 + $0x2c] sm:$0xf] %vm5315, %v5262
        %5328 = vst.msk [vmem:[%s499 + $0x30] sm:$0xf] %vm5315, %v5263
        %5329 = vst.msk [vmem:[%s499 + $0x34] sm:$0xf] %vm5315, %v5264
        %5330 = vst.msk [vmem:[%s499 + $0x38] sm:$0xf] %vm5315, %v5265
        %5331 = vst.msk [vmem:[%s499 + $0x3c] sm:$0xf] %vm5315, %v5266
        %5332 = vst.msk [vmem:[%s499 + $0x40] sm:$0xf] %vm5315, %v5267
        %5333 = vst.msk [vmem:[%s499 + $0x44] sm:$0xf] %vm5315, %v5268
        %5334 = vst.msk [vmem:[%s499 + $0x48] sm:$0xf] %vm5315, %v5269
        %5335 = vst.msk [vmem:[%s499 + $0x4c] sm:$0xf] %vm5315, %v5270
        %5336 = vst.msk [vmem:[%s499 + $0x50] sm:$0xf] %vm5315, %v5271
        %5337 = vst.msk [vmem:[%s499 + $0x54] sm:$0xf] %vm5315, %v5272
        %5338 = vst.msk [vmem:[%s499 + $0x58] sm:$0xf] %vm5315, %v5273
        %5339 = vst.msk [vmem:[%s499 + $0x5c] sm:$0xf] %vm5315, %v5274
        %5340 = vst.msk [vmem:[%s499 + $0x60] sm:$0xf] %vm5315, %v5275
        %5341 = vst.msk [vmem:[%s499 + $0x64] sm:$0xf] %vm5315, %v5276
        %5342 = vst.msk [vmem:[%s499 + $0x68] sm:$0xf] %vm5315, %v5277
        %5343 = vst.msk [vmem:[%s499 + $0x6c] sm:$0xf] %vm5315, %v5278
        %5344 = vst.msk [vmem:[%s499 + $0x70] sm:$0xf] %vm5315, %v5279
        %5345 = vst.msk [vmem:[%s499 + $0x74] sm:$0xf] %vm5315, %v5280
        %5346 = vst.msk [vmem:[%s499 + $0x78] sm:$0xf] %vm5315, %v5281
        %5347 = vst.msk [vmem:[%s499 + $0x7c] sm:$0xf] %vm5315, %v5282
        %s5348 = sand.u32 %s254, 1
        %s5349 = scalar_lea.sflag [#allocation5], %s5348
        %s5350 = sand.u32 %s254, 1
        %s5351 = smul.addr %s5350, 128
        %s5352 = scalar_lea.vmem [#allocation15], %s5351
        // Predicated region
        $region81: #{tpu_custom_call.1} parent=47 // pred_check
          %p5353 = pneg %p264
        $region82: #{tpu_custom_call.1} parent=47 // pred_check_branch
          %5355 = sbr.rel (%p5353) target = $region84
        $region83: #{tpu_custom_call.1} parent=47 // pred_region
          %s5356 = smul.u32 16, %s36
          %s5358 = ssub.s32 2048, 2048
          %5359 = vsyncadd %s5349, %s5358
          %s5360 = smul.addr %s5356, 2
          %s5361 = sadd.s32 %s35, %s5360
          %s5362 = smul.addr %s34, 32
          %s5363 = sadd.s32 %s5361, %s5362
          %s5364 = smul.addr %s5363, 64
          %s5365 = scalar_lea.hbm %s7, %s5364
          %s5366 = sshll.u32 %s5352, 4
          %s5367 = int_to_ptr.vmem [resolvable:$true] %s5366
          %5372 = dma.vmem_to_hbm [thread:$0]  %s5367, 2048, %s5365, %s5349, 64, 64, 4
        $region84: #{tpu_custom_call.1} parent=47 // pred_fallthru
          _
      $region48: #{tpu_custom_call.1} parent=5 // pred_fallthru
        _
      %p5373 = scmp.le.s32.totalorder 2, %s24
      // Predicated region
      $region85: #{tpu_custom_call.1} parent=5 // pred_check
        %p5374 = pneg %p5373
      $region86: #{tpu_custom_call.1} parent=5 // pred_check_branch
        %5376 = sbr.rel (%p5374) target = $region88
      $region87: #{tpu_custom_call.1} parent=5 // pred_region
        %s5377 = ssub.s32 %s24, 2
        // Predicated region
        $region89: #{tpu_custom_call.1} parent=87 // pred_check
          %p5378 = pneg %p270
        $region90: #{tpu_custom_call.1} parent=87 // pred_check_branch
          %5380 = sbr.rel (%p5378) target = $region92
        $region91: #{tpu_custom_call.1} parent=87 // pred_region
          %s5381 = sand.u32 %s255, 1
          %s5382 = scalar_lea.sflag [#allocation5], %s5381
          %s5383 = sand.u32 %s255, 1
          %s5384 = smul.addr %s5383, 128
          %s5385 = scalar_lea.vmem [#allocation15], %s5384
          %5386 = dma.done %s5382, 2048
        $region92: #{tpu_custom_call.1} parent=87 // pred_fallthru
          _
      $region88: #{tpu_custom_call.1} parent=5 // pred_fallthru
        _
    $region6: #{tpu_custom_call.1} parent=1 // loop_footer
      %s28 = sadd.s32 1, %s24
    $region7: #{tpu_custom_call.1} parent=1 // loop_footer_branch
      %23 = sbr.rel target = $region3
    $region8: #{tpu_custom_call.1} parent=1 // loop_exit
      _
    %5387 = vsyncpa [#allocation4], 1
    %s5388 = scalar_lea.sflag [#allocation4], 1
    %5389 = vsyncpa %s5388, 1
    %5390 = vsyncpa [#allocation7], 1
    %s5391 = scalar_lea.sflag [#allocation7], 1
    %5392 = vsyncpa %s5391, 1
    %5393 = vsyncpa [#allocation10], 1
    %5394 = vsyncpa [#allocation13], 1
    %5395 = vsyncpa [#allocation5], 1
    %s5396 = scalar_lea.sflag [#allocation5], 1
    %5397 = vsyncpa %s5396, 1

</llo_original>
